<compile_context>
chip_gen: v7x
topology: tpu7x:2x2x1
jax: 0.10.0
libtpu: 0.0.40
codegen_flags: <defaults>
</compile_context>

<pallas_src>
import numpy as np

import jax
import jax.numpy as jnp
from jax.experimental import pallas as pl
from jax.experimental.pallas import tpu as pltpu

COMPUTE_DTYPE = jnp.bfloat16   # matmul operand dtype (accumulation is f32)
BN_EPS = 1e-5
LANE = 128
SUBLANE = 8


def _round_up(x, m):
    return (x + m - 1) // m * m


# ------------------------------------------------------------------
# geometry
# ------------------------------------------------------------------
def make_geom(state_shape, kernels, strides, feats, fc, num_actions):
    c, h, w = state_shape
    layers = []
    cin, hin, win = c, h, w
    for k, s, f in zip(kernels, strides, feats):
        oh = (hin - k) // s + 1
        ow = (win - k) // s + 1
        layers.append(dict(cin=cin, hin=hin, win=win, k=k, s=s, f=f, oh=oh, ow=ow,
                           in_lanes=_round_up(win * cin, LANE),
                           out_lanes=_round_up(ow * f, LANE)))
        cin, hin, win = f, oh, ow

    L1 = layers[0]
    assert L1["hin"] % L1["s"] == 0, "phase-split needs H % stride1 == 0"
    q1 = L1["hin"] // L1["s"]
    # After phase-splitting the rows (residue-major), the band for kernel row i
    # starts at (i % s1)*q1 + i//s1 and is read as a contiguous oh1_pad-row slice.
    starts1 = [(i % L1["s"]) * q1 + i // L1["s"] for i in range(L1["k"])]
    oh1_pad = _round_up(L1["oh"], SUBLANE)          # 15 -> 16 (aligned bands)
    rows0 = _round_up(max(starts1) + oh1_pad, SUBLANE)
    lin_in = layers[-1]["oh"] * layers[-1]["ow"] * layers[-1]["f"]
    return dict(layers=layers, fc=fc, na=num_actions, lin_in=lin_in,
                conv1_starts=starts1, oh1_pad=oh1_pad, rows0=rows0,
                fc_pad=_round_up(fc, LANE), na_pad=_round_up(num_actions, LANE))


# ------------------------------------------------------------------
# one-time weight preparation (outside the hot path)
# ------------------------------------------------------------------
def prepare_params(params, g):
    """Fold eval-mode BN into the conv weights, expand each conv into ONE
    K-concatenated Toeplitz slab (k*in_lanes, out_lanes) with every lane dim
    zero-padded to a multiple of 128, tile/pad the biases, permute+pad the FC
    weights to the in-kernel flatten order, cast matmul operands to bf16."""

    def fold(w, b, bn):
        gamma, beta, mean, var = (np.asarray(t, np.float64) for t in bn)
        w = np.asarray(w, np.float64)
        b = np.asarray(b, np.float64)
        s = gamma / np.sqrt(var + BN_EPS)
        return w * s[:, None, None, None], (b - mean) * s + beta

    prep = {}
    for li, L in enumerate(g["layers"], start=1):
        wf, bf = fold(params[f"w{li}"], params[f"b{li}"], params[f"bn{li}"])
        F, C, KH, KW = wf.shape
        kin, kout = L["in_lanes"], L["out_lanes"]
        M = np.zeros((KH, kin, kout), np.float64)
        for i in range(KH):
            for o in range(L["ow"]):
                for j in range(KW):
                    wcol = L["s"] * o + j
                    M[i, wcol * C:(wcol + 1) * C, o * F:(o + 1) * F] = wf[:, :, i, j].T
        prep[f"w{li}"] = jnp.asarray(M.reshape(KH * kin, kout), COMPUTE_DTYPE)
        brow = np.zeros((1, kout), np.float64)
        brow[0, :L["ow"] * F] = np.tile(bf, L["ow"])
        prep[f"b{li}"] = jnp.asarray(brow, jnp.float32)

    L4 = g["layers"][-1]
    fc, na = g["fc"], g["na"]
    fcp, nap = g["fc_pad"], g["na_pad"]
    # FC weight, permuted to the kernel's (row y, lane = x*f4 + c) layout so the
    # flatten order matches torch's x.view(N, -1) on NCHW exactly, then padded.
    wfc = np.asarray(params["w_fc"], np.float64).reshape(fc, L4["f"], L4["oh"], L4["ow"])
    wfc = np.transpose(wfc, (2, 3, 1, 0)).reshape(L4["oh"], L4["ow"] * L4["f"], fc)
    wfc_p = np.zeros((L4["oh"], L4["out_lanes"], fcp))
    wfc_p[:, :L4["ow"] * L4["f"], :fc] = wfc
    prep["wfc"] = jnp.asarray(wfc_p.reshape(L4["oh"] * L4["out_lanes"], fcp),
                              COMPUTE_DTYPE)
    bfc = np.zeros((1, fcp)); bfc[0, :fc] = np.asarray(params["b_fc"], np.float64)
    prep["bfc"] = jnp.asarray(bfc, jnp.float32)
    wout = np.zeros((fcp, nap))
    wout[:fc, :na] = np.asarray(params["w_out"], np.float64).T
    prep["wout"] = jnp.asarray(wout, COMPUTE_DTYPE)
    bout = np.zeros((1, nap)); bout[0, :na] = np.asarray(params["b_out"], np.float64)
    prep["bout"] = jnp.asarray(bout, jnp.float32)
    return prep


# ------------------------------------------------------------------
# fused Pallas kernel: Bt samples per grid step, 4 convs + 2 FC, all in VMEM
# ------------------------------------------------------------------
def _build_kernel(g, bt):
    L1, L2, L3, L4 = g["layers"]
    starts1 = g["conv1_starts"]
    oh1p = g["oh1_pad"]
    cdt = COMPUTE_DTYPE

    def kcat(read_band, k):
        """Assemble the K-concat LHS: per-sample lane-concat of the k kernel-row
        bands, then sublane-stack across the batch tile -> (bt*oh, k*lanes)."""
        return jnp.concatenate(
            [jnp.concatenate([read_band(b, i) for i in range(k)], axis=1)
             for b in range(bt)], axis=0)

    def kernel(x_ref,
               w1_ref, b1_ref, w2_ref, b2_ref, w3_ref, b3_ref, w4_ref, b4_ref,
               wfc_ref, bfc_ref, wout_ref, bout_ref,
               out_ref, a1_ref):

        def mm_bias_relu(lhs, w_ref, b_ref):
            acc = jnp.dot(lhs.astype(cdt), w_ref[...],
                          preferred_element_type=jnp.float32)
            return jnp.maximum(acc + b_ref[...], 0.0)          # f32 epilogue

        # ---- conv1: contiguous (phase-split) 16-row band reads, one K=k1*W*C dot
        lhs1 = kcat(lambda b, i:
                    x_ref[b, starts1[i]:starts1[i] + oh1p, :].astype(cdt),
                    L1["k"])                                    # (bt*16, k1*WC)
        a1_ref[...] = mm_bias_relu(lhs1, w1_ref, b1_ref)        # (bt*16, 128) f32

        # ---- conv2: stride-s2 band reads from the f32 scratch, one dot
        def band2(b, i):
            if L2["s"] == 1:
                return a1_ref[pl.ds(b * oh1p + i, L2["oh"]), :]
            return a1_ref[pl.ds(b * oh1p + i, L2["oh"], stride=L2["s"]), :]
        a2 = mm_bias_relu(kcat(band2, L2["k"]), w2_ref, b2_ref)  # (bt*oh2, 128)

        # ---- conv3 / conv4: stride-1, static value slices, one dot each
        a3 = mm_bias_relu(
            kcat(lambda b, i: a2[b * L2["oh"] + i: b * L2["oh"] + i + L3["oh"], :],
                 L3["k"]),
            w3_ref, b3_ref)                                      # (bt*oh3, 128)
        x4 = mm_bias_relu(
            kcat(lambda b, i: a3[b * L3["oh"] + i: b * L3["oh"] + i + L4["oh"], :],
                 L4["k"]),
            w4_ref, b4_ref)                                      # (bt*oh4, 128)

        # ---- FC head: flatten each sample's oh4 rows along lanes -> one matmul
        fc_lhs = jnp.concatenate(
            [jnp.concatenate([x4[b * L4["oh"] + r: b * L4["oh"] + r + 1, :]
                              for r in range(L4["oh"])], axis=1)
             for b in range(bt)], axis=0)                        # (bt, oh4*128)
        h = mm_bias_relu(fc_lhs, wfc_ref, bfc_ref)               # (bt, fc_pad)
        q = jnp.dot(h.astype(cdt), wout_ref[...],
                    preferred_element_type=jnp.float32) + bout_ref[...]
        out_ref[...] = q                                         # (bt, na_pad) lane-dense

    return kernel


def make_dqn_forward(prep, g, bt=8):
    """bt = samples per grid step.  bt * oh1_pad rows feed each conv matmul's M
    dimension: bt=8 -> M=128 (fills a v5e MXU pass, half of v6e/v7x); use bt~16
    on v6e/v7x, keeping the grid length >= 2 so both v7x TensorCores get work."""
    kernel = _build_kernel(g, bt)
    L1 = g["layers"][0]
    rows0, in_lanes = g["rows0"], L1["in_lanes"]
    nap, na = g["na_pad"], g["na"]
    s1, q1 = L1["s"], L1["hin"] // L1["s"]

    names = ["w1", "b1", "w2", "b2", "w3", "b3", "w4", "b4",
             "wfc", "bfc", "wout", "bout"]
    wargs = [prep[k] for k in names]
    wspecs = [pl.BlockSpec(tuple(a.shape), lambda i: (0, 0)) for a in wargs]
    # TODO(synk): pipeline_mode=pl.Buffered(1) on the constant-index weight specs
    # would drop their second VMEM buffer; skipped as cosmetic at this footprint.

    scratch = [pltpu.VMEM((bt * g["oh1_pad"], L1["out_lanes"]), jnp.float32)]

    @jax.jit
    def fwd(x_nchw):
        n, c, h, w = x_nchw.shape
        # NCHW -> (N, H, W*C) channel-minor rows; phase-split rows by residue
        # mod stride1 so every conv1 band read is contiguous; zero-pad rows,
        # lanes and batch (padding never contributes to valid outputs).
        x = jnp.transpose(x_nchw, (0, 2, 3, 1)).reshape(n, h, w * c)
        x = x.reshape(n, q1, s1, w * c).transpose(0, 2, 1, 3).reshape(n, h, w * c)
        n_pad = _round_up(n, bt)
        x = jnp.pad(x, ((0, n_pad - n), (0, rows0 - h), (0, in_lanes - w * c)))
        out = pl.pallas_call(
            kernel,
            out_shape=jax.ShapeDtypeStruct((n_pad, nap), jnp.float32),
            grid=(n_pad // bt,),
            in_specs=[pl.BlockSpec((bt, rows0, in_lanes), lambda i: (i, 0, 0))]
                     + wspecs,
            out_specs=pl.BlockSpec((bt, nap), lambda i: (i, 0)),
            scratch_shapes=scratch,
            compiler_params=pltpu.CompilerParams(
                dimension_semantics=("parallel",)),
        )(x, *wargs)
        return out[:n, :na]

    return fwd


# ------------------------------------------------------------------
# pure-JAX reference (matches the PyTorch module, eval-mode BN)
# ------------------------------------------------------------------
def dqn_forward_reference(x, p, eps=BN_EPS):
    def cbr(x, w, b, bn, stride):
        gamma, beta, mean, var = bn
        y = jax.lax.conv_general_dilated(
            x, w, (stride, stride), "VALID",
            dimension_numbers=("NCHW", "OIHW", "NCHW"))
        y = y + b[None, :, None, None]
        y = gamma[None, :, None, None] * (y - mean[None, :, None, None]) \
            / jnp.sqrt(var[None, :, None, None] + eps) + beta[None, :, None, None]
        return jnp.maximum(y, 0.0)

    x = cbr(x, p["w1"], p["b1"], p["bn1"], p["s1"])
    x = cbr(x, p["w2"], p["b2"], p["bn2"], p["s2"])
    x = cbr(x, p["w3"], p["b3"], p["bn3"], p["s3"])
    x = cbr(x, p["w4"], p["b4"], p["bn4"], p["s4"])
    flat = x.reshape(x.shape[0], -1)
    h = jnp.maximum(flat @ p["w_fc"].T + p["b_fc"], 0.0)
    return h @ p["w_out"].T + p["b_out"]


# ------------------------------------------------------------------
# deterministic parameter initialization
# ------------------------------------------------------------------
def init_params(key, c, f1, f2, f3, f4, k1, k2, k3, k4, s1, s2, s3, s4,
                lin_in, fc, num_actions):
    def conv(key, cout, cin, k):
        a, b = jax.random.split(key)
        return (0.05 * jax.random.normal(a, (cout, cin, k, k), jnp.float32),
                0.05 * jax.random.normal(b, (cout,), jnp.float32))

    def bn(key, c):
        a, b, c_, d = jax.random.split(key, 4)
        return (1.0 + 0.1 * jax.random.normal(a, (c,), jnp.float32),   # gamma
                0.1 * jax.random.normal(b, (c,), jnp.float32),         # beta
                0.1 * jax.random.normal(c_, (c,), jnp.float32),        # running mean
                1.0 + 0.1 * jax.random.uniform(d, (c,), jnp.float32))  # running var

    ks = jax.random.split(key, 10)
    w1, b1 = conv(ks[0], f1, c, k1)
    w2, b2 = conv(ks[1], f2, f1, k2)
    w3, b3 = conv(ks[2], f3, f2, k3)
    w4, b4 = conv(ks[3], f4, f3, k4)
    w_fc = 0.05 * jax.random.normal(ks[8], (fc, lin_in), jnp.float32)
    b_fc = 0.05 * jax.random.normal(ks[8], (fc,), jnp.float32)
    w_out = 0.05 * jax.random.normal(ks[9], (num_actions, fc), jnp.float32)
    b_out = 0.05 * jax.random.normal(ks[9], (num_actions,), jnp.float32)
    return dict(
        w1=w1, b1=b1, bn1=bn(ks[4], f1), s1=s1,
        w2=w2, b2=b2, bn2=bn(ks[5], f2), s2=s2,
        w3=w3, b3=b3, bn3=bn(ks[6], f3), s3=s3,
        w4=w4, b4=b4, bn4=bn(ks[7], f4), s4=s4,
        w_fc=w_fc, b_fc=b_fc, w_out=w_out, b_out=b_out,
    )


if __name__ == "__main__":
    # small config consistent with the module's __init__ signature
    batch, num_actions = 16, 4
    state_shape = (4, 64, 64)                 # (c, h, w)
    feats = (8, 16, 16, 16)                   # f1..f4
    kernels = (8, 4, 3, 3)                    # kernel1..kernel4
    strides = (4, 2, 1, 1)                    # stride1..stride4
    fc = 32
    batch_tile = 8                            # samples per grid step -> grid=(2,)

    geom = make_geom(state_shape, kernels, strides, feats, fc, num_actions)

    key = jax.random.PRNGKey(0)
    pkey, xkey = jax.random.split(key)
    params = init_params(pkey, state_shape[0], *feats, *kernels, *strides,
                         geom["lin_in"], fc, num_actions)
    x = 0.1 * jax.random.normal(xkey, (batch,) + state_shape, jnp.float32)

    prep = prepare_params(params, geom)       # one-time, outside the hot path
    fwd = make_dqn_forward(prep, geom, bt=batch_tile)

    q = jax.block_until_ready(fwd(x))
    assert q.shape == (batch, num_actions), q.shape

    q_ref = jax.block_until_ready(dqn_forward_reference(x, params))
    max_diff = float(jnp.max(jnp.abs(q - q_ref)))
    assert jnp.allclose(q, q_ref, atol=3e-2, rtol=3e-2), f"mismatch: {max_diff}"

    print("KERNEL_OK")
</pallas_src>

<mosaic_0001>
module attributes {stable_mosaic.version = 11 : i64} {
  func.func @kernel(%arg0: i32, %arg1: memref<8x72x256xf32, #tpu.memory_space<vmem>>, %arg2: memref<2048x128xbf16, #tpu.memory_space<vmem>>, %arg3: memref<1x128xf32, #tpu.memory_space<vmem>>, %arg4: memref<512x128xbf16, #tpu.memory_space<vmem>>, %arg5: memref<1x128xf32, #tpu.memory_space<vmem>>, %arg6: memref<384x128xbf16, #tpu.memory_space<vmem>>, %arg7: memref<1x128xf32, #tpu.memory_space<vmem>>, %arg8: memref<384x128xbf16, #tpu.memory_space<vmem>>, %arg9: memref<1x128xf32, #tpu.memory_space<vmem>>, %arg10: memref<256x128xbf16, #tpu.memory_space<vmem>>, %arg11: memref<1x128xf32, #tpu.memory_space<vmem>>, %arg12: memref<128x128xbf16, #tpu.memory_space<vmem>>, %arg13: memref<1x128xf32, #tpu.memory_space<vmem>>, %arg14: memref<8x128xf32, #tpu.memory_space<vmem>>, %arg15: memref<128x128xf32, #tpu.memory_space<vmem>>) attributes {dimension_semantics = [#tpu.dimension_semantics<parallel>], iteration_bounds = array<i64: 2>, scalar_prefetch = 0 : i64, scratch_operands = 1 : i64, tpu.core_type = #tpu.core_type<tc>, window_params = [{transform_indices = @transform_0, window_bounds = array<i64: 8, 72, 256>}, {pipeline_mode = #tpu.pipeline_mode<synchronous>, transform_indices = @transform_1, window_bounds = array<i64: 2048, 128>}, {pipeline_mode = #tpu.pipeline_mode<synchronous>, transform_indices = @transform_2, window_bounds = array<i64: 1, 128>}, {pipeline_mode = #tpu.pipeline_mode<synchronous>, transform_indices = @transform_3, window_bounds = array<i64: 512, 128>}, {pipeline_mode = #tpu.pipeline_mode<synchronous>, transform_indices = @transform_4, window_bounds = array<i64: 1, 128>}, {pipeline_mode = #tpu.pipeline_mode<synchronous>, transform_indices = @transform_5, window_bounds = array<i64: 384, 128>}, {pipeline_mode = #tpu.pipeline_mode<synchronous>, transform_indices = @transform_6, window_bounds = array<i64: 1, 128>}, {pipeline_mode = #tpu.pipeline_mode<synchronous>, transform_indices = @transform_7, window_bounds = array<i64: 384, 128>}, {pipeline_mode = #tpu.pipeline_mode<synchronous>, transform_indices = @transform_8, window_bounds = array<i64: 1, 128>}, {pipeline_mode = #tpu.pipeline_mode<synchronous>, transform_indices = @transform_9, window_bounds = array<i64: 256, 128>}, {pipeline_mode = #tpu.pipeline_mode<synchronous>, transform_indices = @transform_10, window_bounds = array<i64: 1, 128>}, {pipeline_mode = #tpu.pipeline_mode<synchronous>, transform_indices = @transform_11, window_bounds = array<i64: 128, 128>}, {pipeline_mode = #tpu.pipeline_mode<synchronous>, transform_indices = @transform_12, window_bounds = array<i64: 1, 128>}, {transform_indices = @transform_13, window_bounds = array<i64: 8, 128>}]} {
    %c0 = arith.constant 0 : index
    %c0_0 = arith.constant 0 : index
    %c0_1 = arith.constant 0 : index
    %0 = vector.load %arg1[%c0, %c0_0, %c0_1] : memref<8x72x256xf32, #tpu.memory_space<vmem>>, vector<1x16x256xf32>
    %1 = vector.shape_cast %0 : vector<1x16x256xf32> to vector<16x256xf32>
    %2 = arith.truncf %1 : vector<16x256xf32> to vector<16x256xbf16>
    %c0_2 = arith.constant 0 : index
    %c16 = arith.constant 16 : index
    %c0_3 = arith.constant 0 : index
    %3 = vector.load %arg1[%c0_2, %c16, %c0_3] : memref<8x72x256xf32, #tpu.memory_space<vmem>>, vector<1x16x256xf32>
    %4 = vector.shape_cast %3 : vector<1x16x256xf32> to vector<16x256xf32>
    %5 = arith.truncf %4 : vector<16x256xf32> to vector<16x256xbf16>
    %c0_4 = arith.constant 0 : index
    %c32 = arith.constant 32 : index
    %c0_5 = arith.constant 0 : index
    %6 = vector.load %arg1[%c0_4, %c32, %c0_5] : memref<8x72x256xf32, #tpu.memory_space<vmem>>, vector<1x16x256xf32>
    %7 = vector.shape_cast %6 : vector<1x16x256xf32> to vector<16x256xf32>
    %8 = arith.truncf %7 : vector<16x256xf32> to vector<16x256xbf16>
    %c0_6 = arith.constant 0 : index
    %c48 = arith.constant 48 : index
    %c0_7 = arith.constant 0 : index
    %9 = vector.load %arg1[%c0_6, %c48, %c0_7] : memref<8x72x256xf32, #tpu.memory_space<vmem>>, vector<1x16x256xf32>
    %10 = vector.shape_cast %9 : vector<1x16x256xf32> to vector<16x256xf32>
    %11 = arith.truncf %10 : vector<16x256xf32> to vector<16x256xbf16>
    %c0_8 = arith.constant 0 : index
    %c1 = arith.constant 1 : index
    %c0_9 = arith.constant 0 : index
    %12 = vector.load %arg1[%c0_8, %c1, %c0_9] : memref<8x72x256xf32, #tpu.memory_space<vmem>>, vector<1x16x256xf32>
    %13 = vector.shape_cast %12 : vector<1x16x256xf32> to vector<16x256xf32>
    %14 = arith.truncf %13 : vector<16x256xf32> to vector<16x256xbf16>
    %c0_10 = arith.constant 0 : index
    %c17 = arith.constant 17 : index
    %c0_11 = arith.constant 0 : index
    %15 = vector.load %arg1[%c0_10, %c17, %c0_11] : memref<8x72x256xf32, #tpu.memory_space<vmem>>, vector<1x16x256xf32>
    %16 = vector.shape_cast %15 : vector<1x16x256xf32> to vector<16x256xf32>
    %17 = arith.truncf %16 : vector<16x256xf32> to vector<16x256xbf16>
    %c0_12 = arith.constant 0 : index
    %c33 = arith.constant 33 : index
    %c0_13 = arith.constant 0 : index
    %18 = vector.load %arg1[%c0_12, %c33, %c0_13] : memref<8x72x256xf32, #tpu.memory_space<vmem>>, vector<1x16x256xf32>
    %19 = vector.shape_cast %18 : vector<1x16x256xf32> to vector<16x256xf32>
    %20 = arith.truncf %19 : vector<16x256xf32> to vector<16x256xbf16>
    %c0_14 = arith.constant 0 : index
    %c49 = arith.constant 49 : index
    %c0_15 = arith.constant 0 : index
    %21 = vector.load %arg1[%c0_14, %c49, %c0_15] : memref<8x72x256xf32, #tpu.memory_space<vmem>>, vector<1x16x256xf32>
    %22 = vector.shape_cast %21 : vector<1x16x256xf32> to vector<16x256xf32>
    %23 = arith.truncf %22 : vector<16x256xf32> to vector<16x256xbf16>
    %24 = tpu.concatenate %2, %5, %8, %11, %14, %17, %20, %23 in 1 : vector<16x256xbf16>, vector<16x256xbf16>, vector<16x256xbf16>, vector<16x256xbf16>, vector<16x256xbf16>, vector<16x256xbf16>, vector<16x256xbf16>, vector<16x256xbf16> -> vector<16x2048xbf16>
    %c1_16 = arith.constant 1 : index
    %c0_17 = arith.constant 0 : index
    %c0_18 = arith.constant 0 : index
    %25 = vector.load %arg1[%c1_16, %c0_17, %c0_18] : memref<8x72x256xf32, #tpu.memory_space<vmem>>, vector<1x16x256xf32>
    %26 = vector.shape_cast %25 : vector<1x16x256xf32> to vector<16x256xf32>
    %27 = arith.truncf %26 : vector<16x256xf32> to vector<16x256xbf16>
    %c1_19 = arith.constant 1 : index
    %c16_20 = arith.constant 16 : index
    %c0_21 = arith.constant 0 : index
    %28 = vector.load %arg1[%c1_19, %c16_20, %c0_21] : memref<8x72x256xf32, #tpu.memory_space<vmem>>, vector<1x16x256xf32>
    %29 = vector.shape_cast %28 : vector<1x16x256xf32> to vector<16x256xf32>
    %30 = arith.truncf %29 : vector<16x256xf32> to vector<16x256xbf16>
    %c1_22 = arith.constant 1 : index
    %c32_23 = arith.constant 32 : index
    %c0_24 = arith.constant 0 : index
    %31 = vector.load %arg1[%c1_22, %c32_23, %c0_24] : memref<8x72x256xf32, #tpu.memory_space<vmem>>, vector<1x16x256xf32>
    %32 = vector.shape_cast %31 : vector<1x16x256xf32> to vector<16x256xf32>
    %33 = arith.truncf %32 : vector<16x256xf32> to vector<16x256xbf16>
    %c1_25 = arith.constant 1 : index
    %c48_26 = arith.constant 48 : index
    %c0_27 = arith.constant 0 : index
    %34 = vector.load %arg1[%c1_25, %c48_26, %c0_27] : memref<8x72x256xf32, #tpu.memory_space<vmem>>, vector<1x16x256xf32>
    %35 = vector.shape_cast %34 : vector<1x16x256xf32> to vector<16x256xf32>
    %36 = arith.truncf %35 : vector<16x256xf32> to vector<16x256xbf16>
    %c1_28 = arith.constant 1 : index
    %c1_29 = arith.constant 1 : index
    %c0_30 = arith.constant 0 : index
    %37 = vector.load %arg1[%c1_28, %c1_29, %c0_30] : memref<8x72x256xf32, #tpu.memory_space<vmem>>, vector<1x16x256xf32>
    %38 = vector.shape_cast %37 : vector<1x16x256xf32> to vector<16x256xf32>
    %39 = arith.truncf %38 : vector<16x256xf32> to vector<16x256xbf16>
    %c1_31 = arith.constant 1 : index
    %c17_32 = arith.constant 17 : index
    %c0_33 = arith.constant 0 : index
    %40 = vector.load %arg1[%c1_31, %c17_32, %c0_33] : memref<8x72x256xf32, #tpu.memory_space<vmem>>, vector<1x16x256xf32>
    %41 = vector.shape_cast %40 : vector<1x16x256xf32> to vector<16x256xf32>
    %42 = arith.truncf %41 : vector<16x256xf32> to vector<16x256xbf16>
    %c1_34 = arith.constant 1 : index
    %c33_35 = arith.constant 33 : index
    %c0_36 = arith.constant 0 : index
    %43 = vector.load %arg1[%c1_34, %c33_35, %c0_36] : memref<8x72x256xf32, #tpu.memory_space<vmem>>, vector<1x16x256xf32>
    %44 = vector.shape_cast %43 : vector<1x16x256xf32> to vector<16x256xf32>
    %45 = arith.truncf %44 : vector<16x256xf32> to vector<16x256xbf16>
    %c1_37 = arith.constant 1 : index
    %c49_38 = arith.constant 49 : index
    %c0_39 = arith.constant 0 : index
    %46 = vector.load %arg1[%c1_37, %c49_38, %c0_39] : memref<8x72x256xf32, #tpu.memory_space<vmem>>, vector<1x16x256xf32>
    %47 = vector.shape_cast %46 : vector<1x16x256xf32> to vector<16x256xf32>
    %48 = arith.truncf %47 : vector<16x256xf32> to vector<16x256xbf16>
    %49 = tpu.concatenate %27, %30, %33, %36, %39, %42, %45, %48 in 1 : vector<16x256xbf16>, vector<16x256xbf16>, vector<16x256xbf16>, vector<16x256xbf16>, vector<16x256xbf16>, vector<16x256xbf16>, vector<16x256xbf16>, vector<16x256xbf16> -> vector<16x2048xbf16>
    %c2 = arith.constant 2 : index
    %c0_40 = arith.constant 0 : index
    %c0_41 = arith.constant 0 : index
    %50 = vector.load %arg1[%c2, %c0_40, %c0_41] : memref<8x72x256xf32, #tpu.memory_space<vmem>>, vector<1x16x256xf32>
    %51 = vector.shape_cast %50 : vector<1x16x256xf32> to vector<16x256xf32>
    %52 = arith.truncf %51 : vector<16x256xf32> to vector<16x256xbf16>
    %c2_42 = arith.constant 2 : index
    %c16_43 = arith.constant 16 : index
    %c0_44 = arith.constant 0 : index
    %53 = vector.load %arg1[%c2_42, %c16_43, %c0_44] : memref<8x72x256xf32, #tpu.memory_space<vmem>>, vector<1x16x256xf32>
    %54 = vector.shape_cast %53 : vector<1x16x256xf32> to vector<16x256xf32>
    %55 = arith.truncf %54 : vector<16x256xf32> to vector<16x256xbf16>
    %c2_45 = arith.constant 2 : index
    %c32_46 = arith.constant 32 : index
    %c0_47 = arith.constant 0 : index
    %56 = vector.load %arg1[%c2_45, %c32_46, %c0_47] : memref<8x72x256xf32, #tpu.memory_space<vmem>>, vector<1x16x256xf32>
    %57 = vector.shape_cast %56 : vector<1x16x256xf32> to vector<16x256xf32>
    %58 = arith.truncf %57 : vector<16x256xf32> to vector<16x256xbf16>
    %c2_48 = arith.constant 2 : index
    %c48_49 = arith.constant 48 : index
    %c0_50 = arith.constant 0 : index
    %59 = vector.load %arg1[%c2_48, %c48_49, %c0_50] : memref<8x72x256xf32, #tpu.memory_space<vmem>>, vector<1x16x256xf32>
    %60 = vector.shape_cast %59 : vector<1x16x256xf32> to vector<16x256xf32>
    %61 = arith.truncf %60 : vector<16x256xf32> to vector<16x256xbf16>
    %c2_51 = arith.constant 2 : index
    %c1_52 = arith.constant 1 : index
    %c0_53 = arith.constant 0 : index
    %62 = vector.load %arg1[%c2_51, %c1_52, %c0_53] : memref<8x72x256xf32, #tpu.memory_space<vmem>>, vector<1x16x256xf32>
    %63 = vector.shape_cast %62 : vector<1x16x256xf32> to vector<16x256xf32>
    %64 = arith.truncf %63 : vector<16x256xf32> to vector<16x256xbf16>
    %c2_54 = arith.constant 2 : index
    %c17_55 = arith.constant 17 : index
    %c0_56 = arith.constant 0 : index
    %65 = vector.load %arg1[%c2_54, %c17_55, %c0_56] : memref<8x72x256xf32, #tpu.memory_space<vmem>>, vector<1x16x256xf32>
    %66 = vector.shape_cast %65 : vector<1x16x256xf32> to vector<16x256xf32>
    %67 = arith.truncf %66 : vector<16x256xf32> to vector<16x256xbf16>
    %c2_57 = arith.constant 2 : index
    %c33_58 = arith.constant 33 : index
    %c0_59 = arith.constant 0 : index
    %68 = vector.load %arg1[%c2_57, %c33_58, %c0_59] : memref<8x72x256xf32, #tpu.memory_space<vmem>>, vector<1x16x256xf32>
    %69 = vector.shape_cast %68 : vector<1x16x256xf32> to vector<16x256xf32>
    %70 = arith.truncf %69 : vector<16x256xf32> to vector<16x256xbf16>
    %c2_60 = arith.constant 2 : index
    %c49_61 = arith.constant 49 : index
    %c0_62 = arith.constant 0 : index
    %71 = vector.load %arg1[%c2_60, %c49_61, %c0_62] : memref<8x72x256xf32, #tpu.memory_space<vmem>>, vector<1x16x256xf32>
    %72 = vector.shape_cast %71 : vector<1x16x256xf32> to vector<16x256xf32>
    %73 = arith.truncf %72 : vector<16x256xf32> to vector<16x256xbf16>
    %74 = tpu.concatenate %52, %55, %58, %61, %64, %67, %70, %73 in 1 : vector<16x256xbf16>, vector<16x256xbf16>, vector<16x256xbf16>, vector<16x256xbf16>, vector<16x256xbf16>, vector<16x256xbf16>, vector<16x256xbf16>, vector<16x256xbf16> -> vector<16x2048xbf16>
    %c3 = arith.constant 3 : index
    %c0_63 = arith.constant 0 : index
    %c0_64 = arith.constant 0 : index
    %75 = vector.load %arg1[%c3, %c0_63, %c0_64] : memref<8x72x256xf32, #tpu.memory_space<vmem>>, vector<1x16x256xf32>
    %76 = vector.shape_cast %75 : vector<1x16x256xf32> to vector<16x256xf32>
    %77 = arith.truncf %76 : vector<16x256xf32> to vector<16x256xbf16>
    %c3_65 = arith.constant 3 : index
    %c16_66 = arith.constant 16 : index
    %c0_67 = arith.constant 0 : index
    %78 = vector.load %arg1[%c3_65, %c16_66, %c0_67] : memref<8x72x256xf32, #tpu.memory_space<vmem>>, vector<1x16x256xf32>
    %79 = vector.shape_cast %78 : vector<1x16x256xf32> to vector<16x256xf32>
    %80 = arith.truncf %79 : vector<16x256xf32> to vector<16x256xbf16>
    %c3_68 = arith.constant 3 : index
    %c32_69 = arith.constant 32 : index
    %c0_70 = arith.constant 0 : index
    %81 = vector.load %arg1[%c3_68, %c32_69, %c0_70] : memref<8x72x256xf32, #tpu.memory_space<vmem>>, vector<1x16x256xf32>
    %82 = vector.shape_cast %81 : vector<1x16x256xf32> to vector<16x256xf32>
    %83 = arith.truncf %82 : vector<16x256xf32> to vector<16x256xbf16>
    %c3_71 = arith.constant 3 : index
    %c48_72 = arith.constant 48 : index
    %c0_73 = arith.constant 0 : index
    %84 = vector.load %arg1[%c3_71, %c48_72, %c0_73] : memref<8x72x256xf32, #tpu.memory_space<vmem>>, vector<1x16x256xf32>
    %85 = vector.shape_cast %84 : vector<1x16x256xf32> to vector<16x256xf32>
    %86 = arith.truncf %85 : vector<16x256xf32> to vector<16x256xbf16>
    %c3_74 = arith.constant 3 : index
    %c1_75 = arith.constant 1 : index
    %c0_76 = arith.constant 0 : index
    %87 = vector.load %arg1[%c3_74, %c1_75, %c0_76] : memref<8x72x256xf32, #tpu.memory_space<vmem>>, vector<1x16x256xf32>
    %88 = vector.shape_cast %87 : vector<1x16x256xf32> to vector<16x256xf32>
    %89 = arith.truncf %88 : vector<16x256xf32> to vector<16x256xbf16>
    %c3_77 = arith.constant 3 : index
    %c17_78 = arith.constant 17 : index
    %c0_79 = arith.constant 0 : index
    %90 = vector.load %arg1[%c3_77, %c17_78, %c0_79] : memref<8x72x256xf32, #tpu.memory_space<vmem>>, vector<1x16x256xf32>
    %91 = vector.shape_cast %90 : vector<1x16x256xf32> to vector<16x256xf32>
    %92 = arith.truncf %91 : vector<16x256xf32> to vector<16x256xbf16>
    %c3_80 = arith.constant 3 : index
    %c33_81 = arith.constant 33 : index
    %c0_82 = arith.constant 0 : index
    %93 = vector.load %arg1[%c3_80, %c33_81, %c0_82] : memref<8x72x256xf32, #tpu.memory_space<vmem>>, vector<1x16x256xf32>
    %94 = vector.shape_cast %93 : vector<1x16x256xf32> to vector<16x256xf32>
    %95 = arith.truncf %94 : vector<16x256xf32> to vector<16x256xbf16>
    %c3_83 = arith.constant 3 : index
    %c49_84 = arith.constant 49 : index
    %c0_85 = arith.constant 0 : index
    %96 = vector.load %arg1[%c3_83, %c49_84, %c0_85] : memref<8x72x256xf32, #tpu.memory_space<vmem>>, vector<1x16x256xf32>
    %97 = vector.shape_cast %96 : vector<1x16x256xf32> to vector<16x256xf32>
    %98 = arith.truncf %97 : vector<16x256xf32> to vector<16x256xbf16>
    %99 = tpu.concatenate %77, %80, %83, %86, %89, %92, %95, %98 in 1 : vector<16x256xbf16>, vector<16x256xbf16>, vector<16x256xbf16>, vector<16x256xbf16>, vector<16x256xbf16>, vector<16x256xbf16>, vector<16x256xbf16>, vector<16x256xbf16> -> vector<16x2048xbf16>
    %c4 = arith.constant 4 : index
    %c0_86 = arith.constant 0 : index
    %c0_87 = arith.constant 0 : index
    %100 = vector.load %arg1[%c4, %c0_86, %c0_87] : memref<8x72x256xf32, #tpu.memory_space<vmem>>, vector<1x16x256xf32>
    %101 = vector.shape_cast %100 : vector<1x16x256xf32> to vector<16x256xf32>
    %102 = arith.truncf %101 : vector<16x256xf32> to vector<16x256xbf16>
    %c4_88 = arith.constant 4 : index
    %c16_89 = arith.constant 16 : index
    %c0_90 = arith.constant 0 : index
    %103 = vector.load %arg1[%c4_88, %c16_89, %c0_90] : memref<8x72x256xf32, #tpu.memory_space<vmem>>, vector<1x16x256xf32>
    %104 = vector.shape_cast %103 : vector<1x16x256xf32> to vector<16x256xf32>
    %105 = arith.truncf %104 : vector<16x256xf32> to vector<16x256xbf16>
    %c4_91 = arith.constant 4 : index
    %c32_92 = arith.constant 32 : index
    %c0_93 = arith.constant 0 : index
    %106 = vector.load %arg1[%c4_91, %c32_92, %c0_93] : memref<8x72x256xf32, #tpu.memory_space<vmem>>, vector<1x16x256xf32>
    %107 = vector.shape_cast %106 : vector<1x16x256xf32> to vector<16x256xf32>
    %108 = arith.truncf %107 : vector<16x256xf32> to vector<16x256xbf16>
    %c4_94 = arith.constant 4 : index
    %c48_95 = arith.constant 48 : index
    %c0_96 = arith.constant 0 : index
    %109 = vector.load %arg1[%c4_94, %c48_95, %c0_96] : memref<8x72x256xf32, #tpu.memory_space<vmem>>, vector<1x16x256xf32>
    %110 = vector.shape_cast %109 : vector<1x16x256xf32> to vector<16x256xf32>
    %111 = arith.truncf %110 : vector<16x256xf32> to vector<16x256xbf16>
    %c4_97 = arith.constant 4 : index
    %c1_98 = arith.constant 1 : index
    %c0_99 = arith.constant 0 : index
    %112 = vector.load %arg1[%c4_97, %c1_98, %c0_99] : memref<8x72x256xf32, #tpu.memory_space<vmem>>, vector<1x16x256xf32>
    %113 = vector.shape_cast %112 : vector<1x16x256xf32> to vector<16x256xf32>
    %114 = arith.truncf %113 : vector<16x256xf32> to vector<16x256xbf16>
    %c4_100 = arith.constant 4 : index
    %c17_101 = arith.constant 17 : index
    %c0_102 = arith.constant 0 : index
    %115 = vector.load %arg1[%c4_100, %c17_101, %c0_102] : memref<8x72x256xf32, #tpu.memory_space<vmem>>, vector<1x16x256xf32>
    %116 = vector.shape_cast %115 : vector<1x16x256xf32> to vector<16x256xf32>
    %117 = arith.truncf %116 : vector<16x256xf32> to vector<16x256xbf16>
    %c4_103 = arith.constant 4 : index
    %c33_104 = arith.constant 33 : index
    %c0_105 = arith.constant 0 : index
    %118 = vector.load %arg1[%c4_103, %c33_104, %c0_105] : memref<8x72x256xf32, #tpu.memory_space<vmem>>, vector<1x16x256xf32>
    %119 = vector.shape_cast %118 : vector<1x16x256xf32> to vector<16x256xf32>
    %120 = arith.truncf %119 : vector<16x256xf32> to vector<16x256xbf16>
    %c4_106 = arith.constant 4 : index
    %c49_107 = arith.constant 49 : index
    %c0_108 = arith.constant 0 : index
    %121 = vector.load %arg1[%c4_106, %c49_107, %c0_108] : memref<8x72x256xf32, #tpu.memory_space<vmem>>, vector<1x16x256xf32>
    %122 = vector.shape_cast %121 : vector<1x16x256xf32> to vector<16x256xf32>
    %123 = arith.truncf %122 : vector<16x256xf32> to vector<16x256xbf16>
    %124 = tpu.concatenate %102, %105, %108, %111, %114, %117, %120, %123 in 1 : vector<16x256xbf16>, vector<16x256xbf16>, vector<16x256xbf16>, vector<16x256xbf16>, vector<16x256xbf16>, vector<16x256xbf16>, vector<16x256xbf16>, vector<16x256xbf16> -> vector<16x2048xbf16>
    %c5 = arith.constant 5 : index
    %c0_109 = arith.constant 0 : index
    %c0_110 = arith.constant 0 : index
    %125 = vector.load %arg1[%c5, %c0_109, %c0_110] : memref<8x72x256xf32, #tpu.memory_space<vmem>>, vector<1x16x256xf32>
    %126 = vector.shape_cast %125 : vector<1x16x256xf32> to vector<16x256xf32>
    %127 = arith.truncf %126 : vector<16x256xf32> to vector<16x256xbf16>
    %c5_111 = arith.constant 5 : index
    %c16_112 = arith.constant 16 : index
    %c0_113 = arith.constant 0 : index
    %128 = vector.load %arg1[%c5_111, %c16_112, %c0_113] : memref<8x72x256xf32, #tpu.memory_space<vmem>>, vector<1x16x256xf32>
    %129 = vector.shape_cast %128 : vector<1x16x256xf32> to vector<16x256xf32>
    %130 = arith.truncf %129 : vector<16x256xf32> to vector<16x256xbf16>
    %c5_114 = arith.constant 5 : index
    %c32_115 = arith.constant 32 : index
    %c0_116 = arith.constant 0 : index
    %131 = vector.load %arg1[%c5_114, %c32_115, %c0_116] : memref<8x72x256xf32, #tpu.memory_space<vmem>>, vector<1x16x256xf32>
    %132 = vector.shape_cast %131 : vector<1x16x256xf32> to vector<16x256xf32>
    %133 = arith.truncf %132 : vector<16x256xf32> to vector<16x256xbf16>
    %c5_117 = arith.constant 5 : index
    %c48_118 = arith.constant 48 : index
    %c0_119 = arith.constant 0 : index
    %134 = vector.load %arg1[%c5_117, %c48_118, %c0_119] : memref<8x72x256xf32, #tpu.memory_space<vmem>>, vector<1x16x256xf32>
    %135 = vector.shape_cast %134 : vector<1x16x256xf32> to vector<16x256xf32>
    %136 = arith.truncf %135 : vector<16x256xf32> to vector<16x256xbf16>
    %c5_120 = arith.constant 5 : index
    %c1_121 = arith.constant 1 : index
    %c0_122 = arith.constant 0 : index
    %137 = vector.load %arg1[%c5_120, %c1_121, %c0_122] : memref<8x72x256xf32, #tpu.memory_space<vmem>>, vector<1x16x256xf32>
    %138 = vector.shape_cast %137 : vector<1x16x256xf32> to vector<16x256xf32>
    %139 = arith.truncf %138 : vector<16x256xf32> to vector<16x256xbf16>
    %c5_123 = arith.constant 5 : index
    %c17_124 = arith.constant 17 : index
    %c0_125 = arith.constant 0 : index
    %140 = vector.load %arg1[%c5_123, %c17_124, %c0_125] : memref<8x72x256xf32, #tpu.memory_space<vmem>>, vector<1x16x256xf32>
    %141 = vector.shape_cast %140 : vector<1x16x256xf32> to vector<16x256xf32>
    %142 = arith.truncf %141 : vector<16x256xf32> to vector<16x256xbf16>
    %c5_126 = arith.constant 5 : index
    %c33_127 = arith.constant 33 : index
    %c0_128 = arith.constant 0 : index
    %143 = vector.load %arg1[%c5_126, %c33_127, %c0_128] : memref<8x72x256xf32, #tpu.memory_space<vmem>>, vector<1x16x256xf32>
    %144 = vector.shape_cast %143 : vector<1x16x256xf32> to vector<16x256xf32>
    %145 = arith.truncf %144 : vector<16x256xf32> to vector<16x256xbf16>
    %c5_129 = arith.constant 5 : index
    %c49_130 = arith.constant 49 : index
    %c0_131 = arith.constant 0 : index
    %146 = vector.load %arg1[%c5_129, %c49_130, %c0_131] : memref<8x72x256xf32, #tpu.memory_space<vmem>>, vector<1x16x256xf32>
    %147 = vector.shape_cast %146 : vector<1x16x256xf32> to vector<16x256xf32>
    %148 = arith.truncf %147 : vector<16x256xf32> to vector<16x256xbf16>
    %149 = tpu.concatenate %127, %130, %133, %136, %139, %142, %145, %148 in 1 : vector<16x256xbf16>, vector<16x256xbf16>, vector<16x256xbf16>, vector<16x256xbf16>, vector<16x256xbf16>, vector<16x256xbf16>, vector<16x256xbf16>, vector<16x256xbf16> -> vector<16x2048xbf16>
    %c6 = arith.constant 6 : index
    %c0_132 = arith.constant 0 : index
    %c0_133 = arith.constant 0 : index
    %150 = vector.load %arg1[%c6, %c0_132, %c0_133] : memref<8x72x256xf32, #tpu.memory_space<vmem>>, vector<1x16x256xf32>
    %151 = vector.shape_cast %150 : vector<1x16x256xf32> to vector<16x256xf32>
    %152 = arith.truncf %151 : vector<16x256xf32> to vector<16x256xbf16>
    %c6_134 = arith.constant 6 : index
    %c16_135 = arith.constant 16 : index
    %c0_136 = arith.constant 0 : index
    %153 = vector.load %arg1[%c6_134, %c16_135, %c0_136] : memref<8x72x256xf32, #tpu.memory_space<vmem>>, vector<1x16x256xf32>
    %154 = vector.shape_cast %153 : vector<1x16x256xf32> to vector<16x256xf32>
    %155 = arith.truncf %154 : vector<16x256xf32> to vector<16x256xbf16>
    %c6_137 = arith.constant 6 : index
    %c32_138 = arith.constant 32 : index
    %c0_139 = arith.constant 0 : index
    %156 = vector.load %arg1[%c6_137, %c32_138, %c0_139] : memref<8x72x256xf32, #tpu.memory_space<vmem>>, vector<1x16x256xf32>
    %157 = vector.shape_cast %156 : vector<1x16x256xf32> to vector<16x256xf32>
    %158 = arith.truncf %157 : vector<16x256xf32> to vector<16x256xbf16>
    %c6_140 = arith.constant 6 : index
    %c48_141 = arith.constant 48 : index
    %c0_142 = arith.constant 0 : index
    %159 = vector.load %arg1[%c6_140, %c48_141, %c0_142] : memref<8x72x256xf32, #tpu.memory_space<vmem>>, vector<1x16x256xf32>
    %160 = vector.shape_cast %159 : vector<1x16x256xf32> to vector<16x256xf32>
    %161 = arith.truncf %160 : vector<16x256xf32> to vector<16x256xbf16>
    %c6_143 = arith.constant 6 : index
    %c1_144 = arith.constant 1 : index
    %c0_145 = arith.constant 0 : index
    %162 = vector.load %arg1[%c6_143, %c1_144, %c0_145] : memref<8x72x256xf32, #tpu.memory_space<vmem>>, vector<1x16x256xf32>
    %163 = vector.shape_cast %162 : vector<1x16x256xf32> to vector<16x256xf32>
    %164 = arith.truncf %163 : vector<16x256xf32> to vector<16x256xbf16>
    %c6_146 = arith.constant 6 : index
    %c17_147 = arith.constant 17 : index
    %c0_148 = arith.constant 0 : index
    %165 = vector.load %arg1[%c6_146, %c17_147, %c0_148] : memref<8x72x256xf32, #tpu.memory_space<vmem>>, vector<1x16x256xf32>
    %166 = vector.shape_cast %165 : vector<1x16x256xf32> to vector<16x256xf32>
    %167 = arith.truncf %166 : vector<16x256xf32> to vector<16x256xbf16>
    %c6_149 = arith.constant 6 : index
    %c33_150 = arith.constant 33 : index
    %c0_151 = arith.constant 0 : index
    %168 = vector.load %arg1[%c6_149, %c33_150, %c0_151] : memref<8x72x256xf32, #tpu.memory_space<vmem>>, vector<1x16x256xf32>
    %169 = vector.shape_cast %168 : vector<1x16x256xf32> to vector<16x256xf32>
    %170 = arith.truncf %169 : vector<16x256xf32> to vector<16x256xbf16>
    %c6_152 = arith.constant 6 : index
    %c49_153 = arith.constant 49 : index
    %c0_154 = arith.constant 0 : index
    %171 = vector.load %arg1[%c6_152, %c49_153, %c0_154] : memref<8x72x256xf32, #tpu.memory_space<vmem>>, vector<1x16x256xf32>
    %172 = vector.shape_cast %171 : vector<1x16x256xf32> to vector<16x256xf32>
    %173 = arith.truncf %172 : vector<16x256xf32> to vector<16x256xbf16>
    %174 = tpu.concatenate %152, %155, %158, %161, %164, %167, %170, %173 in 1 : vector<16x256xbf16>, vector<16x256xbf16>, vector<16x256xbf16>, vector<16x256xbf16>, vector<16x256xbf16>, vector<16x256xbf16>, vector<16x256xbf16>, vector<16x256xbf16> -> vector<16x2048xbf16>
    %c7 = arith.constant 7 : index
    %c0_155 = arith.constant 0 : index
    %c0_156 = arith.constant 0 : index
    %175 = vector.load %arg1[%c7, %c0_155, %c0_156] : memref<8x72x256xf32, #tpu.memory_space<vmem>>, vector<1x16x256xf32>
    %176 = vector.shape_cast %175 : vector<1x16x256xf32> to vector<16x256xf32>
    %177 = arith.truncf %176 : vector<16x256xf32> to vector<16x256xbf16>
    %c7_157 = arith.constant 7 : index
    %c16_158 = arith.constant 16 : index
    %c0_159 = arith.constant 0 : index
    %178 = vector.load %arg1[%c7_157, %c16_158, %c0_159] : memref<8x72x256xf32, #tpu.memory_space<vmem>>, vector<1x16x256xf32>
    %179 = vector.shape_cast %178 : vector<1x16x256xf32> to vector<16x256xf32>
    %180 = arith.truncf %179 : vector<16x256xf32> to vector<16x256xbf16>
    %c7_160 = arith.constant 7 : index
    %c32_161 = arith.constant 32 : index
    %c0_162 = arith.constant 0 : index
    %181 = vector.load %arg1[%c7_160, %c32_161, %c0_162] : memref<8x72x256xf32, #tpu.memory_space<vmem>>, vector<1x16x256xf32>
    %182 = vector.shape_cast %181 : vector<1x16x256xf32> to vector<16x256xf32>
    %183 = arith.truncf %182 : vector<16x256xf32> to vector<16x256xbf16>
    %c7_163 = arith.constant 7 : index
    %c48_164 = arith.constant 48 : index
    %c0_165 = arith.constant 0 : index
    %184 = vector.load %arg1[%c7_163, %c48_164, %c0_165] : memref<8x72x256xf32, #tpu.memory_space<vmem>>, vector<1x16x256xf32>
    %185 = vector.shape_cast %184 : vector<1x16x256xf32> to vector<16x256xf32>
    %186 = arith.truncf %185 : vector<16x256xf32> to vector<16x256xbf16>
    %c7_166 = arith.constant 7 : index
    %c1_167 = arith.constant 1 : index
    %c0_168 = arith.constant 0 : index
    %187 = vector.load %arg1[%c7_166, %c1_167, %c0_168] : memref<8x72x256xf32, #tpu.memory_space<vmem>>, vector<1x16x256xf32>
    %188 = vector.shape_cast %187 : vector<1x16x256xf32> to vector<16x256xf32>
    %189 = arith.truncf %188 : vector<16x256xf32> to vector<16x256xbf16>
    %c7_169 = arith.constant 7 : index
    %c17_170 = arith.constant 17 : index
    %c0_171 = arith.constant 0 : index
    %190 = vector.load %arg1[%c7_169, %c17_170, %c0_171] : memref<8x72x256xf32, #tpu.memory_space<vmem>>, vector<1x16x256xf32>
    %191 = vector.shape_cast %190 : vector<1x16x256xf32> to vector<16x256xf32>
    %192 = arith.truncf %191 : vector<16x256xf32> to vector<16x256xbf16>
    %c7_172 = arith.constant 7 : index
    %c33_173 = arith.constant 33 : index
    %c0_174 = arith.constant 0 : index
    %193 = vector.load %arg1[%c7_172, %c33_173, %c0_174] : memref<8x72x256xf32, #tpu.memory_space<vmem>>, vector<1x16x256xf32>
    %194 = vector.shape_cast %193 : vector<1x16x256xf32> to vector<16x256xf32>
    %195 = arith.truncf %194 : vector<16x256xf32> to vector<16x256xbf16>
    %c7_175 = arith.constant 7 : index
    %c49_176 = arith.constant 49 : index
    %c0_177 = arith.constant 0 : index
    %196 = vector.load %arg1[%c7_175, %c49_176, %c0_177] : memref<8x72x256xf32, #tpu.memory_space<vmem>>, vector<1x16x256xf32>
    %197 = vector.shape_cast %196 : vector<1x16x256xf32> to vector<16x256xf32>
    %198 = arith.truncf %197 : vector<16x256xf32> to vector<16x256xbf16>
    %199 = tpu.concatenate %177, %180, %183, %186, %189, %192, %195, %198 in 1 : vector<16x256xbf16>, vector<16x256xbf16>, vector<16x256xbf16>, vector<16x256xbf16>, vector<16x256xbf16>, vector<16x256xbf16>, vector<16x256xbf16>, vector<16x256xbf16> -> vector<16x2048xbf16>
    %200 = tpu.concatenate %24, %49, %74, %99, %124, %149, %174, %199 in 0 : vector<16x2048xbf16>, vector<16x2048xbf16>, vector<16x2048xbf16>, vector<16x2048xbf16>, vector<16x2048xbf16>, vector<16x2048xbf16>, vector<16x2048xbf16>, vector<16x2048xbf16> -> vector<128x2048xbf16>
    %c0_178 = arith.constant 0 : index
    %c0_179 = arith.constant 0 : index
    %201 = vector.load %arg2[%c0_178, %c0_179] : memref<2048x128xbf16, #tpu.memory_space<vmem>>, vector<2048x128xbf16>
    %cst = arith.constant dense<0.000000e+00> : vector<128x128xf32>
    %202 = tpu.matmul %200, %201, %cst {dimension_numbers = #tpu.dot_dimension_numbers<[1], [0], [0], [1], [0, 0, 1, 1], [], []>} : vector<128x2048xbf16>, vector<2048x128xbf16>, vector<128x128xf32> -> vector<128x128xf32>
    %c0_180 = arith.constant 0 : index
    %c0_181 = arith.constant 0 : index
    %203 = vector.load %arg3[%c0_180, %c0_181] : memref<1x128xf32, #tpu.memory_space<vmem>>, vector<1x128xf32>
    %204 = vector.broadcast %203 : vector<1x128xf32> to vector<128x128xf32>
    %205 = arith.addf %202, %204 : vector<128x128xf32>
    %cst_182 = arith.constant 0.000000e+00 : f32
    %206 = vector.broadcast %cst_182 : f32 to vector<128x128xf32>
    %207 = arith.maximumf %205, %206 : vector<128x128xf32>
    %c0_183 = arith.constant 0 : index
    %c0_184 = arith.constant 0 : index
    %208 = vector.load %arg15[%c0_183, %c0_184] : memref<128x128xf32, #tpu.memory_space<vmem>>, vector<128x128xf32>
    tpu.vector_store %arg15[%c0_183, %c0_184], %207 {strides = array<i32>} : memref<128x128xf32, #tpu.memory_space<vmem>>, vector<128x128xf32>,
    %c0_185 = arith.constant 0 : index
    %c0_186 = arith.constant 0 : index
    %209 = tpu.strided_load %arg15[%c0_185, %c0_186] {strides = array<i32: 2, 1>} : memref<128x128xf32, #tpu.memory_space<vmem>>, vector<6x128xf32>
    %c1_187 = arith.constant 1 : index
    %c0_188 = arith.constant 0 : index
    %210 = tpu.strided_load %arg15[%c1_187, %c0_188] {strides = array<i32: 2, 1>} : memref<128x128xf32, #tpu.memory_space<vmem>>, vector<6x128xf32>
    %c2_189 = arith.constant 2 : index
    %c0_190 = arith.constant 0 : index
    %211 = tpu.strided_load %arg15[%c2_189, %c0_190] {strides = array<i32: 2, 1>} : memref<128x128xf32, #tpu.memory_space<vmem>>, vector<6x128xf32>
    %c3_191 = arith.constant 3 : index
    %c0_192 = arith.constant 0 : index
    %212 = tpu.strided_load %arg15[%c3_191, %c0_192] {strides = array<i32: 2, 1>} : memref<128x128xf32, #tpu.memory_space<vmem>>, vector<6x128xf32>
    %213 = tpu.concatenate %209, %210, %211, %212 in 1 : vector<6x128xf32>, vector<6x128xf32>, vector<6x128xf32>, vector<6x128xf32> -> vector<6x512xf32>
    %c16_193 = arith.constant 16 : index
    %c0_194 = arith.constant 0 : index
    %214 = tpu.strided_load %arg15[%c16_193, %c0_194] {strides = array<i32: 2, 1>} : memref<128x128xf32, #tpu.memory_space<vmem>>, vector<6x128xf32>
    %c17_195 = arith.constant 17 : index
    %c0_196 = arith.constant 0 : index
    %215 = tpu.strided_load %arg15[%c17_195, %c0_196] {strides = array<i32: 2, 1>} : memref<128x128xf32, #tpu.memory_space<vmem>>, vector<6x128xf32>
    %c18 = arith.constant 18 : index
    %c0_197 = arith.constant 0 : index
    %216 = tpu.strided_load %arg15[%c18, %c0_197] {strides = array<i32: 2, 1>} : memref<128x128xf32, #tpu.memory_space<vmem>>, vector<6x128xf32>
    %c19 = arith.constant 19 : index
    %c0_198 = arith.constant 0 : index
    %217 = tpu.strided_load %arg15[%c19, %c0_198] {strides = array<i32: 2, 1>} : memref<128x128xf32, #tpu.memory_space<vmem>>, vector<6x128xf32>
    %218 = tpu.concatenate %214, %215, %216, %217 in 1 : vector<6x128xf32>, vector<6x128xf32>, vector<6x128xf32>, vector<6x128xf32> -> vector<6x512xf32>
    %c32_199 = arith.constant 32 : index
    %c0_200 = arith.constant 0 : index
    %219 = tpu.strided_load %arg15[%c32_199, %c0_200] {strides = array<i32: 2, 1>} : memref<128x128xf32, #tpu.memory_space<vmem>>, vector<6x128xf32>
    %c33_201 = arith.constant 33 : index
    %c0_202 = arith.constant 0 : index
    %220 = tpu.strided_load %arg15[%c33_201, %c0_202] {strides = array<i32: 2, 1>} : memref<128x128xf32, #tpu.memory_space<vmem>>, vector<6x128xf32>
    %c34 = arith.constant 34 : index
    %c0_203 = arith.constant 0 : index
    %221 = tpu.strided_load %arg15[%c34, %c0_203] {strides = array<i32: 2, 1>} : memref<128x128xf32, #tpu.memory_space<vmem>>, vector<6x128xf32>
    %c35 = arith.constant 35 : index
    %c0_204 = arith.constant 0 : index
    %222 = tpu.strided_load %arg15[%c35, %c0_204] {strides = array<i32: 2, 1>} : memref<128x128xf32, #tpu.memory_space<vmem>>, vector<6x128xf32>
    %223 = tpu.concatenate %219, %220, %221, %222 in 1 : vector<6x128xf32>, vector<6x128xf32>, vector<6x128xf32>, vector<6x128xf32> -> vector<6x512xf32>
    %c48_205 = arith.constant 48 : index
    %c0_206 = arith.constant 0 : index
    %224 = tpu.strided_load %arg15[%c48_205, %c0_206] {strides = array<i32: 2, 1>} : memref<128x128xf32, #tpu.memory_space<vmem>>, vector<6x128xf32>
    %c49_207 = arith.constant 49 : index
    %c0_208 = arith.constant 0 : index
    %225 = tpu.strided_load %arg15[%c49_207, %c0_208] {strides = array<i32: 2, 1>} : memref<128x128xf32, #tpu.memory_space<vmem>>, vector<6x128xf32>
    %c50 = arith.constant 50 : index
    %c0_209 = arith.constant 0 : index
    %226 = tpu.strided_load %arg15[%c50, %c0_209] {strides = array<i32: 2, 1>} : memref<128x128xf32, #tpu.memory_space<vmem>>, vector<6x128xf32>
    %c51 = arith.constant 51 : index
    %c0_210 = arith.constant 0 : index
    %227 = tpu.strided_load %arg15[%c51, %c0_210] {strides = array<i32: 2, 1>} : memref<128x128xf32, #tpu.memory_space<vmem>>, vector<6x128xf32>
    %228 = tpu.concatenate %224, %225, %226, %227 in 1 : vector<6x128xf32>, vector<6x128xf32>, vector<6x128xf32>, vector<6x128xf32> -> vector<6x512xf32>
    %c64 = arith.constant 64 : index
    %c0_211 = arith.constant 0 : index
    %229 = tpu.strided_load %arg15[%c64, %c0_211] {strides = array<i32: 2, 1>} : memref<128x128xf32, #tpu.memory_space<vmem>>, vector<6x128xf32>
    %c65 = arith.constant 65 : index
    %c0_212 = arith.constant 0 : index
    %230 = tpu.strided_load %arg15[%c65, %c0_212] {strides = array<i32: 2, 1>} : memref<128x128xf32, #tpu.memory_space<vmem>>, vector<6x128xf32>
    %c66 = arith.constant 66 : index
    %c0_213 = arith.constant 0 : index
    %231 = tpu.strided_load %arg15[%c66, %c0_213] {strides = array<i32: 2, 1>} : memref<128x128xf32, #tpu.memory_space<vmem>>, vector<6x128xf32>
    %c67 = arith.constant 67 : index
    %c0_214 = arith.constant 0 : index
    %232 = tpu.strided_load %arg15[%c67, %c0_214] {strides = array<i32: 2, 1>} : memref<128x128xf32, #tpu.memory_space<vmem>>, vector<6x128xf32>
    %233 = tpu.concatenate %229, %230, %231, %232 in 1 : vector<6x128xf32>, vector<6x128xf32>, vector<6x128xf32>, vector<6x128xf32> -> vector<6x512xf32>
    %c80 = arith.constant 80 : index
    %c0_215 = arith.constant 0 : index
    %234 = tpu.strided_load %arg15[%c80, %c0_215] {strides = array<i32: 2, 1>} : memref<128x128xf32, #tpu.memory_space<vmem>>, vector<6x128xf32>
    %c81 = arith.constant 81 : index
    %c0_216 = arith.constant 0 : index
    %235 = tpu.strided_load %arg15[%c81, %c0_216] {strides = array<i32: 2, 1>} : memref<128x128xf32, #tpu.memory_space<vmem>>, vector<6x128xf32>
    %c82 = arith.constant 82 : index
    %c0_217 = arith.constant 0 : index
    %236 = tpu.strided_load %arg15[%c82, %c0_217] {strides = array<i32: 2, 1>} : memref<128x128xf32, #tpu.memory_space<vmem>>, vector<6x128xf32>
    %c83 = arith.constant 83 : index
    %c0_218 = arith.constant 0 : index
    %237 = tpu.strided_load %arg15[%c83, %c0_218] {strides = array<i32: 2, 1>} : memref<128x128xf32, #tpu.memory_space<vmem>>, vector<6x128xf32>
    %238 = tpu.concatenate %234, %235, %236, %237 in 1 : vector<6x128xf32>, vector<6x128xf32>, vector<6x128xf32>, vector<6x128xf32> -> vector<6x512xf32>
    %c96 = arith.constant 96 : index
    %c0_219 = arith.constant 0 : index
    %239 = tpu.strided_load %arg15[%c96, %c0_219] {strides = array<i32: 2, 1>} : memref<128x128xf32, #tpu.memory_space<vmem>>, vector<6x128xf32>
    %c97 = arith.constant 97 : index
    %c0_220 = arith.constant 0 : index
    %240 = tpu.strided_load %arg15[%c97, %c0_220] {strides = array<i32: 2, 1>} : memref<128x128xf32, #tpu.memory_space<vmem>>, vector<6x128xf32>
    %c98 = arith.constant 98 : index
    %c0_221 = arith.constant 0 : index
    %241 = tpu.strided_load %arg15[%c98, %c0_221] {strides = array<i32: 2, 1>} : memref<128x128xf32, #tpu.memory_space<vmem>>, vector<6x128xf32>
    %c99 = arith.constant 99 : index
    %c0_222 = arith.constant 0 : index
    %242 = tpu.strided_load %arg15[%c99, %c0_222] {strides = array<i32: 2, 1>} : memref<128x128xf32, #tpu.memory_space<vmem>>, vector<6x128xf32>
    %243 = tpu.concatenate %239, %240, %241, %242 in 1 : vector<6x128xf32>, vector<6x128xf32>, vector<6x128xf32>, vector<6x128xf32> -> vector<6x512xf32>
    %c112 = arith.constant 112 : index
    %c0_223 = arith.constant 0 : index
    %244 = tpu.strided_load %arg15[%c112, %c0_223] {strides = array<i32: 2, 1>} : memref<128x128xf32, #tpu.memory_space<vmem>>, vector<6x128xf32>
    %c113 = arith.constant 113 : index
    %c0_224 = arith.constant 0 : index
    %245 = tpu.strided_load %arg15[%c113, %c0_224] {strides = array<i32: 2, 1>} : memref<128x128xf32, #tpu.memory_space<vmem>>, vector<6x128xf32>
    %c114 = arith.constant 114 : index
    %c0_225 = arith.constant 0 : index
    %246 = tpu.strided_load %arg15[%c114, %c0_225] {strides = array<i32: 2, 1>} : memref<128x128xf32, #tpu.memory_space<vmem>>, vector<6x128xf32>
    %c115 = arith.constant 115 : index
    %c0_226 = arith.constant 0 : index
    %247 = tpu.strided_load %arg15[%c115, %c0_226] {strides = array<i32: 2, 1>} : memref<128x128xf32, #tpu.memory_space<vmem>>, vector<6x128xf32>
    %248 = tpu.concatenate %244, %245, %246, %247 in 1 : vector<6x128xf32>, vector<6x128xf32>, vector<6x128xf32>, vector<6x128xf32> -> vector<6x512xf32>
    %249 = tpu.concatenate %213, %218, %223, %228, %233, %238, %243, %248 in 0 : vector<6x512xf32>, vector<6x512xf32>, vector<6x512xf32>, vector<6x512xf32>, vector<6x512xf32>, vector<6x512xf32>, vector<6x512xf32>, vector<6x512xf32> -> vector<48x512xf32>
    %250 = arith.truncf %249 : vector<48x512xf32> to vector<48x512xbf16>
    %c0_227 = arith.constant 0 : index
    %c0_228 = arith.constant 0 : index
    %251 = vector.load %arg4[%c0_227, %c0_228] : memref<512x128xbf16, #tpu.memory_space<vmem>>, vector<512x128xbf16>
    %cst_229 = arith.constant dense<0.000000e+00> : vector<48x128xf32>
    %252 = tpu.matmul %250, %251, %cst_229 {dimension_numbers = #tpu.dot_dimension_numbers<[1], [0], [0], [1], [0, 0, 1, 1], [], []>} : vector<48x512xbf16>, vector<512x128xbf16>, vector<48x128xf32> -> vector<48x128xf32>
    %c0_230 = arith.constant 0 : index
    %c0_231 = arith.constant 0 : index
    %253 = vector.load %arg5[%c0_230, %c0_231] : memref<1x128xf32, #tpu.memory_space<vmem>>, vector<1x128xf32>
    %254 = vector.broadcast %253 : vector<1x128xf32> to vector<48x128xf32>
    %255 = arith.addf %252, %254 : vector<48x128xf32>
    %cst_232 = arith.constant 0.000000e+00 : f32
    %256 = vector.broadcast %cst_232 : f32 to vector<48x128xf32>
    %257 = arith.maximumf %255, %256 : vector<48x128xf32>
    %258 = vector.extract_strided_slice %257 {offsets = [0, 0], sizes = [4, 128], strides = [1, 1]} : vector<48x128xf32> to vector<4x128xf32>
    %259 = vector.extract_strided_slice %257 {offsets = [1, 0], sizes = [4, 128], strides = [1, 1]} : vector<48x128xf32> to vector<4x128xf32>
    %260 = vector.extract_strided_slice %257 {offsets = [2, 0], sizes = [4, 128], strides = [1, 1]} : vector<48x128xf32> to vector<4x128xf32>
    %261 = tpu.concatenate %258, %259, %260 in 1 : vector<4x128xf32>, vector<4x128xf32>, vector<4x128xf32> -> vector<4x384xf32>
    %262 = vector.extract_strided_slice %257 {offsets = [6, 0], sizes = [4, 128], strides = [1, 1]} : vector<48x128xf32> to vector<4x128xf32>
    %263 = vector.extract_strided_slice %257 {offsets = [7, 0], sizes = [4, 128], strides = [1, 1]} : vector<48x128xf32> to vector<4x128xf32>
    %264 = vector.extract_strided_slice %257 {offsets = [8, 0], sizes = [4, 128], strides = [1, 1]} : vector<48x128xf32> to vector<4x128xf32>
    %265 = tpu.concatenate %262, %263, %264 in 1 : vector<4x128xf32>, vector<4x128xf32>, vector<4x128xf32> -> vector<4x384xf32>
    %266 = vector.extract_strided_slice %257 {offsets = [12, 0], sizes = [4, 128], strides = [1, 1]} : vector<48x128xf32> to vector<4x128xf32>
    %267 = vector.extract_strided_slice %257 {offsets = [13, 0], sizes = [4, 128], strides = [1, 1]} : vector<48x128xf32> to vector<4x128xf32>
    %268 = vector.extract_strided_slice %257 {offsets = [14, 0], sizes = [4, 128], strides = [1, 1]} : vector<48x128xf32> to vector<4x128xf32>
    %269 = tpu.concatenate %266, %267, %268 in 1 : vector<4x128xf32>, vector<4x128xf32>, vector<4x128xf32> -> vector<4x384xf32>
    %270 = vector.extract_strided_slice %257 {offsets = [18, 0], sizes = [4, 128], strides = [1, 1]} : vector<48x128xf32> to vector<4x128xf32>
    %271 = vector.extract_strided_slice %257 {offsets = [19, 0], sizes = [4, 128], strides = [1, 1]} : vector<48x128xf32> to vector<4x128xf32>
    %272 = vector.extract_strided_slice %257 {offsets = [20, 0], sizes = [4, 128], strides = [1, 1]} : vector<48x128xf32> to vector<4x128xf32>
    %273 = tpu.concatenate %270, %271, %272 in 1 : vector<4x128xf32>, vector<4x128xf32>, vector<4x128xf32> -> vector<4x384xf32>
    %274 = vector.extract_strided_slice %257 {offsets = [24, 0], sizes = [4, 128], strides = [1, 1]} : vector<48x128xf32> to vector<4x128xf32>
    %275 = vector.extract_strided_slice %257 {offsets = [25, 0], sizes = [4, 128], strides = [1, 1]} : vector<48x128xf32> to vector<4x128xf32>
    %276 = vector.extract_strided_slice %257 {offsets = [26, 0], sizes = [4, 128], strides = [1, 1]} : vector<48x128xf32> to vector<4x128xf32>
    %277 = tpu.concatenate %274, %275, %276 in 1 : vector<4x128xf32>, vector<4x128xf32>, vector<4x128xf32> -> vector<4x384xf32>
    %278 = vector.extract_strided_slice %257 {offsets = [30, 0], sizes = [4, 128], strides = [1, 1]} : vector<48x128xf32> to vector<4x128xf32>
    %279 = vector.extract_strided_slice %257 {offsets = [31, 0], sizes = [4, 128], strides = [1, 1]} : vector<48x128xf32> to vector<4x128xf32>
    %280 = vector.extract_strided_slice %257 {offsets = [32, 0], sizes = [4, 128], strides = [1, 1]} : vector<48x128xf32> to vector<4x128xf32>
    %281 = tpu.concatenate %278, %279, %280 in 1 : vector<4x128xf32>, vector<4x128xf32>, vector<4x128xf32> -> vector<4x384xf32>
    %282 = vector.extract_strided_slice %257 {offsets = [36, 0], sizes = [4, 128], strides = [1, 1]} : vector<48x128xf32> to vector<4x128xf32>
    %283 = vector.extract_strided_slice %257 {offsets = [37, 0], sizes = [4, 128], strides = [1, 1]} : vector<48x128xf32> to vector<4x128xf32>
    %284 = vector.extract_strided_slice %257 {offsets = [38, 0], sizes = [4, 128], strides = [1, 1]} : vector<48x128xf32> to vector<4x128xf32>
    %285 = tpu.concatenate %282, %283, %284 in 1 : vector<4x128xf32>, vector<4x128xf32>, vector<4x128xf32> -> vector<4x384xf32>
    %286 = vector.extract_strided_slice %257 {offsets = [42, 0], sizes = [4, 128], strides = [1, 1]} : vector<48x128xf32> to vector<4x128xf32>
    %287 = vector.extract_strided_slice %257 {offsets = [43, 0], sizes = [4, 128], strides = [1, 1]} : vector<48x128xf32> to vector<4x128xf32>
    %288 = vector.extract_strided_slice %257 {offsets = [44, 0], sizes = [4, 128], strides = [1, 1]} : vector<48x128xf32> to vector<4x128xf32>
    %289 = tpu.concatenate %286, %287, %288 in 1 : vector<4x128xf32>, vector<4x128xf32>, vector<4x128xf32> -> vector<4x384xf32>
    %290 = tpu.concatenate %261, %265, %269, %273, %277, %281, %285, %289 in 0 : vector<4x384xf32>, vector<4x384xf32>, vector<4x384xf32>, vector<4x384xf32>, vector<4x384xf32>, vector<4x384xf32>, vector<4x384xf32>, vector<4x384xf32> -> vector<32x384xf32>
    %291 = arith.truncf %290 : vector<32x384xf32> to vector<32x384xbf16>
    %c0_233 = arith.constant 0 : index
    %c0_234 = arith.constant 0 : index
    %292 = vector.load %arg6[%c0_233, %c0_234] : memref<384x128xbf16, #tpu.memory_space<vmem>>, vector<384x128xbf16>
    %cst_235 = arith.constant dense<0.000000e+00> : vector<32x128xf32>
    %293 = tpu.matmul %291, %292, %cst_235 {dimension_numbers = #tpu.dot_dimension_numbers<[1], [0], [0], [1], [0, 0, 1, 1], [], []>} : vector<32x384xbf16>, vector<384x128xbf16>, vector<32x128xf32> -> vector<32x128xf32>
    %c0_236 = arith.constant 0 : index
    %c0_237 = arith.constant 0 : index
    %294 = vector.load %arg7[%c0_236, %c0_237] : memref<1x128xf32, #tpu.memory_space<vmem>>, vector<1x128xf32>
    %295 = vector.broadcast %294 : vector<1x128xf32> to vector<32x128xf32>
    %296 = arith.addf %293, %295 : vector<32x128xf32>
    %cst_238 = arith.constant 0.000000e+00 : f32
    %297 = vector.broadcast %cst_238 : f32 to vector<32x128xf32>
    %298 = arith.maximumf %296, %297 : vector<32x128xf32>
    %299 = vector.extract_strided_slice %298 {offsets = [0, 0], sizes = [2, 128], strides = [1, 1]} : vector<32x128xf32> to vector<2x128xf32>
    %300 = vector.extract_strided_slice %298 {offsets = [1, 0], sizes = [2, 128], strides = [1, 1]} : vector<32x128xf32> to vector<2x128xf32>
    %301 = vector.extract_strided_slice %298 {offsets = [2, 0], sizes = [2, 128], strides = [1, 1]} : vector<32x128xf32> to vector<2x128xf32>
    %302 = tpu.concatenate %299, %300, %301 in 1 : vector<2x128xf32>, vector<2x128xf32>, vector<2x128xf32> -> vector<2x384xf32>
    %303 = vector.extract_strided_slice %298 {offsets = [4, 0], sizes = [2, 128], strides = [1, 1]} : vector<32x128xf32> to vector<2x128xf32>
    %304 = vector.extract_strided_slice %298 {offsets = [5, 0], sizes = [2, 128], strides = [1, 1]} : vector<32x128xf32> to vector<2x128xf32>
    %305 = vector.extract_strided_slice %298 {offsets = [6, 0], sizes = [2, 128], strides = [1, 1]} : vector<32x128xf32> to vector<2x128xf32>
    %306 = tpu.concatenate %303, %304, %305 in 1 : vector<2x128xf32>, vector<2x128xf32>, vector<2x128xf32> -> vector<2x384xf32>
    %307 = vector.extract_strided_slice %298 {offsets = [8, 0], sizes = [2, 128], strides = [1, 1]} : vector<32x128xf32> to vector<2x128xf32>
    %308 = vector.extract_strided_slice %298 {offsets = [9, 0], sizes = [2, 128], strides = [1, 1]} : vector<32x128xf32> to vector<2x128xf32>
    %309 = vector.extract_strided_slice %298 {offsets = [10, 0], sizes = [2, 128], strides = [1, 1]} : vector<32x128xf32> to vector<2x128xf32>
    %310 = tpu.concatenate %307, %308, %309 in 1 : vector<2x128xf32>, vector<2x128xf32>, vector<2x128xf32> -> vector<2x384xf32>
    %311 = vector.extract_strided_slice %298 {offsets = [12, 0], sizes = [2, 128], strides = [1, 1]} : vector<32x128xf32> to vector<2x128xf32>
    %312 = vector.extract_strided_slice %298 {offsets = [13, 0], sizes = [2, 128], strides = [1, 1]} : vector<32x128xf32> to vector<2x128xf32>
    %313 = vector.extract_strided_slice %298 {offsets = [14, 0], sizes = [2, 128], strides = [1, 1]} : vector<32x128xf32> to vector<2x128xf32>
    %314 = tpu.concatenate %311, %312, %313 in 1 : vector<2x128xf32>, vector<2x128xf32>, vector<2x128xf32> -> vector<2x384xf32>
    %315 = vector.extract_strided_slice %298 {offsets = [16, 0], sizes = [2, 128], strides = [1, 1]} : vector<32x128xf32> to vector<2x128xf32>
    %316 = vector.extract_strided_slice %298 {offsets = [17, 0], sizes = [2, 128], strides = [1, 1]} : vector<32x128xf32> to vector<2x128xf32>
    %317 = vector.extract_strided_slice %298 {offsets = [18, 0], sizes = [2, 128], strides = [1, 1]} : vector<32x128xf32> to vector<2x128xf32>
    %318 = tpu.concatenate %315, %316, %317 in 1 : vector<2x128xf32>, vector<2x128xf32>, vector<2x128xf32> -> vector<2x384xf32>
    %319 = vector.extract_strided_slice %298 {offsets = [20, 0], sizes = [2, 128], strides = [1, 1]} : vector<32x128xf32> to vector<2x128xf32>
    %320 = vector.extract_strided_slice %298 {offsets = [21, 0], sizes = [2, 128], strides = [1, 1]} : vector<32x128xf32> to vector<2x128xf32>
    %321 = vector.extract_strided_slice %298 {offsets = [22, 0], sizes = [2, 128], strides = [1, 1]} : vector<32x128xf32> to vector<2x128xf32>
    %322 = tpu.concatenate %319, %320, %321 in 1 : vector<2x128xf32>, vector<2x128xf32>, vector<2x128xf32> -> vector<2x384xf32>
    %323 = vector.extract_strided_slice %298 {offsets = [24, 0], sizes = [2, 128], strides = [1, 1]} : vector<32x128xf32> to vector<2x128xf32>
    %324 = vector.extract_strided_slice %298 {offsets = [25, 0], sizes = [2, 128], strides = [1, 1]} : vector<32x128xf32> to vector<2x128xf32>
    %325 = vector.extract_strided_slice %298 {offsets = [26, 0], sizes = [2, 128], strides = [1, 1]} : vector<32x128xf32> to vector<2x128xf32>
    %326 = tpu.concatenate %323, %324, %325 in 1 : vector<2x128xf32>, vector<2x128xf32>, vector<2x128xf32> -> vector<2x384xf32>
    %327 = vector.extract_strided_slice %298 {offsets = [28, 0], sizes = [2, 128], strides = [1, 1]} : vector<32x128xf32> to vector<2x128xf32>
    %328 = vector.extract_strided_slice %298 {offsets = [29, 0], sizes = [2, 128], strides = [1, 1]} : vector<32x128xf32> to vector<2x128xf32>
    %329 = vector.extract_strided_slice %298 {offsets = [30, 0], sizes = [2, 128], strides = [1, 1]} : vector<32x128xf32> to vector<2x128xf32>
    %330 = tpu.concatenate %327, %328, %329 in 1 : vector<2x128xf32>, vector<2x128xf32>, vector<2x128xf32> -> vector<2x384xf32>
    %331 = tpu.concatenate %302, %306, %310, %314, %318, %322, %326, %330 in 0 : vector<2x384xf32>, vector<2x384xf32>, vector<2x384xf32>, vector<2x384xf32>, vector<2x384xf32>, vector<2x384xf32>, vector<2x384xf32>, vector<2x384xf32> -> vector<16x384xf32>
    %332 = arith.truncf %331 : vector<16x384xf32> to vector<16x384xbf16>
    %c0_239 = arith.constant 0 : index
    %c0_240 = arith.constant 0 : index
    %333 = vector.load %arg8[%c0_239, %c0_240] : memref<384x128xbf16, #tpu.memory_space<vmem>>, vector<384x128xbf16>
    %cst_241 = arith.constant dense<0.000000e+00> : vector<16x128xf32>
    %334 = tpu.matmul %332, %333, %cst_241 {dimension_numbers = #tpu.dot_dimension_numbers<[1], [0], [0], [1], [0, 0, 1, 1], [], []>} : vector<16x384xbf16>, vector<384x128xbf16>, vector<16x128xf32> -> vector<16x128xf32>
    %c0_242 = arith.constant 0 : index
    %c0_243 = arith.constant 0 : index
    %335 = vector.load %arg9[%c0_242, %c0_243] : memref<1x128xf32, #tpu.memory_space<vmem>>, vector<1x128xf32>
    %336 = vector.broadcast %335 : vector<1x128xf32> to vector<16x128xf32>
    %337 = arith.addf %334, %336 : vector<16x128xf32>
    %cst_244 = arith.constant 0.000000e+00 : f32
    %338 = vector.broadcast %cst_244 : f32 to vector<16x128xf32>
    %339 = arith.maximumf %337, %338 : vector<16x128xf32>
    %340 = vector.extract_strided_slice %339 {offsets = [0, 0], sizes = [1, 128], strides = [1, 1]} : vector<16x128xf32> to vector<1x128xf32>
    %341 = vector.extract_strided_slice %339 {offsets = [1, 0], sizes = [1, 128], strides = [1, 1]} : vector<16x128xf32> to vector<1x128xf32>
    %342 = tpu.concatenate %340, %341 in 1 : vector<1x128xf32>, vector<1x128xf32> -> vector<1x256xf32>
    %343 = vector.extract_strided_slice %339 {offsets = [2, 0], sizes = [1, 128], strides = [1, 1]} : vector<16x128xf32> to vector<1x128xf32>
    %344 = vector.extract_strided_slice %339 {offsets = [3, 0], sizes = [1, 128], strides = [1, 1]} : vector<16x128xf32> to vector<1x128xf32>
    %345 = tpu.concatenate %343, %344 in 1 : vector<1x128xf32>, vector<1x128xf32> -> vector<1x256xf32>
    %346 = vector.extract_strided_slice %339 {offsets = [4, 0], sizes = [1, 128], strides = [1, 1]} : vector<16x128xf32> to vector<1x128xf32>
    %347 = vector.extract_strided_slice %339 {offsets = [5, 0], sizes = [1, 128], strides = [1, 1]} : vector<16x128xf32> to vector<1x128xf32>
    %348 = tpu.concatenate %346, %347 in 1 : vector<1x128xf32>, vector<1x128xf32> -> vector<1x256xf32>
    %349 = vector.extract_strided_slice %339 {offsets = [6, 0], sizes = [1, 128], strides = [1, 1]} : vector<16x128xf32> to vector<1x128xf32>
    %350 = vector.extract_strided_slice %339 {offsets = [7, 0], sizes = [1, 128], strides = [1, 1]} : vector<16x128xf32> to vector<1x128xf32>
    %351 = tpu.concatenate %349, %350 in 1 : vector<1x128xf32>, vector<1x128xf32> -> vector<1x256xf32>
    %352 = vector.extract_strided_slice %339 {offsets = [8, 0], sizes = [1, 128], strides = [1, 1]} : vector<16x128xf32> to vector<1x128xf32>
    %353 = vector.extract_strided_slice %339 {offsets = [9, 0], sizes = [1, 128], strides = [1, 1]} : vector<16x128xf32> to vector<1x128xf32>
    %354 = tpu.concatenate %352, %353 in 1 : vector<1x128xf32>, vector<1x128xf32> -> vector<1x256xf32>
    %355 = vector.extract_strided_slice %339 {offsets = [10, 0], sizes = [1, 128], strides = [1, 1]} : vector<16x128xf32> to vector<1x128xf32>
    %356 = vector.extract_strided_slice %339 {offsets = [11, 0], sizes = [1, 128], strides = [1, 1]} : vector<16x128xf32> to vector<1x128xf32>
    %357 = tpu.concatenate %355, %356 in 1 : vector<1x128xf32>, vector<1x128xf32> -> vector<1x256xf32>
    %358 = vector.extract_strided_slice %339 {offsets = [12, 0], sizes = [1, 128], strides = [1, 1]} : vector<16x128xf32> to vector<1x128xf32>
    %359 = vector.extract_strided_slice %339 {offsets = [13, 0], sizes = [1, 128], strides = [1, 1]} : vector<16x128xf32> to vector<1x128xf32>
    %360 = tpu.concatenate %358, %359 in 1 : vector<1x128xf32>, vector<1x128xf32> -> vector<1x256xf32>
    %361 = vector.extract_strided_slice %339 {offsets = [14, 0], sizes = [1, 128], strides = [1, 1]} : vector<16x128xf32> to vector<1x128xf32>
    %362 = vector.extract_strided_slice %339 {offsets = [15, 0], sizes = [1, 128], strides = [1, 1]} : vector<16x128xf32> to vector<1x128xf32>
    %363 = tpu.concatenate %361, %362 in 1 : vector<1x128xf32>, vector<1x128xf32> -> vector<1x256xf32>
    %364 = tpu.concatenate %342, %345, %348, %351, %354, %357, %360, %363 in 0 : vector<1x256xf32>, vector<1x256xf32>, vector<1x256xf32>, vector<1x256xf32>, vector<1x256xf32>, vector<1x256xf32>, vector<1x256xf32>, vector<1x256xf32> -> vector<8x256xf32>
    %365 = arith.truncf %364 : vector<8x256xf32> to vector<8x256xbf16>
    %c0_245 = arith.constant 0 : index
    %c0_246 = arith.constant 0 : index
    %366 = vector.load %arg10[%c0_245, %c0_246] : memref<256x128xbf16, #tpu.memory_space<vmem>>, vector<256x128xbf16>
    %cst_247 = arith.constant dense<0.000000e+00> : vector<8x128xf32>
    %367 = tpu.matmul %365, %366, %cst_247 {dimension_numbers = #tpu.dot_dimension_numbers<[1], [0], [0], [1], [0, 0, 1, 1], [], []>} : vector<8x256xbf16>, vector<256x128xbf16>, vector<8x128xf32> -> vector<8x128xf32>
    %c0_248 = arith.constant 0 : index
    %c0_249 = arith.constant 0 : index
    %368 = vector.load %arg11[%c0_248, %c0_249] : memref<1x128xf32, #tpu.memory_space<vmem>>, vector<1x128xf32>
    %369 = vector.broadcast %368 : vector<1x128xf32> to vector<8x128xf32>
    %370 = arith.addf %367, %369 : vector<8x128xf32>
    %cst_250 = arith.constant 0.000000e+00 : f32
    %371 = vector.broadcast %cst_250 : f32 to vector<8x128xf32>
    %372 = arith.maximumf %370, %371 : vector<8x128xf32>
    %373 = arith.truncf %372 : vector<8x128xf32> to vector<8x128xbf16>
    %c0_251 = arith.constant 0 : index
    %c0_252 = arith.constant 0 : index
    %374 = vector.load %arg12[%c0_251, %c0_252] : memref<128x128xbf16, #tpu.memory_space<vmem>>, vector<128x128xbf16>
    %cst_253 = arith.constant dense<0.000000e+00> : vector<8x128xf32>
    %375 = tpu.matmul %373, %374, %cst_253 {dimension_numbers = #tpu.dot_dimension_numbers<[1], [0], [0], [1], [0, 0, 1, 1], [], []>} : vector<8x128xbf16>, vector<128x128xbf16>, vector<8x128xf32> -> vector<8x128xf32>
    %c0_254 = arith.constant 0 : index
    %c0_255 = arith.constant 0 : index
    %376 = vector.load %arg13[%c0_254, %c0_255] : memref<1x128xf32, #tpu.memory_space<vmem>>, vector<1x128xf32>
    %377 = vector.broadcast %376 : vector<1x128xf32> to vector<8x128xf32>
    %378 = arith.addf %375, %377 : vector<8x128xf32>
    %c0_256 = arith.constant 0 : index
    %c0_257 = arith.constant 0 : index
    %379 = vector.load %arg14[%c0_256, %c0_257] : memref<8x128xf32, #tpu.memory_space<vmem>>, vector<8x128xf32>
    tpu.vector_store %arg14[%c0_256, %c0_257], %378 {strides = array<i32>} : memref<8x128xf32, #tpu.memory_space<vmem>>, vector<8x128xf32>,
    return
  }
  func.func @transform_0(%arg0: i32) -> (i32, i32, i32) {
    %c0_i32 = arith.constant 0 : i32
    %c0_i32_0 = arith.constant 0 : i32
    %c0_i32_1 = arith.constant 0 : i32
    return %arg0, %c0_i32, %c0_i32_0 : i32, i32, i32
  }
  func.func @transform_1(%arg0: i32) -> (i32, i32) {
    %c0_i32 = arith.constant 0 : i32
    %c0_i32_0 = arith.constant 0 : i32
    %c0_i32_1 = arith.constant 0 : i32
    return %c0_i32, %c0_i32_0 : i32, i32
  }
  func.func @transform_2(%arg0: i32) -> (i32, i32) {
    %c0_i32 = arith.constant 0 : i32
    %c0_i32_0 = arith.constant 0 : i32
    %c0_i32_1 = arith.constant 0 : i32
    return %c0_i32, %c0_i32_0 : i32, i32
  }
  func.func @transform_3(%arg0: i32) -> (i32, i32) {
    %c0_i32 = arith.constant 0 : i32
    %c0_i32_0 = arith.constant 0 : i32
    %c0_i32_1 = arith.constant 0 : i32
    return %c0_i32, %c0_i32_0 : i32, i32
  }
  func.func @transform_4(%arg0: i32) -> (i32, i32) {
    %c0_i32 = arith.constant 0 : i32
    %c0_i32_0 = arith.constant 0 : i32
    %c0_i32_1 = arith.constant 0 : i32
    return %c0_i32, %c0_i32_0 : i32, i32
  }
  func.func @transform_5(%arg0: i32) -> (i32, i32) {
    %c0_i32 = arith.constant 0 : i32
    %c0_i32_0 = arith.constant 0 : i32
    %c0_i32_1 = arith.constant 0 : i32
    return %c0_i32, %c0_i32_0 : i32, i32
  }
  func.func @transform_6(%arg0: i32) -> (i32, i32) {
    %c0_i32 = arith.constant 0 : i32
    %c0_i32_0 = arith.constant 0 : i32
    %c0_i32_1 = arith.constant 0 : i32
    return %c0_i32, %c0_i32_0 : i32, i32
  }
  func.func @transform_7(%arg0: i32) -> (i32, i32) {
    %c0_i32 = arith.constant 0 : i32
    %c0_i32_0 = arith.constant 0 : i32
    %c0_i32_1 = arith.constant 0 : i32
    return %c0_i32, %c0_i32_0 : i32, i32
  }
  func.func @transform_8(%arg0: i32) -> (i32, i32) {
    %c0_i32 = arith.constant 0 : i32
    %c0_i32_0 = arith.constant 0 : i32
    %c0_i32_1 = arith.constant 0 : i32
    return %c0_i32, %c0_i32_0 : i32, i32
  }
  func.func @transform_9(%arg0: i32) -> (i32, i32) {
    %c0_i32 = arith.constant 0 : i32
    %c0_i32_0 = arith.constant 0 : i32
    %c0_i32_1 = arith.constant 0 : i32
    return %c0_i32, %c0_i32_0 : i32, i32
  }
  func.func @transform_10(%arg0: i32) -> (i32, i32) {
    %c0_i32 = arith.constant 0 : i32
    %c0_i32_0 = arith.constant 0 : i32
    %c0_i32_1 = arith.constant 0 : i32
    return %c0_i32, %c0_i32_0 : i32, i32
  }
  func.func @transform_11(%arg0: i32) -> (i32, i32) {
    %c0_i32 = arith.constant 0 : i32
    %c0_i32_0 = arith.constant 0 : i32
    %c0_i32_1 = arith.constant 0 : i32
    return %c0_i32, %c0_i32_0 : i32, i32
  }
  func.func @transform_12(%arg0: i32) -> (i32, i32) {
    %c0_i32 = arith.constant 0 : i32
    %c0_i32_0 = arith.constant 0 : i32
    %c0_i32_1 = arith.constant 0 : i32
    return %c0_i32, %c0_i32_0 : i32, i32
  }
  func.func @transform_13(%arg0: i32) -> (i32, i32) {
    %c0_i32 = arith.constant 0 : i32
    %c0_i32_0 = arith.constant 0 : i32
    return %arg0, %c0_i32 : i32, i32
  }
}

</mosaic_0001>

<llo_original>
// kernel: fwd.1
$region0: #{fwd.1}
  #allocation0 [shape = 'u32[]', space=smem, size = 0x4, offset = 0x4, fixed_abs, tag = 'smem constant byte address 0x4 - core index']
  #allocation1 [shape = 'u32[144,128]{1,0:T(1,128)}', space=vmem, size = 0x12000, scoped, tag = 'internal scratch']
  #allocation2 [shape = 'f32[128,128]{1,0:T(8,128)}', space=vmem, size = 0x10000, scoped, tag = 'scratch operand']
  %s0 = inlined_call_operand.vmem [shape: f32[16,72,256], index: 0, kind: input, shape index: {}]
  %s1 = inlined_call_operand.vmem [shape: bf16[2048,128], index: 1, kind: input, shape index: {}]
  %s2 = inlined_call_operand.vmem [shape: f32[1,128], index: 2, kind: input, shape index: {}]
  %s3 = inlined_call_operand.vmem [shape: bf16[512,128], index: 3, kind: input, shape index: {}]
  %s4 = inlined_call_operand.vmem [shape: f32[1,128], index: 4, kind: input, shape index: {}]
  %s5 = inlined_call_operand.vmem [shape: bf16[384,128], index: 5, kind: input, shape index: {}]
  %s6 = inlined_call_operand.vmem [shape: f32[1,128], index: 6, kind: input, shape index: {}]
  %s7 = inlined_call_operand.vmem [shape: bf16[384,128], index: 7, kind: input, shape index: {}]
  %s8 = inlined_call_operand.vmem [shape: f32[1,128], index: 8, kind: input, shape index: {}]
  %s9 = inlined_call_operand.vmem [shape: bf16[256,128], index: 9, kind: input, shape index: {}]
  %s10 = inlined_call_operand.vmem [shape: f32[1,128], index: 10, kind: input, shape index: {}]
  %s11 = inlined_call_operand.vmem [shape: bf16[128,128], index: 11, kind: input, shape index: {}]
  %s12 = inlined_call_operand.vmem [shape: f32[1,128], index: 12, kind: input, shape index: {}]
  %s13 = inlined_call_operand.vmem [shape: f32[16,128], index: 13, kind: output, shape index: {}]
  %s14 = sld [smem:[#allocation0]]
  $region85: #{fwd.1} parent=0
    _
  %s16 = ssub.s32 1, %s14
  %s17 = scalar_select 0, %s16, %s14
  loop: start=0, step=1, limit=4
  $region2: #{fwd.1} parent=0 // loop_pre_header
    _
  $region3: #{fwd.1} parent=0 // loop_header
    %s19 = sphi 0, %s23
    %p20 = scmp.ge.s32.totalorder %s19, 4
    %s29 = sphi 0, %s31
    %s32 = sphi 0, %s29
    %s33 = sphi 0, %s32
    %s49 = sphi 0, %s33
    %s53 = sphi 0, %s53
    %s55 = sphi 0, %s53
    %s56 = sphi 0, %s55
    %s70 = sphi 0, %s56
    %s74 = sphi 0, %s74
    %s76 = sphi 0, %s74
    %s77 = sphi 0, %s76
    %s91 = sphi 0, %s77
    %s95 = sphi 0, %s95
    %s97 = sphi 0, %s95
    %s98 = sphi 0, %s97
    %s112 = sphi 0, %s98
    %s116 = sphi 0, %s116
    %s118 = sphi 0, %s116
    %s119 = sphi 0, %s118
    %s133 = sphi 0, %s119
    %s137 = sphi 0, %s137
    %s139 = sphi 0, %s137
    %s140 = sphi 0, %s139
    %s154 = sphi 0, %s140
    %s158 = sphi 0, %s158
    %s160 = sphi 0, %s158
    %s161 = sphi 0, %s160
    %s175 = sphi 0, %s161
    %s179 = sphi 0, %s179
    %s181 = sphi 0, %s179
    %s182 = sphi 0, %s181
    %s196 = sphi 0, %s182
    %s200 = sphi 0, %s200
    %s202 = sphi 0, %s200
    %s203 = sphi 0, %s202
    %s217 = sphi 0, %s203
    %s221 = sphi 0, %s221
    %s223 = sphi 0, %s221
    %s224 = sphi 0, %s223
    %s238 = sphi 0, %s224
    %s242 = sphi 0, %s242
    %s244 = sphi 0, %s242
    %s245 = sphi 0, %s244
    %s259 = sphi 0, %s245
    %s263 = sphi 0, %s263
    %s265 = sphi 0, %s263
    %s266 = sphi 0, %s265
    %s280 = sphi 0, %s266
    %s284 = sphi 0, %s284
    %s286 = sphi 0, %s284
    %s287 = sphi 0, %s286
    %s301 = sphi 0, %s287
    %s307 = sphi 0, %s309
    %s310 = sphi 0, %s307
    %s311 = sphi 0, %s310
    %s327 = sphi 0, %s311
  $region4: #{fwd.1} parent=0 // loop_header_branch
    %22 = sbr.rel (%p20) target = $region8
  $region5: #{fwd.1} parent=0 // loop_body
    %s24 = ssub.s32 %s19, 1
    %s25 = ssub.s32 %s19, 2
    %s26 = sadd.s32 %s19, 1
    %s27 = ssub.s32 %s19, %s26
    %p28 = scmp.eq.s32.totalorder %s27, 0
    %s30 = sadd.s32 %s29, 1
    %s31 = scalar_select %p28, %s29, %s30
    %p34 = pneg %p28
    %p35 = scmp.eq.s32.totalorder %s19, 1
    %p36 = por %p34, %p35
    %p37 = scmp.ne.s32.totalorder %s29, %s32
    %p38 = scmp.eq.s32.totalorder %s19, 0
    %p39 = por %p37, %p38
    %p40 = scmp.ne.s32.totalorder %s29, %s32
    %p41 = scmp.eq.s32.totalorder %s24, 1
    %p42 = por %p40, %p41
    %p43 = scmp.ne.s32.totalorder %s32, %s33
    %p44 = scmp.eq.s32.totalorder %s24, 0
    %p45 = por %p43, %p44
    %p46 = scmp.ne.s32.totalorder %s32, %s33
    %p47 = scmp.eq.s32.totalorder %s25, 1
    %p48 = por %p46, %p47
    %p50 = scmp.ne.s32.totalorder %s33, %s49
    %p51 = scmp.eq.s32.totalorder %s25, 0
    %p52 = por %p50, %p51
    %s54 = sadd.s32 %s53, 1
    %p57 = scmp.eq.s32.totalorder %s19, 1
    %p58 = scmp.ne.s32.totalorder %s53, %s55
    %p59 = scmp.eq.s32.totalorder %s19, 0
    %p60 = por %p58, %p59
    %p61 = scmp.ne.s32.totalorder %s53, %s55
    %p62 = scmp.eq.s32.totalorder %s24, 1
    %p63 = por %p61, %p62
    %p64 = scmp.ne.s32.totalorder %s55, %s56
    %p65 = scmp.eq.s32.totalorder %s24, 0
    %p66 = por %p64, %p65
    %p67 = scmp.ne.s32.totalorder %s55, %s56
    %p68 = scmp.eq.s32.totalorder %s25, 1
    %p69 = por %p67, %p68
    %p71 = scmp.ne.s32.totalorder %s56, %s70
    %p72 = scmp.eq.s32.totalorder %s25, 0
    %p73 = por %p71, %p72
    %s75 = sadd.s32 %s74, 1
    %p78 = scmp.eq.s32.totalorder %s19, 1
    %p79 = scmp.ne.s32.totalorder %s74, %s76
    %p80 = scmp.eq.s32.totalorder %s19, 0
    %p81 = por %p79, %p80
    %p82 = scmp.ne.s32.totalorder %s74, %s76
    %p83 = scmp.eq.s32.totalorder %s24, 1
    %p84 = por %p82, %p83
    %p85 = scmp.ne.s32.totalorder %s76, %s77
    %p86 = scmp.eq.s32.totalorder %s24, 0
    %p87 = por %p85, %p86
    %p88 = scmp.ne.s32.totalorder %s76, %s77
    %p89 = scmp.eq.s32.totalorder %s25, 1
    %p90 = por %p88, %p89
    %p92 = scmp.ne.s32.totalorder %s77, %s91
    %p93 = scmp.eq.s32.totalorder %s25, 0
    %p94 = por %p92, %p93
    %s96 = sadd.s32 %s95, 1
    %p99 = scmp.eq.s32.totalorder %s19, 1
    %p100 = scmp.ne.s32.totalorder %s95, %s97
    %p101 = scmp.eq.s32.totalorder %s19, 0
    %p102 = por %p100, %p101
    %p103 = scmp.ne.s32.totalorder %s95, %s97
    %p104 = scmp.eq.s32.totalorder %s24, 1
    %p105 = por %p103, %p104
    %p106 = scmp.ne.s32.totalorder %s97, %s98
    %p107 = scmp.eq.s32.totalorder %s24, 0
    %p108 = por %p106, %p107
    %p109 = scmp.ne.s32.totalorder %s97, %s98
    %p110 = scmp.eq.s32.totalorder %s25, 1
    %p111 = por %p109, %p110
    %p113 = scmp.ne.s32.totalorder %s98, %s112
    %p114 = scmp.eq.s32.totalorder %s25, 0
    %p115 = por %p113, %p114
    %s117 = sadd.s32 %s116, 1
    %p120 = scmp.eq.s32.totalorder %s19, 1
    %p121 = scmp.ne.s32.totalorder %s116, %s118
    %p122 = scmp.eq.s32.totalorder %s19, 0
    %p123 = por %p121, %p122
    %p124 = scmp.ne.s32.totalorder %s116, %s118
    %p125 = scmp.eq.s32.totalorder %s24, 1
    %p126 = por %p124, %p125
    %p127 = scmp.ne.s32.totalorder %s118, %s119
    %p128 = scmp.eq.s32.totalorder %s24, 0
    %p129 = por %p127, %p128
    %p130 = scmp.ne.s32.totalorder %s118, %s119
    %p131 = scmp.eq.s32.totalorder %s25, 1
    %p132 = por %p130, %p131
    %p134 = scmp.ne.s32.totalorder %s119, %s133
    %p135 = scmp.eq.s32.totalorder %s25, 0
    %p136 = por %p134, %p135
    %s138 = sadd.s32 %s137, 1
    %p141 = scmp.eq.s32.totalorder %s19, 1
    %p142 = scmp.ne.s32.totalorder %s137, %s139
    %p143 = scmp.eq.s32.totalorder %s19, 0
    %p144 = por %p142, %p143
    %p145 = scmp.ne.s32.totalorder %s137, %s139
    %p146 = scmp.eq.s32.totalorder %s24, 1
    %p147 = por %p145, %p146
    %p148 = scmp.ne.s32.totalorder %s139, %s140
    %p149 = scmp.eq.s32.totalorder %s24, 0
    %p150 = por %p148, %p149
    %p151 = scmp.ne.s32.totalorder %s139, %s140
    %p152 = scmp.eq.s32.totalorder %s25, 1
    %p153 = por %p151, %p152
    %p155 = scmp.ne.s32.totalorder %s140, %s154
    %p156 = scmp.eq.s32.totalorder %s25, 0
    %p157 = por %p155, %p156
    %s159 = sadd.s32 %s158, 1
    %p162 = scmp.eq.s32.totalorder %s19, 1
    %p163 = scmp.ne.s32.totalorder %s158, %s160
    %p164 = scmp.eq.s32.totalorder %s19, 0
    %p165 = por %p163, %p164
    %p166 = scmp.ne.s32.totalorder %s158, %s160
    %p167 = scmp.eq.s32.totalorder %s24, 1
    %p168 = por %p166, %p167
    %p169 = scmp.ne.s32.totalorder %s160, %s161
    %p170 = scmp.eq.s32.totalorder %s24, 0
    %p171 = por %p169, %p170
    %p172 = scmp.ne.s32.totalorder %s160, %s161
    %p173 = scmp.eq.s32.totalorder %s25, 1
    %p174 = por %p172, %p173
    %p176 = scmp.ne.s32.totalorder %s161, %s175
    %p177 = scmp.eq.s32.totalorder %s25, 0
    %p178 = por %p176, %p177
    %s180 = sadd.s32 %s179, 1
    %p183 = scmp.eq.s32.totalorder %s19, 1
    %p184 = scmp.ne.s32.totalorder %s179, %s181
    %p185 = scmp.eq.s32.totalorder %s19, 0
    %p186 = por %p184, %p185
    %p187 = scmp.ne.s32.totalorder %s179, %s181
    %p188 = scmp.eq.s32.totalorder %s24, 1
    %p189 = por %p187, %p188
    %p190 = scmp.ne.s32.totalorder %s181, %s182
    %p191 = scmp.eq.s32.totalorder %s24, 0
    %p192 = por %p190, %p191
    %p193 = scmp.ne.s32.totalorder %s181, %s182
    %p194 = scmp.eq.s32.totalorder %s25, 1
    %p195 = por %p193, %p194
    %p197 = scmp.ne.s32.totalorder %s182, %s196
    %p198 = scmp.eq.s32.totalorder %s25, 0
    %p199 = por %p197, %p198
    %s201 = sadd.s32 %s200, 1
    %p204 = scmp.eq.s32.totalorder %s19, 1
    %p205 = scmp.ne.s32.totalorder %s200, %s202
    %p206 = scmp.eq.s32.totalorder %s19, 0
    %p207 = por %p205, %p206
    %p208 = scmp.ne.s32.totalorder %s200, %s202
    %p209 = scmp.eq.s32.totalorder %s24, 1
    %p210 = por %p208, %p209
    %p211 = scmp.ne.s32.totalorder %s202, %s203
    %p212 = scmp.eq.s32.totalorder %s24, 0
    %p213 = por %p211, %p212
    %p214 = scmp.ne.s32.totalorder %s202, %s203
    %p215 = scmp.eq.s32.totalorder %s25, 1
    %p216 = por %p214, %p215
    %p218 = scmp.ne.s32.totalorder %s203, %s217
    %p219 = scmp.eq.s32.totalorder %s25, 0
    %p220 = por %p218, %p219
    %s222 = sadd.s32 %s221, 1
    %p225 = scmp.eq.s32.totalorder %s19, 1
    %p226 = scmp.ne.s32.totalorder %s221, %s223
    %p227 = scmp.eq.s32.totalorder %s19, 0
    %p228 = por %p226, %p227
    %p229 = scmp.ne.s32.totalorder %s221, %s223
    %p230 = scmp.eq.s32.totalorder %s24, 1
    %p231 = por %p229, %p230
    %p232 = scmp.ne.s32.totalorder %s223, %s224
    %p233 = scmp.eq.s32.totalorder %s24, 0
    %p234 = por %p232, %p233
    %p235 = scmp.ne.s32.totalorder %s223, %s224
    %p236 = scmp.eq.s32.totalorder %s25, 1
    %p237 = por %p235, %p236
    %p239 = scmp.ne.s32.totalorder %s224, %s238
    %p240 = scmp.eq.s32.totalorder %s25, 0
    %p241 = por %p239, %p240
    %s243 = sadd.s32 %s242, 1
    %p246 = scmp.eq.s32.totalorder %s19, 1
    %p247 = scmp.ne.s32.totalorder %s242, %s244
    %p248 = scmp.eq.s32.totalorder %s19, 0
    %p249 = por %p247, %p248
    %p250 = scmp.ne.s32.totalorder %s242, %s244
    %p251 = scmp.eq.s32.totalorder %s24, 1
    %p252 = por %p250, %p251
    %p253 = scmp.ne.s32.totalorder %s244, %s245
    %p254 = scmp.eq.s32.totalorder %s24, 0
    %p255 = por %p253, %p254
    %p256 = scmp.ne.s32.totalorder %s244, %s245
    %p257 = scmp.eq.s32.totalorder %s25, 1
    %p258 = por %p256, %p257
    %p260 = scmp.ne.s32.totalorder %s245, %s259
    %p261 = scmp.eq.s32.totalorder %s25, 0
    %p262 = por %p260, %p261
    %s264 = sadd.s32 %s263, 1
    %p267 = scmp.eq.s32.totalorder %s19, 1
    %p268 = scmp.ne.s32.totalorder %s263, %s265
    %p269 = scmp.eq.s32.totalorder %s19, 0
    %p270 = por %p268, %p269
    %p271 = scmp.ne.s32.totalorder %s263, %s265
    %p272 = scmp.eq.s32.totalorder %s24, 1
    %p273 = por %p271, %p272
    %p274 = scmp.ne.s32.totalorder %s265, %s266
    %p275 = scmp.eq.s32.totalorder %s24, 0
    %p276 = por %p274, %p275
    %p277 = scmp.ne.s32.totalorder %s265, %s266
    %p278 = scmp.eq.s32.totalorder %s25, 1
    %p279 = por %p277, %p278
    %p281 = scmp.ne.s32.totalorder %s266, %s280
    %p282 = scmp.eq.s32.totalorder %s25, 0
    %p283 = por %p281, %p282
    %s285 = sadd.s32 %s284, 1
    %p288 = scmp.eq.s32.totalorder %s19, 1
    %p289 = scmp.ne.s32.totalorder %s284, %s286
    %p290 = scmp.eq.s32.totalorder %s19, 0
    %p291 = por %p289, %p290
    %p292 = scmp.ne.s32.totalorder %s284, %s286
    %p293 = scmp.eq.s32.totalorder %s24, 1
    %p294 = por %p292, %p293
    %p295 = scmp.ne.s32.totalorder %s286, %s287
    %p296 = scmp.eq.s32.totalorder %s24, 0
    %p297 = por %p295, %p296
    %p298 = scmp.ne.s32.totalorder %s286, %s287
    %p299 = scmp.eq.s32.totalorder %s25, 1
    %p300 = por %p298, %p299
    %p302 = scmp.ne.s32.totalorder %s287, %s301
    %p303 = scmp.eq.s32.totalorder %s25, 0
    %p304 = por %p302, %p303
    %s305 = ssub.s32 %s19, %s26
    %p306 = scmp.eq.s32.totalorder %s305, 0
    %s308 = sadd.s32 %s307, 1
    %s309 = scalar_select %p306, %s307, %s308
    %p312 = pneg %p306
    %p313 = scmp.eq.s32.totalorder %s19, 1
    %p314 = por %p312, %p313
    %p315 = scmp.ne.s32.totalorder %s307, %s310
    %p316 = scmp.eq.s32.totalorder %s19, 0
    %p317 = por %p315, %p316
    %p318 = scmp.ne.s32.totalorder %s307, %s310
    %p319 = scmp.eq.s32.totalorder %s24, 1
    %p320 = por %p318, %p319
    %p321 = scmp.ne.s32.totalorder %s310, %s311
    %p322 = scmp.eq.s32.totalorder %s24, 0
    %p323 = por %p321, %p322
    %p324 = scmp.ne.s32.totalorder %s310, %s311
    %p325 = scmp.eq.s32.totalorder %s25, 1
    %p326 = por %p324, %p325
    %p328 = scmp.ne.s32.totalorder %s311, %s327
    %p329 = scmp.eq.s32.totalorder %s25, 0
    %p330 = por %p328, %p329
    %p331 = scmp.le.s32.totalorder 1, %s19
    %p332 = scmp.lt.s32.totalorder %s19, 3
    %p333 = pnand %p331, %p332
    %p334 = pneg %p333
    // Predicated region
    $region9: #{fwd.1} parent=5 // pred_check
      _
    $region10: #{fwd.1} parent=5 // pred_check_branch
      %336 = sbr.rel (%p333) target = $region12
    $region11: #{fwd.1} parent=5 // pred_region
      %s337 = ssub.s32 %s19, 1
      // Predicated region
      $region13: #{fwd.1} parent=11 // pred_check
        %p338 = pneg %p66
      $region14: #{fwd.1} parent=11 // pred_check_branch
        %340 = sbr.rel (%p338) target = $region16
      $region15: #{fwd.1} parent=11 // pred_region
        _
      $region16: #{fwd.1} parent=11 // pred_fallthru
        _
      // Predicated region
      $region17: #{fwd.1} parent=11 // pred_check
        %p341 = pneg %p87
      $region18: #{fwd.1} parent=11 // pred_check_branch
        %343 = sbr.rel (%p341) target = $region20
      $region19: #{fwd.1} parent=11 // pred_region
        _
      $region20: #{fwd.1} parent=11 // pred_fallthru
        _
      // Predicated region
      $region21: #{fwd.1} parent=11 // pred_check
        %p344 = pneg %p108
      $region22: #{fwd.1} parent=11 // pred_check_branch
        %346 = sbr.rel (%p344) target = $region24
      $region23: #{fwd.1} parent=11 // pred_region
        _
      $region24: #{fwd.1} parent=11 // pred_fallthru
        _
      // Predicated region
      $region25: #{fwd.1} parent=11 // pred_check
        %p347 = pneg %p129
      $region26: #{fwd.1} parent=11 // pred_check_branch
        %349 = sbr.rel (%p347) target = $region28
      $region27: #{fwd.1} parent=11 // pred_region
        _
      $region28: #{fwd.1} parent=11 // pred_fallthru
        _
      // Predicated region
      $region29: #{fwd.1} parent=11 // pred_check
        %p350 = pneg %p150
      $region30: #{fwd.1} parent=11 // pred_check_branch
        %352 = sbr.rel (%p350) target = $region32
      $region31: #{fwd.1} parent=11 // pred_region
        _
      $region32: #{fwd.1} parent=11 // pred_fallthru
        _
      // Predicated region
      $region33: #{fwd.1} parent=11 // pred_check
        %p353 = pneg %p171
      $region34: #{fwd.1} parent=11 // pred_check_branch
        %355 = sbr.rel (%p353) target = $region36
      $region35: #{fwd.1} parent=11 // pred_region
        _
      $region36: #{fwd.1} parent=11 // pred_fallthru
        _
      // Predicated region
      $region37: #{fwd.1} parent=11 // pred_check
        %p356 = pneg %p192
      $region38: #{fwd.1} parent=11 // pred_check_branch
        %358 = sbr.rel (%p356) target = $region40
      $region39: #{fwd.1} parent=11 // pred_region
        _
      $region40: #{fwd.1} parent=11 // pred_fallthru
        _
      // Predicated region
      $region41: #{fwd.1} parent=11 // pred_check
        %p359 = pneg %p213
      $region42: #{fwd.1} parent=11 // pred_check_branch
        %361 = sbr.rel (%p359) target = $region44
      $region43: #{fwd.1} parent=11 // pred_region
        _
      $region44: #{fwd.1} parent=11 // pred_fallthru
        _
      // Predicated region
      $region45: #{fwd.1} parent=11 // pred_check
        %p362 = pneg %p234
      $region46: #{fwd.1} parent=11 // pred_check_branch
        %364 = sbr.rel (%p362) target = $region48
      $region47: #{fwd.1} parent=11 // pred_region
        _
      $region48: #{fwd.1} parent=11 // pred_fallthru
        _
      // Predicated region
      $region49: #{fwd.1} parent=11 // pred_check
        %p365 = pneg %p255
      $region50: #{fwd.1} parent=11 // pred_check_branch
        %367 = sbr.rel (%p365) target = $region52
      $region51: #{fwd.1} parent=11 // pred_region
        _
      $region52: #{fwd.1} parent=11 // pred_fallthru
        _
      // Predicated region
      $region53: #{fwd.1} parent=11 // pred_check
        %p368 = pneg %p276
      $region54: #{fwd.1} parent=11 // pred_check_branch
        %370 = sbr.rel (%p368) target = $region56
      $region55: #{fwd.1} parent=11 // pred_region
        _
      $region56: #{fwd.1} parent=11 // pred_fallthru
        _
      // Predicated region
      $region57: #{fwd.1} parent=11 // pred_check
        %p371 = pneg %p297
      $region58: #{fwd.1} parent=11 // pred_check_branch
        %373 = sbr.rel (%p371) target = $region60
      $region59: #{fwd.1} parent=11 // pred_region
        _
      $region60: #{fwd.1} parent=11 // pred_fallthru
        _
    $region12: #{fwd.1} parent=5 // pred_fallthru
      _
    %p374 = scmp.lt.s32.totalorder %s19, 2
    // Predicated region
    $region61: #{fwd.1} parent=5 // pred_check
      %p375 = pneg %p374
    $region62: #{fwd.1} parent=5 // pred_check_branch
      %377 = sbr.rel (%p375) target = $region64
    $region63: #{fwd.1} parent=5 // pred_region
      // Predicated region
      $region65: #{fwd.1} parent=63 // pred_check
        %p378 = pneg %p39
      $region66: #{fwd.1} parent=63 // pred_check_branch
        %380 = sbr.rel (%p378) target = $region68
      $region67: #{fwd.1} parent=63 // pred_region
        %s381 = smul.u32 8, %s19
        %p382 = scmp.lt.s32.totalorder %s381, 15
        %s383 = scalar_select %p382, %s381, 15
        %s384 = smul.addr %s383, 18
        %s385 = smul.addr %s384, 8
        %s386 = scalar_lea.vmem %s0, %s385
        %s387 = smul.u32 8, %s19
      $region68: #{fwd.1} parent=63 // pred_fallthru
        _
    $region64: #{fwd.1} parent=5 // pred_fallthru
      _
    %p388 = scmp.le.s32.totalorder 1, %s19
    %p389 = scmp.lt.s32.totalorder %s19, 3
    %p390 = pnand %p388, %p389
    %p391 = pneg %p390
    // Predicated region
    $region69: #{fwd.1} parent=5 // pred_check
      _
    $region70: #{fwd.1} parent=5 // pred_check_branch
      %393 = sbr.rel (%p390) target = $region72
    $region71: #{fwd.1} parent=5 // pred_region
      %s394 = ssub.s32 %s19, 1
      %s395 = smul.u32 8, %s24
      %p396 = scmp.lt.s32.totalorder %s395, 15
      %s397 = scalar_select %p396, %s395, 15
      %s398 = smul.addr %s397, 18
      %s399 = smul.addr %s398, 8
      %s400 = scalar_lea.vmem %s0, %s399
      %p401 = pneg %p45
      %p402 = pneg %p42
      %p403 = pneg %p66
      %p404 = pneg %p63
      %p405 = pneg %p87
      %p406 = pneg %p84
      %p407 = pneg %p108
      %p408 = pneg %p105
      %p409 = pneg %p129
      %p410 = pneg %p126
      %p411 = pneg %p150
      %p412 = pneg %p147
      %p413 = pneg %p171
      %p414 = pneg %p168
      %p415 = pneg %p192
      %p416 = pneg %p189
      %p417 = pneg %p213
      %p418 = pneg %p210
      %p419 = pneg %p234
      %p420 = pneg %p231
      %p421 = pneg %p255
      %p422 = pneg %p252
      %p423 = pneg %p276
      %p424 = pneg %p273
      %p425 = pneg %p297
      %p426 = pneg %p294
      %p427 = pneg %p323
      %p428 = pneg %p320
      %p429 = scmp.lt.s32.totalorder %s24, 1
      %s430 = scalar_select %p429, %s24, 1
      %s431 = smul.addr %s430, 8
      %s432 = scalar_lea.vmem %s13, %s431
      %s433 = smul.u32 8, %s24
      %p434 = scmp.lt.s32.totalorder %s433, 15
      %s435 = scalar_select %p434, %s433, 15
      %s436 = smul.addr %s435, 18
      %s437 = smul.addr %s436, 8
      %s438 = scalar_lea.vmem %s0, %s437
      %s439 = smul.u32 8, %s24
      %p440 = scmp.lt.s32.totalorder %s24, 1
      %s441 = scalar_select %p440, %s24, 1
      %s442 = smul.addr %s441, 8
      %s443 = scalar_lea.vmem %s13, %s442
      %v445 = vld [vmem:[%s438] sm:$0xff]
      %v446 = vld [vmem:[%s438 + $0x8] sm:$0xff]
      %v447 = vld [vmem:[%s438 + $0x10] sm:$0xff]
      %v448 = vld [vmem:[%s438 + $0x18] sm:$0xff]
      %v449 = vpack.c.bf16 %v447, %v445
      %v450 = vpack.c.bf16 %v448, %v446
      %v451 = vld [vmem:[%s438 + $0x20] sm:$0xff]
      %v452 = vld [vmem:[%s438 + $0x28] sm:$0xff]
      %v453 = vld [vmem:[%s438 + $0x30] sm:$0xff]
      %v454 = vld [vmem:[%s438 + $0x38] sm:$0xff]
      %v455 = vpack.c.bf16 %v453, %v451
      %v456 = vpack.c.bf16 %v454, %v452
      %v457 = vld [vmem:[%s438 + $0x40] sm:$0xff]
      %v458 = vld [vmem:[%s438 + $0x48] sm:$0xff]
      %v459 = vld [vmem:[%s438 + $0x50] sm:$0xff]
      %v460 = vld [vmem:[%s438 + $0x58] sm:$0xff]
      %v461 = vpack.c.bf16 %v459, %v457
      %v462 = vpack.c.bf16 %v460, %v458
      %v463 = vld [vmem:[%s438 + $0x60] sm:$0xff]
      %v464 = vld [vmem:[%s438 + $0x68] sm:$0xff]
      %v465 = vld [vmem:[%s438 + $0x70] sm:$0xff]
      %v466 = vld [vmem:[%s438 + $0x78] sm:$0xff]
      %v467 = vpack.c.bf16 %v465, %v463
      %v468 = vpack.c.bf16 %v466, %v464
      %v469 = vld [vmem:[%s438] sm:$0xfe]
      %v470 = vld [vmem:[%s438 + $0x8] sm:$0xfe]
      %v471 = vld [vmem:[%s438 + $0x20] sm:$0x1]
      %v472 = vld [vmem:[%s438 + $0x28] sm:$0x1]
      %v473 = vpack.c.bf16 %v447, %v469
      %v474 = vpack.c.bf16 %v448, %v470
      %v475 = vpack.c.bf16 %v471, %v471
      %v476 = vpack.c.bf16 %v472, %v472
      %v477 = vld [vmem:[%s438 + $0x20] sm:$0xfe]
      %v478 = vld [vmem:[%s438 + $0x28] sm:$0xfe]
      %v479 = vld [vmem:[%s438 + $0x40] sm:$0x1]
      %v480 = vld [vmem:[%s438 + $0x48] sm:$0x1]
      %v481 = vpack.c.bf16 %v453, %v477
      %v482 = vpack.c.bf16 %v454, %v478
      %v483 = vpack.c.bf16 %v479, %v479
      %v484 = vpack.c.bf16 %v480, %v480
      %v485 = vld [vmem:[%s438 + $0x40] sm:$0xfe]
      %v486 = vld [vmem:[%s438 + $0x48] sm:$0xfe]
      %v487 = vld [vmem:[%s438 + $0x60] sm:$0x1]
      %v488 = vld [vmem:[%s438 + $0x68] sm:$0x1]
      %v489 = vpack.c.bf16 %v459, %v485
      %v490 = vpack.c.bf16 %v460, %v486
      %v491 = vpack.c.bf16 %v487, %v487
      %v492 = vpack.c.bf16 %v488, %v488
      %v493 = vld [vmem:[%s438 + $0x60] sm:$0xfe]
      %v494 = vld [vmem:[%s438 + $0x68] sm:$0xfe]
      %v495 = vld [vmem:[%s438 + $0x80] sm:$0x1]
      %v496 = vld [vmem:[%s438 + $0x88] sm:$0x1]
      %v497 = vpack.c.bf16 %v465, %v493
      %v498 = vpack.c.bf16 %v466, %v494
      %v499 = vpack.c.bf16 %v495, %v495
      %v500 = vpack.c.bf16 %v496, %v496
      %vm501 = vsmask.f32 7424
      %v503 = vshrl.u32 %v473, 16
      %v505 = vshll.u32 %v473, 16
      %v507 = vrot.slane %v505, 1
      %v508 = vor.u32 %v503, %v507
      %v510 = vshll.u32 %v475, 16
      %v512 = vrot.slane %v510, 1
      %v513 = vsel %vm501, %v508, %v512
      %v515 = vshrl.u32 %v474, 16
      %v517 = vshll.u32 %v474, 16
      %v519 = vrot.slane %v517, 1
      %v520 = vor.u32 %v515, %v519
      %v522 = vshll.u32 %v476, 16
      %v524 = vrot.slane %v522, 1
      %v525 = vsel %vm501, %v520, %v524
      %v529 = vshrl.u32 %v481, 16
      %v531 = vshll.u32 %v481, 16
      %v533 = vrot.slane %v531, 1
      %v534 = vor.u32 %v529, %v533
      %v536 = vshll.u32 %v483, 16
      %v538 = vrot.slane %v536, 1
      %v539 = vsel %vm501, %v534, %v538
      %v541 = vshrl.u32 %v482, 16
      %v543 = vshll.u32 %v482, 16
      %v545 = vrot.slane %v543, 1
      %v546 = vor.u32 %v541, %v545
      %v548 = vshll.u32 %v484, 16
      %v550 = vrot.slane %v548, 1
      %v551 = vsel %vm501, %v546, %v550
      %v555 = vshrl.u32 %v489, 16
      %v557 = vshll.u32 %v489, 16
      %v559 = vrot.slane %v557, 1
      %v560 = vor.u32 %v555, %v559
      %v562 = vshll.u32 %v491, 16
      %v564 = vrot.slane %v562, 1
      %v565 = vsel %vm501, %v560, %v564
      %v567 = vshrl.u32 %v490, 16
      %v569 = vshll.u32 %v490, 16
      %v571 = vrot.slane %v569, 1
      %v572 = vor.u32 %v567, %v571
      %v574 = vshll.u32 %v492, 16
      %v576 = vrot.slane %v574, 1
      %v577 = vsel %vm501, %v572, %v576
      %v581 = vshrl.u32 %v497, 16
      %v583 = vshll.u32 %v497, 16
      %v585 = vrot.slane %v583, 1
      %v586 = vor.u32 %v581, %v585
      %v588 = vshll.u32 %v499, 16
      %v590 = vrot.slane %v588, 1
      %v591 = vsel %vm501, %v586, %v590
      %v593 = vshrl.u32 %v498, 16
      %v595 = vshll.u32 %v498, 16
      %v597 = vrot.slane %v595, 1
      %v598 = vor.u32 %v593, %v597
      %v600 = vshll.u32 %v500, 16
      %v602 = vrot.slane %v600, 1
      %v603 = vsel %vm501, %v598, %v602
      %s606 = scalar_lea.vmem %s438, 144
      %v607 = vld [vmem:[%s606] sm:$0xff]
      %v608 = vld [vmem:[%s606 + $0x8] sm:$0xff]
      %v609 = vld [vmem:[%s606 + $0x10] sm:$0xff]
      %v610 = vld [vmem:[%s606 + $0x18] sm:$0xff]
      %v611 = vpack.c.bf16 %v609, %v607
      %v612 = vpack.c.bf16 %v610, %v608
      %v613 = vld [vmem:[%s606 + $0x20] sm:$0xff]
      %v614 = vld [vmem:[%s606 + $0x28] sm:$0xff]
      %v615 = vld [vmem:[%s606 + $0x30] sm:$0xff]
      %v616 = vld [vmem:[%s606 + $0x38] sm:$0xff]
      %v617 = vpack.c.bf16 %v615, %v613
      %v618 = vpack.c.bf16 %v616, %v614
      %v619 = vld [vmem:[%s606 + $0x40] sm:$0xff]
      %v620 = vld [vmem:[%s606 + $0x48] sm:$0xff]
      %v621 = vld [vmem:[%s606 + $0x50] sm:$0xff]
      %v622 = vld [vmem:[%s606 + $0x58] sm:$0xff]
      %v623 = vpack.c.bf16 %v621, %v619
      %v624 = vpack.c.bf16 %v622, %v620
      %v625 = vld [vmem:[%s606 + $0x60] sm:$0xff]
      %v626 = vld [vmem:[%s606 + $0x68] sm:$0xff]
      %v627 = vld [vmem:[%s606 + $0x70] sm:$0xff]
      %v628 = vld [vmem:[%s606 + $0x78] sm:$0xff]
      %v629 = vpack.c.bf16 %v627, %v625
      %v630 = vpack.c.bf16 %v628, %v626
      %v631 = vld [vmem:[%s606] sm:$0xfe]
      %v632 = vld [vmem:[%s606 + $0x8] sm:$0xfe]
      %v633 = vld [vmem:[%s606 + $0x20] sm:$0x1]
      %v634 = vld [vmem:[%s606 + $0x28] sm:$0x1]
      %v635 = vpack.c.bf16 %v609, %v631
      %v636 = vpack.c.bf16 %v610, %v632
      %v637 = vpack.c.bf16 %v633, %v633
      %v638 = vpack.c.bf16 %v634, %v634
      %v639 = vld [vmem:[%s606 + $0x20] sm:$0xfe]
      %v640 = vld [vmem:[%s606 + $0x28] sm:$0xfe]
      %v641 = vld [vmem:[%s606 + $0x40] sm:$0x1]
      %v642 = vld [vmem:[%s606 + $0x48] sm:$0x1]
      %v643 = vpack.c.bf16 %v615, %v639
      %v644 = vpack.c.bf16 %v616, %v640
      %v645 = vpack.c.bf16 %v641, %v641
      %v646 = vpack.c.bf16 %v642, %v642
      %v647 = vld [vmem:[%s606 + $0x40] sm:$0xfe]
      %v648 = vld [vmem:[%s606 + $0x48] sm:$0xfe]
      %v649 = vld [vmem:[%s606 + $0x60] sm:$0x1]
      %v650 = vld [vmem:[%s606 + $0x68] sm:$0x1]
      %v651 = vpack.c.bf16 %v621, %v647
      %v652 = vpack.c.bf16 %v622, %v648
      %v653 = vpack.c.bf16 %v649, %v649
      %v654 = vpack.c.bf16 %v650, %v650
      %v655 = vld [vmem:[%s606 + $0x60] sm:$0xfe]
      %v656 = vld [vmem:[%s606 + $0x68] sm:$0xfe]
      %v657 = vld [vmem:[%s606 + $0x80] sm:$0x1]
      %v658 = vld [vmem:[%s606 + $0x88] sm:$0x1]
      %v659 = vpack.c.bf16 %v627, %v655
      %v660 = vpack.c.bf16 %v628, %v656
      %v661 = vpack.c.bf16 %v657, %v657
      %v662 = vpack.c.bf16 %v658, %v658
      %v664 = vshrl.u32 %v635, 16
      %v666 = vshll.u32 %v635, 16
      %v668 = vrot.slane %v666, 1
      %v669 = vor.u32 %v664, %v668
      %v671 = vshll.u32 %v637, 16
      %v673 = vrot.slane %v671, 1
      %v674 = vsel %vm501, %v669, %v673
      %v676 = vshrl.u32 %v636, 16
      %v678 = vshll.u32 %v636, 16
      %v680 = vrot.slane %v678, 1
      %v681 = vor.u32 %v676, %v680
      %v683 = vshll.u32 %v638, 16
      %v685 = vrot.slane %v683, 1
      %v686 = vsel %vm501, %v681, %v685
      %v690 = vshrl.u32 %v643, 16
      %v692 = vshll.u32 %v643, 16
      %v694 = vrot.slane %v692, 1
      %v695 = vor.u32 %v690, %v694
      %v697 = vshll.u32 %v645, 16
      %v699 = vrot.slane %v697, 1
      %v700 = vsel %vm501, %v695, %v699
      %v702 = vshrl.u32 %v644, 16
      %v704 = vshll.u32 %v644, 16
      %v706 = vrot.slane %v704, 1
      %v707 = vor.u32 %v702, %v706
      %v709 = vshll.u32 %v646, 16
      %v711 = vrot.slane %v709, 1
      %v712 = vsel %vm501, %v707, %v711
      %v716 = vshrl.u32 %v651, 16
      %v718 = vshll.u32 %v651, 16
      %v720 = vrot.slane %v718, 1
      %v721 = vor.u32 %v716, %v720
      %v723 = vshll.u32 %v653, 16
      %v725 = vrot.slane %v723, 1
      %v726 = vsel %vm501, %v721, %v725
      %v728 = vshrl.u32 %v652, 16
      %v730 = vshll.u32 %v652, 16
      %v732 = vrot.slane %v730, 1
      %v733 = vor.u32 %v728, %v732
      %v735 = vshll.u32 %v654, 16
      %v737 = vrot.slane %v735, 1
      %v738 = vsel %vm501, %v733, %v737
      %v742 = vshrl.u32 %v659, 16
      %v744 = vshll.u32 %v659, 16
      %v746 = vrot.slane %v744, 1
      %v747 = vor.u32 %v742, %v746
      %v749 = vshll.u32 %v661, 16
      %v751 = vrot.slane %v749, 1
      %v752 = vsel %vm501, %v747, %v751
      %v754 = vshrl.u32 %v660, 16
      %v756 = vshll.u32 %v660, 16
      %v758 = vrot.slane %v756, 1
      %v759 = vor.u32 %v754, %v758
      %v761 = vshll.u32 %v662, 16
      %v763 = vrot.slane %v761, 1
      %v764 = vsel %vm501, %v759, %v763
      %s767 = scalar_lea.vmem %s438, 288
      %v768 = vld [vmem:[%s767] sm:$0xff]
      %v769 = vld [vmem:[%s767 + $0x8] sm:$0xff]
      %v770 = vld [vmem:[%s767 + $0x10] sm:$0xff]
      %v771 = vld [vmem:[%s767 + $0x18] sm:$0xff]
      %v772 = vpack.c.bf16 %v770, %v768
      %v773 = vpack.c.bf16 %v771, %v769
      %v774 = vld [vmem:[%s767 + $0x20] sm:$0xff]
      %v775 = vld [vmem:[%s767 + $0x28] sm:$0xff]
      %v776 = vld [vmem:[%s767 + $0x30] sm:$0xff]
      %v777 = vld [vmem:[%s767 + $0x38] sm:$0xff]
      %v778 = vpack.c.bf16 %v776, %v774
      %v779 = vpack.c.bf16 %v777, %v775
      %v780 = vld [vmem:[%s767 + $0x40] sm:$0xff]
      %v781 = vld [vmem:[%s767 + $0x48] sm:$0xff]
      %v782 = vld [vmem:[%s767 + $0x50] sm:$0xff]
      %v783 = vld [vmem:[%s767 + $0x58] sm:$0xff]
      %v784 = vpack.c.bf16 %v782, %v780
      %v785 = vpack.c.bf16 %v783, %v781
      %v786 = vld [vmem:[%s767 + $0x60] sm:$0xff]
      %v787 = vld [vmem:[%s767 + $0x68] sm:$0xff]
      %v788 = vld [vmem:[%s767 + $0x70] sm:$0xff]
      %v789 = vld [vmem:[%s767 + $0x78] sm:$0xff]
      %v790 = vpack.c.bf16 %v788, %v786
      %v791 = vpack.c.bf16 %v789, %v787
      %v792 = vld [vmem:[%s767] sm:$0xfe]
      %v793 = vld [vmem:[%s767 + $0x8] sm:$0xfe]
      %v794 = vld [vmem:[%s767 + $0x20] sm:$0x1]
      %v795 = vld [vmem:[%s767 + $0x28] sm:$0x1]
      %v796 = vpack.c.bf16 %v770, %v792
      %v797 = vpack.c.bf16 %v771, %v793
      %v798 = vpack.c.bf16 %v794, %v794
      %v799 = vpack.c.bf16 %v795, %v795
      %v800 = vld [vmem:[%s767 + $0x20] sm:$0xfe]
      %v801 = vld [vmem:[%s767 + $0x28] sm:$0xfe]
      %v802 = vld [vmem:[%s767 + $0x40] sm:$0x1]
      %v803 = vld [vmem:[%s767 + $0x48] sm:$0x1]
      %v804 = vpack.c.bf16 %v776, %v800
      %v805 = vpack.c.bf16 %v777, %v801
      %v806 = vpack.c.bf16 %v802, %v802
      %v807 = vpack.c.bf16 %v803, %v803
      %v808 = vld [vmem:[%s767 + $0x40] sm:$0xfe]
      %v809 = vld [vmem:[%s767 + $0x48] sm:$0xfe]
      %v810 = vld [vmem:[%s767 + $0x60] sm:$0x1]
      %v811 = vld [vmem:[%s767 + $0x68] sm:$0x1]
      %v812 = vpack.c.bf16 %v782, %v808
      %v813 = vpack.c.bf16 %v783, %v809
      %v814 = vpack.c.bf16 %v810, %v810
      %v815 = vpack.c.bf16 %v811, %v811
      %v816 = vld [vmem:[%s767 + $0x60] sm:$0xfe]
      %v817 = vld [vmem:[%s767 + $0x68] sm:$0xfe]
      %v818 = vld [vmem:[%s767 + $0x80] sm:$0x1]
      %v819 = vld [vmem:[%s767 + $0x88] sm:$0x1]
      %v820 = vpack.c.bf16 %v788, %v816
      %v821 = vpack.c.bf16 %v789, %v817
      %v822 = vpack.c.bf16 %v818, %v818
      %v823 = vpack.c.bf16 %v819, %v819
      %v825 = vshrl.u32 %v796, 16
      %v827 = vshll.u32 %v796, 16
      %v829 = vrot.slane %v827, 1
      %v830 = vor.u32 %v825, %v829
      %v832 = vshll.u32 %v798, 16
      %v834 = vrot.slane %v832, 1
      %v835 = vsel %vm501, %v830, %v834
      %v837 = vshrl.u32 %v797, 16
      %v839 = vshll.u32 %v797, 16
      %v841 = vrot.slane %v839, 1
      %v842 = vor.u32 %v837, %v841
      %v844 = vshll.u32 %v799, 16
      %v846 = vrot.slane %v844, 1
      %v847 = vsel %vm501, %v842, %v846
      %v851 = vshrl.u32 %v804, 16
      %v853 = vshll.u32 %v804, 16
      %v855 = vrot.slane %v853, 1
      %v856 = vor.u32 %v851, %v855
      %v858 = vshll.u32 %v806, 16
      %v860 = vrot.slane %v858, 1
      %v861 = vsel %vm501, %v856, %v860
      %v863 = vshrl.u32 %v805, 16
      %v865 = vshll.u32 %v805, 16
      %v867 = vrot.slane %v865, 1
      %v868 = vor.u32 %v863, %v867
      %v870 = vshll.u32 %v807, 16
      %v872 = vrot.slane %v870, 1
      %v873 = vsel %vm501, %v868, %v872
      %v877 = vshrl.u32 %v812, 16
      %v879 = vshll.u32 %v812, 16
      %v881 = vrot.slane %v879, 1
      %v882 = vor.u32 %v877, %v881
      %v884 = vshll.u32 %v814, 16
      %v886 = vrot.slane %v884, 1
      %v887 = vsel %vm501, %v882, %v886
      %v889 = vshrl.u32 %v813, 16
      %v891 = vshll.u32 %v813, 16
      %v893 = vrot.slane %v891, 1
      %v894 = vor.u32 %v889, %v893
      %v896 = vshll.u32 %v815, 16
      %v898 = vrot.slane %v896, 1
      %v899 = vsel %vm501, %v894, %v898
      %v903 = vshrl.u32 %v820, 16
      %v905 = vshll.u32 %v820, 16
      %v907 = vrot.slane %v905, 1
      %v908 = vor.u32 %v903, %v907
      %v910 = vshll.u32 %v822, 16
      %v912 = vrot.slane %v910, 1
      %v913 = vsel %vm501, %v908, %v912
      %v915 = vshrl.u32 %v821, 16
      %v917 = vshll.u32 %v821, 16
      %v919 = vrot.slane %v917, 1
      %v920 = vor.u32 %v915, %v919
      %v922 = vshll.u32 %v823, 16
      %v924 = vrot.slane %v922, 1
      %v925 = vsel %vm501, %v920, %v924
      %s928 = scalar_lea.vmem %s438, 432
      %v929 = vld [vmem:[%s928] sm:$0xff]
      %v930 = vld [vmem:[%s928 + $0x8] sm:$0xff]
      %v931 = vld [vmem:[%s928 + $0x10] sm:$0xff]
      %v932 = vld [vmem:[%s928 + $0x18] sm:$0xff]
      %v933 = vpack.c.bf16 %v931, %v929
      %v934 = vpack.c.bf16 %v932, %v930
      %v935 = vld [vmem:[%s928 + $0x20] sm:$0xff]
      %v936 = vld [vmem:[%s928 + $0x28] sm:$0xff]
      %v937 = vld [vmem:[%s928 + $0x30] sm:$0xff]
      %v938 = vld [vmem:[%s928 + $0x38] sm:$0xff]
      %v939 = vpack.c.bf16 %v937, %v935
      %v940 = vpack.c.bf16 %v938, %v936
      %v941 = vld [vmem:[%s928 + $0x40] sm:$0xff]
      %v942 = vld [vmem:[%s928 + $0x48] sm:$0xff]
      %v943 = vld [vmem:[%s928 + $0x50] sm:$0xff]
      %v944 = vld [vmem:[%s928 + $0x58] sm:$0xff]
      %v945 = vpack.c.bf16 %v943, %v941
      %v946 = vpack.c.bf16 %v944, %v942
      %v947 = vld [vmem:[%s928 + $0x60] sm:$0xff]
      %v948 = vld [vmem:[%s928 + $0x68] sm:$0xff]
      %v949 = vld [vmem:[%s928 + $0x70] sm:$0xff]
      %v950 = vld [vmem:[%s928 + $0x78] sm:$0xff]
      %v951 = vpack.c.bf16 %v949, %v947
      %v952 = vpack.c.bf16 %v950, %v948
      %v953 = vld [vmem:[%s928] sm:$0xfe]
      %v954 = vld [vmem:[%s928 + $0x8] sm:$0xfe]
      %v955 = vld [vmem:[%s928 + $0x20] sm:$0x1]
      %v956 = vld [vmem:[%s928 + $0x28] sm:$0x1]
      %v957 = vpack.c.bf16 %v931, %v953
      %v958 = vpack.c.bf16 %v932, %v954
      %v959 = vpack.c.bf16 %v955, %v955
      %v960 = vpack.c.bf16 %v956, %v956
      %v961 = vld [vmem:[%s928 + $0x20] sm:$0xfe]
      %v962 = vld [vmem:[%s928 + $0x28] sm:$0xfe]
      %v963 = vld [vmem:[%s928 + $0x40] sm:$0x1]
      %v964 = vld [vmem:[%s928 + $0x48] sm:$0x1]
      %v965 = vpack.c.bf16 %v937, %v961
      %v966 = vpack.c.bf16 %v938, %v962
      %v967 = vpack.c.bf16 %v963, %v963
      %v968 = vpack.c.bf16 %v964, %v964
      %v969 = vld [vmem:[%s928 + $0x40] sm:$0xfe]
      %v970 = vld [vmem:[%s928 + $0x48] sm:$0xfe]
      %v971 = vld [vmem:[%s928 + $0x60] sm:$0x1]
      %v972 = vld [vmem:[%s928 + $0x68] sm:$0x1]
      %v973 = vpack.c.bf16 %v943, %v969
      %v974 = vpack.c.bf16 %v944, %v970
      %v975 = vpack.c.bf16 %v971, %v971
      %v976 = vpack.c.bf16 %v972, %v972
      %v977 = vld [vmem:[%s928 + $0x60] sm:$0xfe]
      %v978 = vld [vmem:[%s928 + $0x68] sm:$0xfe]
      %v979 = vld [vmem:[%s928 + $0x80] sm:$0x1]
      %v980 = vld [vmem:[%s928 + $0x88] sm:$0x1]
      %v981 = vpack.c.bf16 %v949, %v977
      %v982 = vpack.c.bf16 %v950, %v978
      %v983 = vpack.c.bf16 %v979, %v979
      %v984 = vpack.c.bf16 %v980, %v980
      %v986 = vshrl.u32 %v957, 16
      %v988 = vshll.u32 %v957, 16
      %v990 = vrot.slane %v988, 1
      %v991 = vor.u32 %v986, %v990
      %v993 = vshll.u32 %v959, 16
      %v995 = vrot.slane %v993, 1
      %v996 = vsel %vm501, %v991, %v995
      %v998 = vshrl.u32 %v958, 16
      %v1000 = vshll.u32 %v958, 16
      %v1002 = vrot.slane %v1000, 1
      %v1003 = vor.u32 %v998, %v1002
      %v1005 = vshll.u32 %v960, 16
      %v1007 = vrot.slane %v1005, 1
      %v1008 = vsel %vm501, %v1003, %v1007
      %v1012 = vshrl.u32 %v965, 16
      %v1014 = vshll.u32 %v965, 16
      %v1016 = vrot.slane %v1014, 1
      %v1017 = vor.u32 %v1012, %v1016
      %v1019 = vshll.u32 %v967, 16
      %v1021 = vrot.slane %v1019, 1
      %v1022 = vsel %vm501, %v1017, %v1021
      %v1024 = vshrl.u32 %v966, 16
      %v1026 = vshll.u32 %v966, 16
      %v1028 = vrot.slane %v1026, 1
      %v1029 = vor.u32 %v1024, %v1028
      %v1031 = vshll.u32 %v968, 16
      %v1033 = vrot.slane %v1031, 1
      %v1034 = vsel %vm501, %v1029, %v1033
      %v1038 = vshrl.u32 %v973, 16
      %v1040 = vshll.u32 %v973, 16
      %v1042 = vrot.slane %v1040, 1
      %v1043 = vor.u32 %v1038, %v1042
      %v1045 = vshll.u32 %v975, 16
      %v1047 = vrot.slane %v1045, 1
      %v1048 = vsel %vm501, %v1043, %v1047
      %v1050 = vshrl.u32 %v974, 16
      %v1052 = vshll.u32 %v974, 16
      %v1054 = vrot.slane %v1052, 1
      %v1055 = vor.u32 %v1050, %v1054
      %v1057 = vshll.u32 %v976, 16
      %v1059 = vrot.slane %v1057, 1
      %v1060 = vsel %vm501, %v1055, %v1059
      %v1064 = vshrl.u32 %v981, 16
      %v1066 = vshll.u32 %v981, 16
      %v1068 = vrot.slane %v1066, 1
      %v1069 = vor.u32 %v1064, %v1068
      %v1071 = vshll.u32 %v983, 16
      %v1073 = vrot.slane %v1071, 1
      %v1074 = vsel %vm501, %v1069, %v1073
      %v1076 = vshrl.u32 %v982, 16
      %v1078 = vshll.u32 %v982, 16
      %v1080 = vrot.slane %v1078, 1
      %v1081 = vor.u32 %v1076, %v1080
      %v1083 = vshll.u32 %v984, 16
      %v1085 = vrot.slane %v1083, 1
      %v1086 = vsel %vm501, %v1081, %v1085
      %s1089 = scalar_lea.vmem %s438, 576
      %v1090 = vld [vmem:[%s1089] sm:$0xff]
      %v1091 = vld [vmem:[%s1089 + $0x8] sm:$0xff]
      %v1092 = vld [vmem:[%s1089 + $0x10] sm:$0xff]
      %v1093 = vld [vmem:[%s1089 + $0x18] sm:$0xff]
      %v1094 = vpack.c.bf16 %v1092, %v1090
      %v1095 = vpack.c.bf16 %v1093, %v1091
      %v1096 = vld [vmem:[%s1089 + $0x20] sm:$0xff]
      %v1097 = vld [vmem:[%s1089 + $0x28] sm:$0xff]
      %v1098 = vld [vmem:[%s1089 + $0x30] sm:$0xff]
      %v1099 = vld [vmem:[%s1089 + $0x38] sm:$0xff]
      %v1100 = vpack.c.bf16 %v1098, %v1096
      %v1101 = vpack.c.bf16 %v1099, %v1097
      %v1102 = vld [vmem:[%s1089 + $0x40] sm:$0xff]
      %v1103 = vld [vmem:[%s1089 + $0x48] sm:$0xff]
      %v1104 = vld [vmem:[%s1089 + $0x50] sm:$0xff]
      %v1105 = vld [vmem:[%s1089 + $0x58] sm:$0xff]
      %v1106 = vpack.c.bf16 %v1104, %v1102
      %v1107 = vpack.c.bf16 %v1105, %v1103
      %v1108 = vld [vmem:[%s1089 + $0x60] sm:$0xff]
      %v1109 = vld [vmem:[%s1089 + $0x68] sm:$0xff]
      %v1110 = vld [vmem:[%s1089 + $0x70] sm:$0xff]
      %v1111 = vld [vmem:[%s1089 + $0x78] sm:$0xff]
      %v1112 = vpack.c.bf16 %v1110, %v1108
      %v1113 = vpack.c.bf16 %v1111, %v1109
      %v1114 = vld [vmem:[%s1089] sm:$0xfe]
      %v1115 = vld [vmem:[%s1089 + $0x8] sm:$0xfe]
      %v1116 = vld [vmem:[%s1089 + $0x20] sm:$0x1]
      %v1117 = vld [vmem:[%s1089 + $0x28] sm:$0x1]
      %v1118 = vpack.c.bf16 %v1092, %v1114
      %v1119 = vpack.c.bf16 %v1093, %v1115
      %v1120 = vpack.c.bf16 %v1116, %v1116
      %v1121 = vpack.c.bf16 %v1117, %v1117
      %v1122 = vld [vmem:[%s1089 + $0x20] sm:$0xfe]
      %v1123 = vld [vmem:[%s1089 + $0x28] sm:$0xfe]
      %v1124 = vld [vmem:[%s1089 + $0x40] sm:$0x1]
      %v1125 = vld [vmem:[%s1089 + $0x48] sm:$0x1]
      %v1126 = vpack.c.bf16 %v1098, %v1122
      %v1127 = vpack.c.bf16 %v1099, %v1123
      %v1128 = vpack.c.bf16 %v1124, %v1124
      %v1129 = vpack.c.bf16 %v1125, %v1125
      %v1130 = vld [vmem:[%s1089 + $0x40] sm:$0xfe]
      %v1131 = vld [vmem:[%s1089 + $0x48] sm:$0xfe]
      %v1132 = vld [vmem:[%s1089 + $0x60] sm:$0x1]
      %v1133 = vld [vmem:[%s1089 + $0x68] sm:$0x1]
      %v1134 = vpack.c.bf16 %v1104, %v1130
      %v1135 = vpack.c.bf16 %v1105, %v1131
      %v1136 = vpack.c.bf16 %v1132, %v1132
      %v1137 = vpack.c.bf16 %v1133, %v1133
      %v1138 = vld [vmem:[%s1089 + $0x60] sm:$0xfe]
      %v1139 = vld [vmem:[%s1089 + $0x68] sm:$0xfe]
      %v1140 = vld [vmem:[%s1089 + $0x80] sm:$0x1]
      %v1141 = vld [vmem:[%s1089 + $0x88] sm:$0x1]
      %v1142 = vpack.c.bf16 %v1110, %v1138
      %v1143 = vpack.c.bf16 %v1111, %v1139
      %v1144 = vpack.c.bf16 %v1140, %v1140
      %v1145 = vpack.c.bf16 %v1141, %v1141
      %v1147 = vshrl.u32 %v1118, 16
      %v1149 = vshll.u32 %v1118, 16
      %v1151 = vrot.slane %v1149, 1
      %v1152 = vor.u32 %v1147, %v1151
      %v1154 = vshll.u32 %v1120, 16
      %v1156 = vrot.slane %v1154, 1
      %v1157 = vsel %vm501, %v1152, %v1156
      %v1159 = vshrl.u32 %v1119, 16
      %v1161 = vshll.u32 %v1119, 16
      %v1163 = vrot.slane %v1161, 1
      %v1164 = vor.u32 %v1159, %v1163
      %v1166 = vshll.u32 %v1121, 16
      %v1168 = vrot.slane %v1166, 1
      %v1169 = vsel %vm501, %v1164, %v1168
      %v1173 = vshrl.u32 %v1126, 16
      %v1175 = vshll.u32 %v1126, 16
      %v1177 = vrot.slane %v1175, 1
      %v1178 = vor.u32 %v1173, %v1177
      %v1180 = vshll.u32 %v1128, 16
      %v1182 = vrot.slane %v1180, 1
      %v1183 = vsel %vm501, %v1178, %v1182
      %v1185 = vshrl.u32 %v1127, 16
      %v1187 = vshll.u32 %v1127, 16
      %v1189 = vrot.slane %v1187, 1
      %v1190 = vor.u32 %v1185, %v1189
      %v1192 = vshll.u32 %v1129, 16
      %v1194 = vrot.slane %v1192, 1
      %v1195 = vsel %vm501, %v1190, %v1194
      %v1199 = vshrl.u32 %v1134, 16
      %v1201 = vshll.u32 %v1134, 16
      %v1203 = vrot.slane %v1201, 1
      %v1204 = vor.u32 %v1199, %v1203
      %v1206 = vshll.u32 %v1136, 16
      %v1208 = vrot.slane %v1206, 1
      %v1209 = vsel %vm501, %v1204, %v1208
      %v1211 = vshrl.u32 %v1135, 16
      %v1213 = vshll.u32 %v1135, 16
      %v1215 = vrot.slane %v1213, 1
      %v1216 = vor.u32 %v1211, %v1215
      %v1218 = vshll.u32 %v1137, 16
      %v1220 = vrot.slane %v1218, 1
      %v1221 = vsel %vm501, %v1216, %v1220
      %v1225 = vshrl.u32 %v1142, 16
      %v1227 = vshll.u32 %v1142, 16
      %v1229 = vrot.slane %v1227, 1
      %v1230 = vor.u32 %v1225, %v1229
      %v1232 = vshll.u32 %v1144, 16
      %v1234 = vrot.slane %v1232, 1
      %v1235 = vsel %vm501, %v1230, %v1234
      %v1237 = vshrl.u32 %v1143, 16
      %v1239 = vshll.u32 %v1143, 16
      %v1241 = vrot.slane %v1239, 1
      %v1242 = vor.u32 %v1237, %v1241
      %v1244 = vshll.u32 %v1145, 16
      %v1246 = vrot.slane %v1244, 1
      %v1247 = vsel %vm501, %v1242, %v1246
      %s1250 = scalar_lea.vmem %s438, 720
      %v1251 = vld [vmem:[%s1250] sm:$0xff]
      %v1252 = vld [vmem:[%s1250 + $0x8] sm:$0xff]
      %v1253 = vld [vmem:[%s1250 + $0x10] sm:$0xff]
      %v1254 = vld [vmem:[%s1250 + $0x18] sm:$0xff]
      %v1255 = vpack.c.bf16 %v1253, %v1251
      %v1256 = vpack.c.bf16 %v1254, %v1252
      %v1257 = vld [vmem:[%s1250 + $0x20] sm:$0xff]
      %v1258 = vld [vmem:[%s1250 + $0x28] sm:$0xff]
      %v1259 = vld [vmem:[%s1250 + $0x30] sm:$0xff]
      %v1260 = vld [vmem:[%s1250 + $0x38] sm:$0xff]
      %v1261 = vpack.c.bf16 %v1259, %v1257
      %v1262 = vpack.c.bf16 %v1260, %v1258
      %v1263 = vld [vmem:[%s1250 + $0x40] sm:$0xff]
      %v1264 = vld [vmem:[%s1250 + $0x48] sm:$0xff]
      %v1265 = vld [vmem:[%s1250 + $0x50] sm:$0xff]
      %v1266 = vld [vmem:[%s1250 + $0x58] sm:$0xff]
      %v1267 = vpack.c.bf16 %v1265, %v1263
      %v1268 = vpack.c.bf16 %v1266, %v1264
      %v1269 = vld [vmem:[%s1250 + $0x60] sm:$0xff]
      %v1270 = vld [vmem:[%s1250 + $0x68] sm:$0xff]
      %v1271 = vld [vmem:[%s1250 + $0x70] sm:$0xff]
      %v1272 = vld [vmem:[%s1250 + $0x78] sm:$0xff]
      %v1273 = vpack.c.bf16 %v1271, %v1269
      %v1274 = vpack.c.bf16 %v1272, %v1270
      %v1275 = vld [vmem:[%s1250] sm:$0xfe]
      %v1276 = vld [vmem:[%s1250 + $0x8] sm:$0xfe]
      %v1277 = vld [vmem:[%s1250 + $0x20] sm:$0x1]
      %v1278 = vld [vmem:[%s1250 + $0x28] sm:$0x1]
      %v1279 = vpack.c.bf16 %v1253, %v1275
      %v1280 = vpack.c.bf16 %v1254, %v1276
      %v1281 = vpack.c.bf16 %v1277, %v1277
      %v1282 = vpack.c.bf16 %v1278, %v1278
      %v1283 = vld [vmem:[%s1250 + $0x20] sm:$0xfe]
      %v1284 = vld [vmem:[%s1250 + $0x28] sm:$0xfe]
      %v1285 = vld [vmem:[%s1250 + $0x40] sm:$0x1]
      %v1286 = vld [vmem:[%s1250 + $0x48] sm:$0x1]
      %v1287 = vpack.c.bf16 %v1259, %v1283
      %v1288 = vpack.c.bf16 %v1260, %v1284
      %v1289 = vpack.c.bf16 %v1285, %v1285
      %v1290 = vpack.c.bf16 %v1286, %v1286
      %v1291 = vld [vmem:[%s1250 + $0x40] sm:$0xfe]
      %v1292 = vld [vmem:[%s1250 + $0x48] sm:$0xfe]
      %v1293 = vld [vmem:[%s1250 + $0x60] sm:$0x1]
      %v1294 = vld [vmem:[%s1250 + $0x68] sm:$0x1]
      %v1295 = vpack.c.bf16 %v1265, %v1291
      %v1296 = vpack.c.bf16 %v1266, %v1292
      %v1297 = vpack.c.bf16 %v1293, %v1293
      %v1298 = vpack.c.bf16 %v1294, %v1294
      %v1299 = vld [vmem:[%s1250 + $0x60] sm:$0xfe]
      %v1300 = vld [vmem:[%s1250 + $0x68] sm:$0xfe]
      %v1301 = vld [vmem:[%s1250 + $0x80] sm:$0x1]
      %v1302 = vld [vmem:[%s1250 + $0x88] sm:$0x1]
      %v1303 = vpack.c.bf16 %v1271, %v1299
      %v1304 = vpack.c.bf16 %v1272, %v1300
      %v1305 = vpack.c.bf16 %v1301, %v1301
      %v1306 = vpack.c.bf16 %v1302, %v1302
      %v1308 = vshrl.u32 %v1279, 16
      %v1310 = vshll.u32 %v1279, 16
      %v1312 = vrot.slane %v1310, 1
      %v1313 = vor.u32 %v1308, %v1312
      %v1315 = vshll.u32 %v1281, 16
      %v1317 = vrot.slane %v1315, 1
      %v1318 = vsel %vm501, %v1313, %v1317
      %v1320 = vshrl.u32 %v1280, 16
      %v1322 = vshll.u32 %v1280, 16
      %v1324 = vrot.slane %v1322, 1
      %v1325 = vor.u32 %v1320, %v1324
      %v1327 = vshll.u32 %v1282, 16
      %v1329 = vrot.slane %v1327, 1
      %v1330 = vsel %vm501, %v1325, %v1329
      %v1334 = vshrl.u32 %v1287, 16
      %v1336 = vshll.u32 %v1287, 16
      %v1338 = vrot.slane %v1336, 1
      %v1339 = vor.u32 %v1334, %v1338
      %v1341 = vshll.u32 %v1289, 16
      %v1343 = vrot.slane %v1341, 1
      %v1344 = vsel %vm501, %v1339, %v1343
      %v1346 = vshrl.u32 %v1288, 16
      %v1348 = vshll.u32 %v1288, 16
      %v1350 = vrot.slane %v1348, 1
      %v1351 = vor.u32 %v1346, %v1350
      %v1353 = vshll.u32 %v1290, 16
      %v1355 = vrot.slane %v1353, 1
      %v1356 = vsel %vm501, %v1351, %v1355
      %v1360 = vshrl.u32 %v1295, 16
      %v1362 = vshll.u32 %v1295, 16
      %v1364 = vrot.slane %v1362, 1
      %v1365 = vor.u32 %v1360, %v1364
      %v1367 = vshll.u32 %v1297, 16
      %v1369 = vrot.slane %v1367, 1
      %v1370 = vsel %vm501, %v1365, %v1369
      %v1372 = vshrl.u32 %v1296, 16
      %v1374 = vshll.u32 %v1296, 16
      %v1376 = vrot.slane %v1374, 1
      %v1377 = vor.u32 %v1372, %v1376
      %v1379 = vshll.u32 %v1298, 16
      %v1381 = vrot.slane %v1379, 1
      %v1382 = vsel %vm501, %v1377, %v1381
      %v1386 = vshrl.u32 %v1303, 16
      %v1388 = vshll.u32 %v1303, 16
      %v1390 = vrot.slane %v1388, 1
      %v1391 = vor.u32 %v1386, %v1390
      %v1393 = vshll.u32 %v1305, 16
      %v1395 = vrot.slane %v1393, 1
      %v1396 = vsel %vm501, %v1391, %v1395
      %v1398 = vshrl.u32 %v1304, 16
      %v1400 = vshll.u32 %v1304, 16
      %v1402 = vrot.slane %v1400, 1
      %v1403 = vor.u32 %v1398, %v1402
      %v1405 = vshll.u32 %v1306, 16
      %v1407 = vrot.slane %v1405, 1
      %v1408 = vsel %vm501, %v1403, %v1407
      %s1411 = scalar_lea.vmem %s438, 864
      %v1412 = vld [vmem:[%s1411] sm:$0xff]
      %v1413 = vld [vmem:[%s1411 + $0x8] sm:$0xff]
      %v1414 = vld [vmem:[%s1411 + $0x10] sm:$0xff]
      %v1415 = vld [vmem:[%s1411 + $0x18] sm:$0xff]
      %v1416 = vpack.c.bf16 %v1414, %v1412
      %v1417 = vpack.c.bf16 %v1415, %v1413
      %v1418 = vld [vmem:[%s1411 + $0x20] sm:$0xff]
      %v1419 = vld [vmem:[%s1411 + $0x28] sm:$0xff]
      %v1420 = vld [vmem:[%s1411 + $0x30] sm:$0xff]
      %v1421 = vld [vmem:[%s1411 + $0x38] sm:$0xff]
      %v1422 = vpack.c.bf16 %v1420, %v1418
      %v1423 = vpack.c.bf16 %v1421, %v1419
      %v1424 = vld [vmem:[%s1411 + $0x40] sm:$0xff]
      %v1425 = vld [vmem:[%s1411 + $0x48] sm:$0xff]
      %v1426 = vld [vmem:[%s1411 + $0x50] sm:$0xff]
      %v1427 = vld [vmem:[%s1411 + $0x58] sm:$0xff]
      %v1428 = vpack.c.bf16 %v1426, %v1424
      %v1429 = vpack.c.bf16 %v1427, %v1425
      %v1430 = vld [vmem:[%s1411 + $0x60] sm:$0xff]
      %v1431 = vld [vmem:[%s1411 + $0x68] sm:$0xff]
      %v1432 = vld [vmem:[%s1411 + $0x70] sm:$0xff]
      %v1433 = vld [vmem:[%s1411 + $0x78] sm:$0xff]
      %v1434 = vpack.c.bf16 %v1432, %v1430
      %v1435 = vpack.c.bf16 %v1433, %v1431
      %v1436 = vld [vmem:[%s1411] sm:$0xfe]
      %v1437 = vld [vmem:[%s1411 + $0x8] sm:$0xfe]
      %v1438 = vld [vmem:[%s1411 + $0x20] sm:$0x1]
      %v1439 = vld [vmem:[%s1411 + $0x28] sm:$0x1]
      %v1440 = vpack.c.bf16 %v1414, %v1436
      %v1441 = vpack.c.bf16 %v1415, %v1437
      %v1442 = vpack.c.bf16 %v1438, %v1438
      %v1443 = vpack.c.bf16 %v1439, %v1439
      %v1444 = vld [vmem:[%s1411 + $0x20] sm:$0xfe]
      %v1445 = vld [vmem:[%s1411 + $0x28] sm:$0xfe]
      %v1446 = vld [vmem:[%s1411 + $0x40] sm:$0x1]
      %v1447 = vld [vmem:[%s1411 + $0x48] sm:$0x1]
      %v1448 = vpack.c.bf16 %v1420, %v1444
      %v1449 = vpack.c.bf16 %v1421, %v1445
      %v1450 = vpack.c.bf16 %v1446, %v1446
      %v1451 = vpack.c.bf16 %v1447, %v1447
      %v1452 = vld [vmem:[%s1411 + $0x40] sm:$0xfe]
      %v1453 = vld [vmem:[%s1411 + $0x48] sm:$0xfe]
      %v1454 = vld [vmem:[%s1411 + $0x60] sm:$0x1]
      %v1455 = vld [vmem:[%s1411 + $0x68] sm:$0x1]
      %v1456 = vpack.c.bf16 %v1426, %v1452
      %v1457 = vpack.c.bf16 %v1427, %v1453
      %v1458 = vpack.c.bf16 %v1454, %v1454
      %v1459 = vpack.c.bf16 %v1455, %v1455
      %v1460 = vld [vmem:[%s1411 + $0x60] sm:$0xfe]
      %v1461 = vld [vmem:[%s1411 + $0x68] sm:$0xfe]
      %v1462 = vld [vmem:[%s1411 + $0x80] sm:$0x1]
      %v1463 = vld [vmem:[%s1411 + $0x88] sm:$0x1]
      %v1464 = vpack.c.bf16 %v1432, %v1460
      %v1465 = vpack.c.bf16 %v1433, %v1461
      %v1466 = vpack.c.bf16 %v1462, %v1462
      %v1467 = vpack.c.bf16 %v1463, %v1463
      %v1469 = vshrl.u32 %v1440, 16
      %v1471 = vshll.u32 %v1440, 16
      %v1473 = vrot.slane %v1471, 1
      %v1474 = vor.u32 %v1469, %v1473
      %v1476 = vshll.u32 %v1442, 16
      %v1478 = vrot.slane %v1476, 1
      %v1479 = vsel %vm501, %v1474, %v1478
      %v1481 = vshrl.u32 %v1441, 16
      %v1483 = vshll.u32 %v1441, 16
      %v1485 = vrot.slane %v1483, 1
      %v1486 = vor.u32 %v1481, %v1485
      %v1488 = vshll.u32 %v1443, 16
      %v1490 = vrot.slane %v1488, 1
      %v1491 = vsel %vm501, %v1486, %v1490
      %v1495 = vshrl.u32 %v1448, 16
      %v1497 = vshll.u32 %v1448, 16
      %v1499 = vrot.slane %v1497, 1
      %v1500 = vor.u32 %v1495, %v1499
      %v1502 = vshll.u32 %v1450, 16
      %v1504 = vrot.slane %v1502, 1
      %v1505 = vsel %vm501, %v1500, %v1504
      %v1507 = vshrl.u32 %v1449, 16
      %v1509 = vshll.u32 %v1449, 16
      %v1511 = vrot.slane %v1509, 1
      %v1512 = vor.u32 %v1507, %v1511
      %v1514 = vshll.u32 %v1451, 16
      %v1516 = vrot.slane %v1514, 1
      %v1517 = vsel %vm501, %v1512, %v1516
      %v1521 = vshrl.u32 %v1456, 16
      %v1523 = vshll.u32 %v1456, 16
      %v1525 = vrot.slane %v1523, 1
      %v1526 = vor.u32 %v1521, %v1525
      %v1528 = vshll.u32 %v1458, 16
      %v1530 = vrot.slane %v1528, 1
      %v1531 = vsel %vm501, %v1526, %v1530
      %v1533 = vshrl.u32 %v1457, 16
      %v1535 = vshll.u32 %v1457, 16
      %v1537 = vrot.slane %v1535, 1
      %v1538 = vor.u32 %v1533, %v1537
      %v1540 = vshll.u32 %v1459, 16
      %v1542 = vrot.slane %v1540, 1
      %v1543 = vsel %vm501, %v1538, %v1542
      %v1547 = vshrl.u32 %v1464, 16
      %v1549 = vshll.u32 %v1464, 16
      %v1551 = vrot.slane %v1549, 1
      %v1552 = vor.u32 %v1547, %v1551
      %v1554 = vshll.u32 %v1466, 16
      %v1556 = vrot.slane %v1554, 1
      %v1557 = vsel %vm501, %v1552, %v1556
      %v1559 = vshrl.u32 %v1465, 16
      %v1561 = vshll.u32 %v1465, 16
      %v1563 = vrot.slane %v1561, 1
      %v1564 = vor.u32 %v1559, %v1563
      %v1566 = vshll.u32 %v1467, 16
      %v1568 = vrot.slane %v1566, 1
      %v1569 = vsel %vm501, %v1564, %v1568
      %s1572 = scalar_lea.vmem %s438, 1008
      %v1573 = vld [vmem:[%s1572] sm:$0xff]
      %v1574 = vld [vmem:[%s1572 + $0x8] sm:$0xff]
      %v1575 = vld [vmem:[%s1572 + $0x10] sm:$0xff]
      %v1576 = vld [vmem:[%s1572 + $0x18] sm:$0xff]
      %v1577 = vpack.c.bf16 %v1575, %v1573
      %v1578 = vpack.c.bf16 %v1576, %v1574
      %v1579 = vld [vmem:[%s1572 + $0x20] sm:$0xff]
      %v1580 = vld [vmem:[%s1572 + $0x28] sm:$0xff]
      %v1581 = vld [vmem:[%s1572 + $0x30] sm:$0xff]
      %v1582 = vld [vmem:[%s1572 + $0x38] sm:$0xff]
      %v1583 = vpack.c.bf16 %v1581, %v1579
      %v1584 = vpack.c.bf16 %v1582, %v1580
      %v1585 = vld [vmem:[%s1572 + $0x40] sm:$0xff]
      %v1586 = vld [vmem:[%s1572 + $0x48] sm:$0xff]
      %v1587 = vld [vmem:[%s1572 + $0x50] sm:$0xff]
      %v1588 = vld [vmem:[%s1572 + $0x58] sm:$0xff]
      %v1589 = vpack.c.bf16 %v1587, %v1585
      %v1590 = vpack.c.bf16 %v1588, %v1586
      %v1591 = vld [vmem:[%s1572 + $0x60] sm:$0xff]
      %v1592 = vld [vmem:[%s1572 + $0x68] sm:$0xff]
      %v1593 = vld [vmem:[%s1572 + $0x70] sm:$0xff]
      %v1594 = vld [vmem:[%s1572 + $0x78] sm:$0xff]
      %v1595 = vpack.c.bf16 %v1593, %v1591
      %v1596 = vpack.c.bf16 %v1594, %v1592
      %v1597 = vld [vmem:[%s1572] sm:$0xfe]
      %v1598 = vld [vmem:[%s1572 + $0x8] sm:$0xfe]
      %v1599 = vld [vmem:[%s1572 + $0x20] sm:$0x1]
      %v1600 = vld [vmem:[%s1572 + $0x28] sm:$0x1]
      %v1601 = vpack.c.bf16 %v1575, %v1597
      %v1602 = vpack.c.bf16 %v1576, %v1598
      %v1603 = vpack.c.bf16 %v1599, %v1599
      %v1604 = vpack.c.bf16 %v1600, %v1600
      %v1605 = vld [vmem:[%s1572 + $0x20] sm:$0xfe]
      %v1606 = vld [vmem:[%s1572 + $0x28] sm:$0xfe]
      %v1607 = vld [vmem:[%s1572 + $0x40] sm:$0x1]
      %v1608 = vld [vmem:[%s1572 + $0x48] sm:$0x1]
      %v1609 = vpack.c.bf16 %v1581, %v1605
      %v1610 = vpack.c.bf16 %v1582, %v1606
      %v1611 = vpack.c.bf16 %v1607, %v1607
      %v1612 = vpack.c.bf16 %v1608, %v1608
      %v1613 = vld [vmem:[%s1572 + $0x40] sm:$0xfe]
      %v1614 = vld [vmem:[%s1572 + $0x48] sm:$0xfe]
      %v1615 = vld [vmem:[%s1572 + $0x60] sm:$0x1]
      %v1616 = vld [vmem:[%s1572 + $0x68] sm:$0x1]
      %v1617 = vpack.c.bf16 %v1587, %v1613
      %v1618 = vpack.c.bf16 %v1588, %v1614
      %v1619 = vpack.c.bf16 %v1615, %v1615
      %v1620 = vpack.c.bf16 %v1616, %v1616
      %v1621 = vld [vmem:[%s1572 + $0x60] sm:$0xfe]
      %v1622 = vld [vmem:[%s1572 + $0x68] sm:$0xfe]
      %v1623 = vld [vmem:[%s1572 + $0x80] sm:$0x1]
      %v1624 = vld [vmem:[%s1572 + $0x88] sm:$0x1]
      %v1625 = vpack.c.bf16 %v1593, %v1621
      %v1626 = vpack.c.bf16 %v1594, %v1622
      %v1627 = vpack.c.bf16 %v1623, %v1623
      %v1628 = vpack.c.bf16 %v1624, %v1624
      %v1630 = vshrl.u32 %v1601, 16
      %v1632 = vshll.u32 %v1601, 16
      %v1634 = vrot.slane %v1632, 1
      %v1635 = vor.u32 %v1630, %v1634
      %v1637 = vshll.u32 %v1603, 16
      %v1639 = vrot.slane %v1637, 1
      %v1640 = vsel %vm501, %v1635, %v1639
      %v1642 = vshrl.u32 %v1602, 16
      %v1644 = vshll.u32 %v1602, 16
      %v1646 = vrot.slane %v1644, 1
      %v1647 = vor.u32 %v1642, %v1646
      %v1649 = vshll.u32 %v1604, 16
      %v1651 = vrot.slane %v1649, 1
      %v1652 = vsel %vm501, %v1647, %v1651
      %v1656 = vshrl.u32 %v1609, 16
      %v1658 = vshll.u32 %v1609, 16
      %v1660 = vrot.slane %v1658, 1
      %v1661 = vor.u32 %v1656, %v1660
      %v1663 = vshll.u32 %v1611, 16
      %v1665 = vrot.slane %v1663, 1
      %v1666 = vsel %vm501, %v1661, %v1665
      %v1668 = vshrl.u32 %v1610, 16
      %v1670 = vshll.u32 %v1610, 16
      %v1672 = vrot.slane %v1670, 1
      %v1673 = vor.u32 %v1668, %v1672
      %v1675 = vshll.u32 %v1612, 16
      %v1677 = vrot.slane %v1675, 1
      %v1678 = vsel %vm501, %v1673, %v1677
      %v1682 = vshrl.u32 %v1617, 16
      %v1684 = vshll.u32 %v1617, 16
      %v1686 = vrot.slane %v1684, 1
      %v1687 = vor.u32 %v1682, %v1686
      %v1689 = vshll.u32 %v1619, 16
      %v1691 = vrot.slane %v1689, 1
      %v1692 = vsel %vm501, %v1687, %v1691
      %v1694 = vshrl.u32 %v1618, 16
      %v1696 = vshll.u32 %v1618, 16
      %v1698 = vrot.slane %v1696, 1
      %v1699 = vor.u32 %v1694, %v1698
      %v1701 = vshll.u32 %v1620, 16
      %v1703 = vrot.slane %v1701, 1
      %v1704 = vsel %vm501, %v1699, %v1703
      %v1708 = vshrl.u32 %v1625, 16
      %v1710 = vshll.u32 %v1625, 16
      %v1712 = vrot.slane %v1710, 1
      %v1713 = vor.u32 %v1708, %v1712
      %v1715 = vshll.u32 %v1627, 16
      %v1717 = vrot.slane %v1715, 1
      %v1718 = vsel %vm501, %v1713, %v1717
      %v1720 = vshrl.u32 %v1626, 16
      %v1722 = vshll.u32 %v1626, 16
      %v1724 = vrot.slane %v1722, 1
      %v1725 = vor.u32 %v1720, %v1724
      %v1727 = vshll.u32 %v1628, 16
      %v1729 = vrot.slane %v1727, 1
      %v1730 = vsel %vm501, %v1725, %v1729
      %v1733 = vld [vmem:[%s1] sm:$0xf]
      %v1734 = vld [vmem:[%s1 + $0x4] sm:$0xf]
      %v1735 = vld [vmem:[%s1 + $0x8] sm:$0xf]
      %v1736 = vld [vmem:[%s1 + $0xc] sm:$0xf]
      %v1737 = vld [vmem:[%s1 + $0x10] sm:$0xf]
      %v1738 = vld [vmem:[%s1 + $0x14] sm:$0xf]
      %v1739 = vld [vmem:[%s1 + $0x18] sm:$0xf]
      %v1740 = vld [vmem:[%s1 + $0x1c] sm:$0xf]
      %v1741 = vld [vmem:[%s1 + $0x20] sm:$0xf]
      %v1742 = vld [vmem:[%s1 + $0x24] sm:$0xf]
      %v1743 = vld [vmem:[%s1 + $0x28] sm:$0xf]
      %v1744 = vld [vmem:[%s1 + $0x2c] sm:$0xf]
      %v1745 = vld [vmem:[%s1 + $0x30] sm:$0xf]
      %v1746 = vld [vmem:[%s1 + $0x34] sm:$0xf]
      %v1747 = vld [vmem:[%s1 + $0x38] sm:$0xf]
      %v1748 = vld [vmem:[%s1 + $0x3c] sm:$0xf]
      %v1749 = vld [vmem:[%s1 + $0x40] sm:$0xf]
      %v1750 = vld [vmem:[%s1 + $0x44] sm:$0xf]
      %v1751 = vld [vmem:[%s1 + $0x48] sm:$0xf]
      %v1752 = vld [vmem:[%s1 + $0x4c] sm:$0xf]
      %v1753 = vld [vmem:[%s1 + $0x50] sm:$0xf]
      %v1754 = vld [vmem:[%s1 + $0x54] sm:$0xf]
      %v1755 = vld [vmem:[%s1 + $0x58] sm:$0xf]
      %v1756 = vld [vmem:[%s1 + $0x5c] sm:$0xf]
      %v1757 = vld [vmem:[%s1 + $0x60] sm:$0xf]
      %v1758 = vld [vmem:[%s1 + $0x64] sm:$0xf]
      %v1759 = vld [vmem:[%s1 + $0x68] sm:$0xf]
      %v1760 = vld [vmem:[%s1 + $0x6c] sm:$0xf]
      %v1761 = vld [vmem:[%s1 + $0x70] sm:$0xf]
      %v1762 = vld [vmem:[%s1 + $0x74] sm:$0xf]
      %v1763 = vld [vmem:[%s1 + $0x78] sm:$0xf]
      %v1764 = vld [vmem:[%s1 + $0x7c] sm:$0xf]
      %v1765 = vld [vmem:[%s1 + $0x80] sm:$0xf]
      %v1766 = vld [vmem:[%s1 + $0x84] sm:$0xf]
      %v1767 = vld [vmem:[%s1 + $0x88] sm:$0xf]
      %v1768 = vld [vmem:[%s1 + $0x8c] sm:$0xf]
      %v1769 = vld [vmem:[%s1 + $0x90] sm:$0xf]
      %v1770 = vld [vmem:[%s1 + $0x94] sm:$0xf]
      %v1771 = vld [vmem:[%s1 + $0x98] sm:$0xf]
      %v1772 = vld [vmem:[%s1 + $0x9c] sm:$0xf]
      %v1773 = vld [vmem:[%s1 + $0xa0] sm:$0xf]
      %v1774 = vld [vmem:[%s1 + $0xa4] sm:$0xf]
      %v1775 = vld [vmem:[%s1 + $0xa8] sm:$0xf]
      %v1776 = vld [vmem:[%s1 + $0xac] sm:$0xf]
      %v1777 = vld [vmem:[%s1 + $0xb0] sm:$0xf]
      %v1778 = vld [vmem:[%s1 + $0xb4] sm:$0xf]
      %v1779 = vld [vmem:[%s1 + $0xb8] sm:$0xf]
      %v1780 = vld [vmem:[%s1 + $0xbc] sm:$0xf]
      %v1781 = vld [vmem:[%s1 + $0xc0] sm:$0xf]
      %v1782 = vld [vmem:[%s1 + $0xc4] sm:$0xf]
      %v1783 = vld [vmem:[%s1 + $0xc8] sm:$0xf]
      %v1784 = vld [vmem:[%s1 + $0xcc] sm:$0xf]
      %v1785 = vld [vmem:[%s1 + $0xd0] sm:$0xf]
      %v1786 = vld [vmem:[%s1 + $0xd4] sm:$0xf]
      %v1787 = vld [vmem:[%s1 + $0xd8] sm:$0xf]
      %v1788 = vld [vmem:[%s1 + $0xdc] sm:$0xf]
      %v1789 = vld [vmem:[%s1 + $0xe0] sm:$0xf]
      %v1790 = vld [vmem:[%s1 + $0xe4] sm:$0xf]
      %v1791 = vld [vmem:[%s1 + $0xe8] sm:$0xf]
      %v1792 = vld [vmem:[%s1 + $0xec] sm:$0xf]
      %v1793 = vld [vmem:[%s1 + $0xf0] sm:$0xf]
      %v1794 = vld [vmem:[%s1 + $0xf4] sm:$0xf]
      %v1795 = vld [vmem:[%s1 + $0xf8] sm:$0xf]
      %v1796 = vld [vmem:[%s1 + $0xfc] sm:$0xf]
      %v1797 = vld [vmem:[%s1 + $0x100] sm:$0xf]
      %v1798 = vld [vmem:[%s1 + $0x104] sm:$0xf]
      %v1799 = vld [vmem:[%s1 + $0x108] sm:$0xf]
      %v1800 = vld [vmem:[%s1 + $0x10c] sm:$0xf]
      %v1801 = vld [vmem:[%s1 + $0x110] sm:$0xf]
      %v1802 = vld [vmem:[%s1 + $0x114] sm:$0xf]
      %v1803 = vld [vmem:[%s1 + $0x118] sm:$0xf]
      %v1804 = vld [vmem:[%s1 + $0x11c] sm:$0xf]
      %v1805 = vld [vmem:[%s1 + $0x120] sm:$0xf]
      %v1806 = vld [vmem:[%s1 + $0x124] sm:$0xf]
      %v1807 = vld [vmem:[%s1 + $0x128] sm:$0xf]
      %v1808 = vld [vmem:[%s1 + $0x12c] sm:$0xf]
      %v1809 = vld [vmem:[%s1 + $0x130] sm:$0xf]
      %v1810 = vld [vmem:[%s1 + $0x134] sm:$0xf]
      %v1811 = vld [vmem:[%s1 + $0x138] sm:$0xf]
      %v1812 = vld [vmem:[%s1 + $0x13c] sm:$0xf]
      %v1813 = vld [vmem:[%s1 + $0x140] sm:$0xf]
      %v1814 = vld [vmem:[%s1 + $0x144] sm:$0xf]
      %v1815 = vld [vmem:[%s1 + $0x148] sm:$0xf]
      %v1816 = vld [vmem:[%s1 + $0x14c] sm:$0xf]
      %v1817 = vld [vmem:[%s1 + $0x150] sm:$0xf]
      %v1818 = vld [vmem:[%s1 + $0x154] sm:$0xf]
      %v1819 = vld [vmem:[%s1 + $0x158] sm:$0xf]
      %v1820 = vld [vmem:[%s1 + $0x15c] sm:$0xf]
      %v1821 = vld [vmem:[%s1 + $0x160] sm:$0xf]
      %v1822 = vld [vmem:[%s1 + $0x164] sm:$0xf]
      %v1823 = vld [vmem:[%s1 + $0x168] sm:$0xf]
      %v1824 = vld [vmem:[%s1 + $0x16c] sm:$0xf]
      %v1825 = vld [vmem:[%s1 + $0x170] sm:$0xf]
      %v1826 = vld [vmem:[%s1 + $0x174] sm:$0xf]
      %v1827 = vld [vmem:[%s1 + $0x178] sm:$0xf]
      %v1828 = vld [vmem:[%s1 + $0x17c] sm:$0xf]
      %v1829 = vld [vmem:[%s1 + $0x180] sm:$0xf]
      %v1830 = vld [vmem:[%s1 + $0x184] sm:$0xf]
      %v1831 = vld [vmem:[%s1 + $0x188] sm:$0xf]
      %v1832 = vld [vmem:[%s1 + $0x18c] sm:$0xf]
      %v1833 = vld [vmem:[%s1 + $0x190] sm:$0xf]
      %v1834 = vld [vmem:[%s1 + $0x194] sm:$0xf]
      %v1835 = vld [vmem:[%s1 + $0x198] sm:$0xf]
      %v1836 = vld [vmem:[%s1 + $0x19c] sm:$0xf]
      %v1837 = vld [vmem:[%s1 + $0x1a0] sm:$0xf]
      %v1838 = vld [vmem:[%s1 + $0x1a4] sm:$0xf]
      %v1839 = vld [vmem:[%s1 + $0x1a8] sm:$0xf]
      %v1840 = vld [vmem:[%s1 + $0x1ac] sm:$0xf]
      %v1841 = vld [vmem:[%s1 + $0x1b0] sm:$0xf]
      %v1842 = vld [vmem:[%s1 + $0x1b4] sm:$0xf]
      %v1843 = vld [vmem:[%s1 + $0x1b8] sm:$0xf]
      %v1844 = vld [vmem:[%s1 + $0x1bc] sm:$0xf]
      %v1845 = vld [vmem:[%s1 + $0x1c0] sm:$0xf]
      %v1846 = vld [vmem:[%s1 + $0x1c4] sm:$0xf]
      %v1847 = vld [vmem:[%s1 + $0x1c8] sm:$0xf]
      %v1848 = vld [vmem:[%s1 + $0x1cc] sm:$0xf]
      %v1849 = vld [vmem:[%s1 + $0x1d0] sm:$0xf]
      %v1850 = vld [vmem:[%s1 + $0x1d4] sm:$0xf]
      %v1851 = vld [vmem:[%s1 + $0x1d8] sm:$0xf]
      %v1852 = vld [vmem:[%s1 + $0x1dc] sm:$0xf]
      %v1853 = vld [vmem:[%s1 + $0x1e0] sm:$0xf]
      %v1854 = vld [vmem:[%s1 + $0x1e4] sm:$0xf]
      %v1855 = vld [vmem:[%s1 + $0x1e8] sm:$0xf]
      %v1856 = vld [vmem:[%s1 + $0x1ec] sm:$0xf]
      %v1857 = vld [vmem:[%s1 + $0x1f0] sm:$0xf]
      %v1858 = vld [vmem:[%s1 + $0x1f4] sm:$0xf]
      %v1859 = vld [vmem:[%s1 + $0x1f8] sm:$0xf]
      %v1860 = vld [vmem:[%s1 + $0x1fc] sm:$0xf]
      %v1861 = vld [vmem:[%s1 + $0x200] sm:$0xf]
      %v1862 = vld [vmem:[%s1 + $0x204] sm:$0xf]
      %v1863 = vld [vmem:[%s1 + $0x208] sm:$0xf]
      %v1864 = vld [vmem:[%s1 + $0x20c] sm:$0xf]
      %v1865 = vld [vmem:[%s1 + $0x210] sm:$0xf]
      %v1866 = vld [vmem:[%s1 + $0x214] sm:$0xf]
      %v1867 = vld [vmem:[%s1 + $0x218] sm:$0xf]
      %v1868 = vld [vmem:[%s1 + $0x21c] sm:$0xf]
      %v1869 = vld [vmem:[%s1 + $0x220] sm:$0xf]
      %v1870 = vld [vmem:[%s1 + $0x224] sm:$0xf]
      %v1871 = vld [vmem:[%s1 + $0x228] sm:$0xf]
      %v1872 = vld [vmem:[%s1 + $0x22c] sm:$0xf]
      %v1873 = vld [vmem:[%s1 + $0x230] sm:$0xf]
      %v1874 = vld [vmem:[%s1 + $0x234] sm:$0xf]
      %v1875 = vld [vmem:[%s1 + $0x238] sm:$0xf]
      %v1876 = vld [vmem:[%s1 + $0x23c] sm:$0xf]
      %v1877 = vld [vmem:[%s1 + $0x240] sm:$0xf]
      %v1878 = vld [vmem:[%s1 + $0x244] sm:$0xf]
      %v1879 = vld [vmem:[%s1 + $0x248] sm:$0xf]
      %v1880 = vld [vmem:[%s1 + $0x24c] sm:$0xf]
      %v1881 = vld [vmem:[%s1 + $0x250] sm:$0xf]
      %v1882 = vld [vmem:[%s1 + $0x254] sm:$0xf]
      %v1883 = vld [vmem:[%s1 + $0x258] sm:$0xf]
      %v1884 = vld [vmem:[%s1 + $0x25c] sm:$0xf]
      %v1885 = vld [vmem:[%s1 + $0x260] sm:$0xf]
      %v1886 = vld [vmem:[%s1 + $0x264] sm:$0xf]
      %v1887 = vld [vmem:[%s1 + $0x268] sm:$0xf]
      %v1888 = vld [vmem:[%s1 + $0x26c] sm:$0xf]
      %v1889 = vld [vmem:[%s1 + $0x270] sm:$0xf]
      %v1890 = vld [vmem:[%s1 + $0x274] sm:$0xf]
      %v1891 = vld [vmem:[%s1 + $0x278] sm:$0xf]
      %v1892 = vld [vmem:[%s1 + $0x27c] sm:$0xf]
      %v1893 = vld [vmem:[%s1 + $0x280] sm:$0xf]
      %v1894 = vld [vmem:[%s1 + $0x284] sm:$0xf]
      %v1895 = vld [vmem:[%s1 + $0x288] sm:$0xf]
      %v1896 = vld [vmem:[%s1 + $0x28c] sm:$0xf]
      %v1897 = vld [vmem:[%s1 + $0x290] sm:$0xf]
      %v1898 = vld [vmem:[%s1 + $0x294] sm:$0xf]
      %v1899 = vld [vmem:[%s1 + $0x298] sm:$0xf]
      %v1900 = vld [vmem:[%s1 + $0x29c] sm:$0xf]
      %v1901 = vld [vmem:[%s1 + $0x2a0] sm:$0xf]
      %v1902 = vld [vmem:[%s1 + $0x2a4] sm:$0xf]
      %v1903 = vld [vmem:[%s1 + $0x2a8] sm:$0xf]
      %v1904 = vld [vmem:[%s1 + $0x2ac] sm:$0xf]
      %v1905 = vld [vmem:[%s1 + $0x2b0] sm:$0xf]
      %v1906 = vld [vmem:[%s1 + $0x2b4] sm:$0xf]
      %v1907 = vld [vmem:[%s1 + $0x2b8] sm:$0xf]
      %v1908 = vld [vmem:[%s1 + $0x2bc] sm:$0xf]
      %v1909 = vld [vmem:[%s1 + $0x2c0] sm:$0xf]
      %v1910 = vld [vmem:[%s1 + $0x2c4] sm:$0xf]
      %v1911 = vld [vmem:[%s1 + $0x2c8] sm:$0xf]
      %v1912 = vld [vmem:[%s1 + $0x2cc] sm:$0xf]
      %v1913 = vld [vmem:[%s1 + $0x2d0] sm:$0xf]
      %v1914 = vld [vmem:[%s1 + $0x2d4] sm:$0xf]
      %v1915 = vld [vmem:[%s1 + $0x2d8] sm:$0xf]
      %v1916 = vld [vmem:[%s1 + $0x2dc] sm:$0xf]
      %v1917 = vld [vmem:[%s1 + $0x2e0] sm:$0xf]
      %v1918 = vld [vmem:[%s1 + $0x2e4] sm:$0xf]
      %v1919 = vld [vmem:[%s1 + $0x2e8] sm:$0xf]
      %v1920 = vld [vmem:[%s1 + $0x2ec] sm:$0xf]
      %v1921 = vld [vmem:[%s1 + $0x2f0] sm:$0xf]
      %v1922 = vld [vmem:[%s1 + $0x2f4] sm:$0xf]
      %v1923 = vld [vmem:[%s1 + $0x2f8] sm:$0xf]
      %v1924 = vld [vmem:[%s1 + $0x2fc] sm:$0xf]
      %v1925 = vld [vmem:[%s1 + $0x300] sm:$0xf]
      %v1926 = vld [vmem:[%s1 + $0x304] sm:$0xf]
      %v1927 = vld [vmem:[%s1 + $0x308] sm:$0xf]
      %v1928 = vld [vmem:[%s1 + $0x30c] sm:$0xf]
      %v1929 = vld [vmem:[%s1 + $0x310] sm:$0xf]
      %v1930 = vld [vmem:[%s1 + $0x314] sm:$0xf]
      %v1931 = vld [vmem:[%s1 + $0x318] sm:$0xf]
      %v1932 = vld [vmem:[%s1 + $0x31c] sm:$0xf]
      %v1933 = vld [vmem:[%s1 + $0x320] sm:$0xf]
      %v1934 = vld [vmem:[%s1 + $0x324] sm:$0xf]
      %v1935 = vld [vmem:[%s1 + $0x328] sm:$0xf]
      %v1936 = vld [vmem:[%s1 + $0x32c] sm:$0xf]
      %v1937 = vld [vmem:[%s1 + $0x330] sm:$0xf]
      %v1938 = vld [vmem:[%s1 + $0x334] sm:$0xf]
      %v1939 = vld [vmem:[%s1 + $0x338] sm:$0xf]
      %v1940 = vld [vmem:[%s1 + $0x33c] sm:$0xf]
      %v1941 = vld [vmem:[%s1 + $0x340] sm:$0xf]
      %v1942 = vld [vmem:[%s1 + $0x344] sm:$0xf]
      %v1943 = vld [vmem:[%s1 + $0x348] sm:$0xf]
      %v1944 = vld [vmem:[%s1 + $0x34c] sm:$0xf]
      %v1945 = vld [vmem:[%s1 + $0x350] sm:$0xf]
      %v1946 = vld [vmem:[%s1 + $0x354] sm:$0xf]
      %v1947 = vld [vmem:[%s1 + $0x358] sm:$0xf]
      %v1948 = vld [vmem:[%s1 + $0x35c] sm:$0xf]
      %v1949 = vld [vmem:[%s1 + $0x360] sm:$0xf]
      %v1950 = vld [vmem:[%s1 + $0x364] sm:$0xf]
      %v1951 = vld [vmem:[%s1 + $0x368] sm:$0xf]
      %v1952 = vld [vmem:[%s1 + $0x36c] sm:$0xf]
      %v1953 = vld [vmem:[%s1 + $0x370] sm:$0xf]
      %v1954 = vld [vmem:[%s1 + $0x374] sm:$0xf]
      %v1955 = vld [vmem:[%s1 + $0x378] sm:$0xf]
      %v1956 = vld [vmem:[%s1 + $0x37c] sm:$0xf]
      %v1957 = vld [vmem:[%s1 + $0x380] sm:$0xf]
      %v1958 = vld [vmem:[%s1 + $0x384] sm:$0xf]
      %v1959 = vld [vmem:[%s1 + $0x388] sm:$0xf]
      %v1960 = vld [vmem:[%s1 + $0x38c] sm:$0xf]
      %v1961 = vld [vmem:[%s1 + $0x390] sm:$0xf]
      %v1962 = vld [vmem:[%s1 + $0x394] sm:$0xf]
      %v1963 = vld [vmem:[%s1 + $0x398] sm:$0xf]
      %v1964 = vld [vmem:[%s1 + $0x39c] sm:$0xf]
      %v1965 = vld [vmem:[%s1 + $0x3a0] sm:$0xf]
      %v1966 = vld [vmem:[%s1 + $0x3a4] sm:$0xf]
      %v1967 = vld [vmem:[%s1 + $0x3a8] sm:$0xf]
      %v1968 = vld [vmem:[%s1 + $0x3ac] sm:$0xf]
      %v1969 = vld [vmem:[%s1 + $0x3b0] sm:$0xf]
      %v1970 = vld [vmem:[%s1 + $0x3b4] sm:$0xf]
      %v1971 = vld [vmem:[%s1 + $0x3b8] sm:$0xf]
      %v1972 = vld [vmem:[%s1 + $0x3bc] sm:$0xf]
      %v1973 = vld [vmem:[%s1 + $0x3c0] sm:$0xf]
      %v1974 = vld [vmem:[%s1 + $0x3c4] sm:$0xf]
      %v1975 = vld [vmem:[%s1 + $0x3c8] sm:$0xf]
      %v1976 = vld [vmem:[%s1 + $0x3cc] sm:$0xf]
      %v1977 = vld [vmem:[%s1 + $0x3d0] sm:$0xf]
      %v1978 = vld [vmem:[%s1 + $0x3d4] sm:$0xf]
      %v1979 = vld [vmem:[%s1 + $0x3d8] sm:$0xf]
      %v1980 = vld [vmem:[%s1 + $0x3dc] sm:$0xf]
      %v1981 = vld [vmem:[%s1 + $0x3e0] sm:$0xf]
      %v1982 = vld [vmem:[%s1 + $0x3e4] sm:$0xf]
      %v1983 = vld [vmem:[%s1 + $0x3e8] sm:$0xf]
      %v1984 = vld [vmem:[%s1 + $0x3ec] sm:$0xf]
      %v1985 = vld [vmem:[%s1 + $0x3f0] sm:$0xf]
      %v1986 = vld [vmem:[%s1 + $0x3f4] sm:$0xf]
      %v1987 = vld [vmem:[%s1 + $0x3f8] sm:$0xf]
      %v1988 = vld [vmem:[%s1 + $0x3fc] sm:$0xf]
      %v1989 = vld [vmem:[%s2] sm:$0x1]
      %v1991 = vlaneseq
      %v1992 = vshrl.u32 %v1991, 7
      %v1993 = vsub.s32 0, %v1992
      %v1994 = vrot.slane %v1989, %v1993
      %v2252 = vunpack.c.l.b16 %v1733
      %v2253 = vunpack.c.l.b16 %v1734
      %v2254 = vunpack.c.l.b16 %v1735
      %v2255 = vunpack.c.l.b16 %v1736
      %v2256 = vunpack.c.l.b16 %v1737
      %v2257 = vunpack.c.l.b16 %v1738
      %v2258 = vunpack.c.l.b16 %v1739
      %v2259 = vunpack.c.l.b16 %v1740
      %v2260 = vunpack.c.l.b16 %v1741
      %v2261 = vunpack.c.l.b16 %v1742
      %v2262 = vunpack.c.l.b16 %v1743
      %v2263 = vunpack.c.l.b16 %v1744
      %v2264 = vunpack.c.l.b16 %v1745
      %v2265 = vunpack.c.l.b16 %v1746
      %v2266 = vunpack.c.l.b16 %v1747
      %v2267 = vunpack.c.l.b16 %v1748
      %v2268 = vunpack.c.l.b16 %v1749
      %v2269 = vunpack.c.l.b16 %v1750
      %v2270 = vunpack.c.l.b16 %v1751
      %v2271 = vunpack.c.l.b16 %v1752
      %v2272 = vunpack.c.l.b16 %v1753
      %v2273 = vunpack.c.l.b16 %v1754
      %v2274 = vunpack.c.l.b16 %v1755
      %v2275 = vunpack.c.l.b16 %v1756
      %v2276 = vunpack.c.l.b16 %v1757
      %v2277 = vunpack.c.l.b16 %v1758
      %v2278 = vunpack.c.l.b16 %v1759
      %v2279 = vunpack.c.l.b16 %v1760
      %v2280 = vunpack.c.l.b16 %v1761
      %v2281 = vunpack.c.l.b16 %v1762
      %v2282 = vunpack.c.l.b16 %v1763
      %v2283 = vunpack.c.l.b16 %v1764
      %v2284 = vunpack.c.l.b16 %v1765
      %v2285 = vunpack.c.l.b16 %v1766
      %v2286 = vunpack.c.l.b16 %v1767
      %v2287 = vunpack.c.l.b16 %v1768
      %v2288 = vunpack.c.l.b16 %v1769
      %v2289 = vunpack.c.l.b16 %v1770
      %v2290 = vunpack.c.l.b16 %v1771
      %v2291 = vunpack.c.l.b16 %v1772
      %v2292 = vunpack.c.l.b16 %v1773
      %v2293 = vunpack.c.l.b16 %v1774
      %v2294 = vunpack.c.l.b16 %v1775
      %v2295 = vunpack.c.l.b16 %v1776
      %v2296 = vunpack.c.l.b16 %v1777
      %v2297 = vunpack.c.l.b16 %v1778
      %v2298 = vunpack.c.l.b16 %v1779
      %v2299 = vunpack.c.l.b16 %v1780
      %v2300 = vunpack.c.l.b16 %v1781
      %v2301 = vunpack.c.l.b16 %v1782
      %v2302 = vunpack.c.l.b16 %v1783
      %v2303 = vunpack.c.l.b16 %v1784
      %v2304 = vunpack.c.l.b16 %v1785
      %v2305 = vunpack.c.l.b16 %v1786
      %v2306 = vunpack.c.l.b16 %v1787
      %v2307 = vunpack.c.l.b16 %v1788
      %v2308 = vunpack.c.l.b16 %v1789
      %v2309 = vunpack.c.l.b16 %v1790
      %v2310 = vunpack.c.l.b16 %v1791
      %v2311 = vunpack.c.l.b16 %v1792
      %v2312 = vunpack.c.l.b16 %v1793
      %v2313 = vunpack.c.l.b16 %v1794
      %v2314 = vunpack.c.l.b16 %v1795
      %v2315 = vunpack.c.l.b16 %v1796
      %v2316 = vunpack.c.l.b16 %v1797
      %v2317 = vunpack.c.l.b16 %v1798
      %v2318 = vunpack.c.l.b16 %v1799
      %v2319 = vunpack.c.l.b16 %v1800
      %v2320 = vunpack.c.l.b16 %v1801
      %v2321 = vunpack.c.l.b16 %v1802
      %v2322 = vunpack.c.l.b16 %v1803
      %v2323 = vunpack.c.l.b16 %v1804
      %v2324 = vunpack.c.l.b16 %v1805
      %v2325 = vunpack.c.l.b16 %v1806
      %v2326 = vunpack.c.l.b16 %v1807
      %v2327 = vunpack.c.l.b16 %v1808
      %v2328 = vunpack.c.l.b16 %v1809
      %v2329 = vunpack.c.l.b16 %v1810
      %v2330 = vunpack.c.l.b16 %v1811
      %v2331 = vunpack.c.l.b16 %v1812
      %v2332 = vunpack.c.l.b16 %v1813
      %v2333 = vunpack.c.l.b16 %v1814
      %v2334 = vunpack.c.l.b16 %v1815
      %v2335 = vunpack.c.l.b16 %v1816
      %v2336 = vunpack.c.l.b16 %v1817
      %v2337 = vunpack.c.l.b16 %v1818
      %v2338 = vunpack.c.l.b16 %v1819
      %v2339 = vunpack.c.l.b16 %v1820
      %v2340 = vunpack.c.l.b16 %v1821
      %v2341 = vunpack.c.l.b16 %v1822
      %v2342 = vunpack.c.l.b16 %v1823
      %v2343 = vunpack.c.l.b16 %v1824
      %v2344 = vunpack.c.l.b16 %v1825
      %v2345 = vunpack.c.l.b16 %v1826
      %v2346 = vunpack.c.l.b16 %v1827
      %v2347 = vunpack.c.l.b16 %v1828
      %v2348 = vunpack.c.l.b16 %v1829
      %v2349 = vunpack.c.l.b16 %v1830
      %v2350 = vunpack.c.l.b16 %v1831
      %v2351 = vunpack.c.l.b16 %v1832
      %v2352 = vunpack.c.l.b16 %v1833
      %v2353 = vunpack.c.l.b16 %v1834
      %v2354 = vunpack.c.l.b16 %v1835
      %v2355 = vunpack.c.l.b16 %v1836
      %v2356 = vunpack.c.l.b16 %v1837
      %v2357 = vunpack.c.l.b16 %v1838
      %v2358 = vunpack.c.l.b16 %v1839
      %v2359 = vunpack.c.l.b16 %v1840
      %v2360 = vunpack.c.l.b16 %v1841
      %v2361 = vunpack.c.l.b16 %v1842
      %v2362 = vunpack.c.l.b16 %v1843
      %v2363 = vunpack.c.l.b16 %v1844
      %v2364 = vunpack.c.l.b16 %v1845
      %v2365 = vunpack.c.l.b16 %v1846
      %v2366 = vunpack.c.l.b16 %v1847
      %v2367 = vunpack.c.l.b16 %v1848
      %v2368 = vunpack.c.l.b16 %v1849
      %v2369 = vunpack.c.l.b16 %v1850
      %v2370 = vunpack.c.l.b16 %v1851
      %v2371 = vunpack.c.l.b16 %v1852
      %v2372 = vunpack.c.l.b16 %v1853
      %v2373 = vunpack.c.l.b16 %v1854
      %v2374 = vunpack.c.l.b16 %v1855
      %v2375 = vunpack.c.l.b16 %v1856
      %v2376 = vunpack.c.l.b16 %v1857
      %v2377 = vunpack.c.l.b16 %v1858
      %v2378 = vunpack.c.l.b16 %v1859
      %v2379 = vunpack.c.l.b16 %v1860
      %v2380 = vunpack.c.l.b16 %v1861
      %v2381 = vunpack.c.l.b16 %v1862
      %v2382 = vunpack.c.l.b16 %v1863
      %v2383 = vunpack.c.l.b16 %v1864
      %v2384 = vunpack.c.l.b16 %v1865
      %v2385 = vunpack.c.l.b16 %v1866
      %v2386 = vunpack.c.l.b16 %v1867
      %v2387 = vunpack.c.l.b16 %v1868
      %v2388 = vunpack.c.l.b16 %v1869
      %v2389 = vunpack.c.l.b16 %v1870
      %v2390 = vunpack.c.l.b16 %v1871
      %v2391 = vunpack.c.l.b16 %v1872
      %v2392 = vunpack.c.l.b16 %v1873
      %v2393 = vunpack.c.l.b16 %v1874
      %v2394 = vunpack.c.l.b16 %v1875
      %v2395 = vunpack.c.l.b16 %v1876
      %v2396 = vunpack.c.l.b16 %v1877
      %v2397 = vunpack.c.l.b16 %v1878
      %v2398 = vunpack.c.l.b16 %v1879
      %v2399 = vunpack.c.l.b16 %v1880
      %v2400 = vunpack.c.l.b16 %v1881
      %v2401 = vunpack.c.l.b16 %v1882
      %v2402 = vunpack.c.l.b16 %v1883
      %v2403 = vunpack.c.l.b16 %v1884
      %v2404 = vunpack.c.l.b16 %v1885
      %v2405 = vunpack.c.l.b16 %v1886
      %v2406 = vunpack.c.l.b16 %v1887
      %v2407 = vunpack.c.l.b16 %v1888
      %v2408 = vunpack.c.l.b16 %v1889
      %v2409 = vunpack.c.l.b16 %v1890
      %v2410 = vunpack.c.l.b16 %v1891
      %v2411 = vunpack.c.l.b16 %v1892
      %v2412 = vunpack.c.l.b16 %v1893
      %v2413 = vunpack.c.l.b16 %v1894
      %v2414 = vunpack.c.l.b16 %v1895
      %v2415 = vunpack.c.l.b16 %v1896
      %v2416 = vunpack.c.l.b16 %v1897
      %v2417 = vunpack.c.l.b16 %v1898
      %v2418 = vunpack.c.l.b16 %v1899
      %v2419 = vunpack.c.l.b16 %v1900
      %v2420 = vunpack.c.l.b16 %v1901
      %v2421 = vunpack.c.l.b16 %v1902
      %v2422 = vunpack.c.l.b16 %v1903
      %v2423 = vunpack.c.l.b16 %v1904
      %v2424 = vunpack.c.l.b16 %v1905
      %v2425 = vunpack.c.l.b16 %v1906
      %v2426 = vunpack.c.l.b16 %v1907
      %v2427 = vunpack.c.l.b16 %v1908
      %v2428 = vunpack.c.l.b16 %v1909
      %v2429 = vunpack.c.l.b16 %v1910
      %v2430 = vunpack.c.l.b16 %v1911
      %v2431 = vunpack.c.l.b16 %v1912
      %v2432 = vunpack.c.l.b16 %v1913
      %v2433 = vunpack.c.l.b16 %v1914
      %v2434 = vunpack.c.l.b16 %v1915
      %v2435 = vunpack.c.l.b16 %v1916
      %v2436 = vunpack.c.l.b16 %v1917
      %v2437 = vunpack.c.l.b16 %v1918
      %v2438 = vunpack.c.l.b16 %v1919
      %v2439 = vunpack.c.l.b16 %v1920
      %v2440 = vunpack.c.l.b16 %v1921
      %v2441 = vunpack.c.l.b16 %v1922
      %v2442 = vunpack.c.l.b16 %v1923
      %v2443 = vunpack.c.l.b16 %v1924
      %v2444 = vunpack.c.l.b16 %v1925
      %v2445 = vunpack.c.l.b16 %v1926
      %v2446 = vunpack.c.l.b16 %v1927
      %v2447 = vunpack.c.l.b16 %v1928
      %v2448 = vunpack.c.l.b16 %v1929
      %v2449 = vunpack.c.l.b16 %v1930
      %v2450 = vunpack.c.l.b16 %v1931
      %v2451 = vunpack.c.l.b16 %v1932
      %v2452 = vunpack.c.l.b16 %v1933
      %v2453 = vunpack.c.l.b16 %v1934
      %v2454 = vunpack.c.l.b16 %v1935
      %v2455 = vunpack.c.l.b16 %v1936
      %v2456 = vunpack.c.l.b16 %v1937
      %v2457 = vunpack.c.l.b16 %v1938
      %v2458 = vunpack.c.l.b16 %v1939
      %v2459 = vunpack.c.l.b16 %v1940
      %v2460 = vunpack.c.l.b16 %v1941
      %v2461 = vunpack.c.l.b16 %v1942
      %v2462 = vunpack.c.l.b16 %v1943
      %v2463 = vunpack.c.l.b16 %v1944
      %v2464 = vunpack.c.l.b16 %v1945
      %v2465 = vunpack.c.l.b16 %v1946
      %v2466 = vunpack.c.l.b16 %v1947
      %v2467 = vunpack.c.l.b16 %v1948
      %v2468 = vunpack.c.l.b16 %v1949
      %v2469 = vunpack.c.l.b16 %v1950
      %v2470 = vunpack.c.l.b16 %v1951
      %v2471 = vunpack.c.l.b16 %v1952
      %v2472 = vunpack.c.l.b16 %v1953
      %v2473 = vunpack.c.l.b16 %v1954
      %v2474 = vunpack.c.l.b16 %v1955
      %v2475 = vunpack.c.l.b16 %v1956
      %v2476 = vunpack.c.l.b16 %v1957
      %v2477 = vunpack.c.l.b16 %v1958
      %v2478 = vunpack.c.l.b16 %v1959
      %v2479 = vunpack.c.l.b16 %v1960
      %v2480 = vunpack.c.l.b16 %v1961
      %v2481 = vunpack.c.l.b16 %v1962
      %v2482 = vunpack.c.l.b16 %v1963
      %v2483 = vunpack.c.l.b16 %v1964
      %v2484 = vunpack.c.l.b16 %v1965
      %v2485 = vunpack.c.l.b16 %v1966
      %v2486 = vunpack.c.l.b16 %v1967
      %v2487 = vunpack.c.l.b16 %v1968
      %v2488 = vunpack.c.l.b16 %v1969
      %v2489 = vunpack.c.l.b16 %v1970
      %v2490 = vunpack.c.l.b16 %v1971
      %v2491 = vunpack.c.l.b16 %v1972
      %v2492 = vunpack.c.l.b16 %v1973
      %v2493 = vunpack.c.l.b16 %v1974
      %v2494 = vunpack.c.l.b16 %v1975
      %v2495 = vunpack.c.l.b16 %v1976
      %v2496 = vunpack.c.l.b16 %v1977
      %v2497 = vunpack.c.l.b16 %v1978
      %v2498 = vunpack.c.l.b16 %v1979
      %v2499 = vunpack.c.l.b16 %v1980
      %v2500 = vunpack.c.l.b16 %v1981
      %v2501 = vunpack.c.l.b16 %v1982
      %v2502 = vunpack.c.l.b16 %v1983
      %v2503 = vunpack.c.l.b16 %v1984
      %v2504 = vunpack.c.l.b16 %v1985
      %v2505 = vunpack.c.l.b16 %v1986
      %v2506 = vunpack.c.l.b16 %v1987
      %v2507 = vunpack.c.l.b16 %v1988
      %v2508 = vpack.c.b16 %v2253, %v2252
      %v2509 = vpack.c.b16 %v2255, %v2254
      %v2510 = vpack.c.b16 %v2257, %v2256
      %v2511 = vpack.c.b16 %v2259, %v2258
      %v2512 = vpack.c.b16 %v2261, %v2260
      %v2513 = vpack.c.b16 %v2263, %v2262
      %v2514 = vpack.c.b16 %v2265, %v2264
      %v2515 = vpack.c.b16 %v2267, %v2266
      %v2516 = vpack.c.b16 %v2269, %v2268
      %v2517 = vpack.c.b16 %v2271, %v2270
      %v2518 = vpack.c.b16 %v2273, %v2272
      %v2519 = vpack.c.b16 %v2275, %v2274
      %v2520 = vpack.c.b16 %v2277, %v2276
      %v2521 = vpack.c.b16 %v2279, %v2278
      %v2522 = vpack.c.b16 %v2281, %v2280
      %v2523 = vpack.c.b16 %v2283, %v2282
      %v2524 = vpack.c.b16 %v2285, %v2284
      %v2525 = vpack.c.b16 %v2287, %v2286
      %v2526 = vpack.c.b16 %v2289, %v2288
      %v2527 = vpack.c.b16 %v2291, %v2290
      %v2528 = vpack.c.b16 %v2293, %v2292
      %v2529 = vpack.c.b16 %v2295, %v2294
      %v2530 = vpack.c.b16 %v2297, %v2296
      %v2531 = vpack.c.b16 %v2299, %v2298
      %v2532 = vpack.c.b16 %v2301, %v2300
      %v2533 = vpack.c.b16 %v2303, %v2302
      %v2534 = vpack.c.b16 %v2305, %v2304
      %v2535 = vpack.c.b16 %v2307, %v2306
      %v2536 = vpack.c.b16 %v2309, %v2308
      %v2537 = vpack.c.b16 %v2311, %v2310
      %v2538 = vpack.c.b16 %v2313, %v2312
      %v2539 = vpack.c.b16 %v2315, %v2314
      %v2540 = vpack.c.b16 %v2317, %v2316
      %v2541 = vpack.c.b16 %v2319, %v2318
      %v2542 = vpack.c.b16 %v2321, %v2320
      %v2543 = vpack.c.b16 %v2323, %v2322
      %v2544 = vpack.c.b16 %v2325, %v2324
      %v2545 = vpack.c.b16 %v2327, %v2326
      %v2546 = vpack.c.b16 %v2329, %v2328
      %v2547 = vpack.c.b16 %v2331, %v2330
      %v2548 = vpack.c.b16 %v2333, %v2332
      %v2549 = vpack.c.b16 %v2335, %v2334
      %v2550 = vpack.c.b16 %v2337, %v2336
      %v2551 = vpack.c.b16 %v2339, %v2338
      %v2552 = vpack.c.b16 %v2341, %v2340
      %v2553 = vpack.c.b16 %v2343, %v2342
      %v2554 = vpack.c.b16 %v2345, %v2344
      %v2555 = vpack.c.b16 %v2347, %v2346
      %v2556 = vpack.c.b16 %v2349, %v2348
      %v2557 = vpack.c.b16 %v2351, %v2350
      %v2558 = vpack.c.b16 %v2353, %v2352
      %v2559 = vpack.c.b16 %v2355, %v2354
      %v2560 = vpack.c.b16 %v2357, %v2356
      %v2561 = vpack.c.b16 %v2359, %v2358
      %v2562 = vpack.c.b16 %v2361, %v2360
      %v2563 = vpack.c.b16 %v2363, %v2362
      %v2564 = vpack.c.b16 %v2365, %v2364
      %v2565 = vpack.c.b16 %v2367, %v2366
      %v2566 = vpack.c.b16 %v2369, %v2368
      %v2567 = vpack.c.b16 %v2371, %v2370
      %v2568 = vpack.c.b16 %v2373, %v2372
      %v2569 = vpack.c.b16 %v2375, %v2374
      %v2570 = vpack.c.b16 %v2377, %v2376
      %v2571 = vpack.c.b16 %v2379, %v2378
      %v2572 = vpack.c.b16 %v2381, %v2380
      %v2573 = vpack.c.b16 %v2383, %v2382
      %v2574 = vpack.c.b16 %v2385, %v2384
      %v2575 = vpack.c.b16 %v2387, %v2386
      %v2576 = vpack.c.b16 %v2389, %v2388
      %v2577 = vpack.c.b16 %v2391, %v2390
      %v2578 = vpack.c.b16 %v2393, %v2392
      %v2579 = vpack.c.b16 %v2395, %v2394
      %v2580 = vpack.c.b16 %v2397, %v2396
      %v2581 = vpack.c.b16 %v2399, %v2398
      %v2582 = vpack.c.b16 %v2401, %v2400
      %v2583 = vpack.c.b16 %v2403, %v2402
      %v2584 = vpack.c.b16 %v2405, %v2404
      %v2585 = vpack.c.b16 %v2407, %v2406
      %v2586 = vpack.c.b16 %v2409, %v2408
      %v2587 = vpack.c.b16 %v2411, %v2410
      %v2588 = vpack.c.b16 %v2413, %v2412
      %v2589 = vpack.c.b16 %v2415, %v2414
      %v2590 = vpack.c.b16 %v2417, %v2416
      %v2591 = vpack.c.b16 %v2419, %v2418
      %v2592 = vpack.c.b16 %v2421, %v2420
      %v2593 = vpack.c.b16 %v2423, %v2422
      %v2594 = vpack.c.b16 %v2425, %v2424
      %v2595 = vpack.c.b16 %v2427, %v2426
      %v2596 = vpack.c.b16 %v2429, %v2428
      %v2597 = vpack.c.b16 %v2431, %v2430
      %v2598 = vpack.c.b16 %v2433, %v2432
      %v2599 = vpack.c.b16 %v2435, %v2434
      %v2600 = vpack.c.b16 %v2437, %v2436
      %v2601 = vpack.c.b16 %v2439, %v2438
      %v2602 = vpack.c.b16 %v2441, %v2440
      %v2603 = vpack.c.b16 %v2443, %v2442
      %v2604 = vpack.c.b16 %v2445, %v2444
      %v2605 = vpack.c.b16 %v2447, %v2446
      %v2606 = vpack.c.b16 %v2449, %v2448
      %v2607 = vpack.c.b16 %v2451, %v2450
      %v2608 = vpack.c.b16 %v2453, %v2452
      %v2609 = vpack.c.b16 %v2455, %v2454
      %v2610 = vpack.c.b16 %v2457, %v2456
      %v2611 = vpack.c.b16 %v2459, %v2458
      %v2612 = vpack.c.b16 %v2461, %v2460
      %v2613 = vpack.c.b16 %v2463, %v2462
      %v2614 = vpack.c.b16 %v2465, %v2464
      %v2615 = vpack.c.b16 %v2467, %v2466
      %v2616 = vpack.c.b16 %v2469, %v2468
      %v2617 = vpack.c.b16 %v2471, %v2470
      %v2618 = vpack.c.b16 %v2473, %v2472
      %v2619 = vpack.c.b16 %v2475, %v2474
      %v2620 = vpack.c.b16 %v2477, %v2476
      %v2621 = vpack.c.b16 %v2479, %v2478
      %v2622 = vpack.c.b16 %v2481, %v2480
      %v2623 = vpack.c.b16 %v2483, %v2482
      %v2624 = vpack.c.b16 %v2485, %v2484
      %v2625 = vpack.c.b16 %v2487, %v2486
      %v2626 = vpack.c.b16 %v2489, %v2488
      %v2627 = vpack.c.b16 %v2491, %v2490
      %v2628 = vpack.c.b16 %v2493, %v2492
      %v2629 = vpack.c.b16 %v2495, %v2494
      %v2630 = vpack.c.b16 %v2497, %v2496
      %v2631 = vpack.c.b16 %v2499, %v2498
      %v2632 = vpack.c.b16 %v2501, %v2500
      %v2633 = vpack.c.b16 %v2503, %v2502
      %v2634 = vpack.c.b16 %v2505, %v2504
      %v2635 = vpack.c.b16 %v2507, %v2506
      %2764 = vmatprep.subr.bf16.mxu0 0
      %2765 = vmatpush1.bf16.msra.mxu0 %v2508
      %2766 = vmatprep.subr.bf16.mxu0 0
      %2767 = vmatpush1.bf16.msra.mxu0 %v2509
      %2768 = vmatprep.subr.bf16.mxu0 0
      %2769 = vmatpush1.bf16.msra.mxu0 %v2510
      %2770 = vmatprep.subr.bf16.mxu0 0
      %2771 = vmatpush1.bf16.msra.mxu0 %v2511
      %2772 = vmatprep.subr.bf16.mxu0 0
      %2773 = vmatpush1.bf16.msra.mxu0 %v2512
      %2774 = vmatprep.subr.bf16.mxu0 0
      %2775 = vmatpush1.bf16.msra.mxu0 %v2513
      %2776 = vmatprep.subr.bf16.mxu0 0
      %2777 = vmatpush1.bf16.msra.mxu0 %v2514
      %2778 = vmatprep.subr.bf16.mxu0 0
      %2779 = vmatpush1.bf16.msra.mxu0 %v2515
      %2780 = vmatprep.subr.bf16.mxu0 0
      %2781 = vmatpush1.bf16.msra.mxu0 %v2516
      %2782 = vmatprep.subr.bf16.mxu0 0
      %2783 = vmatpush1.bf16.msra.mxu0 %v2517
      %2784 = vmatprep.subr.bf16.mxu0 0
      %2785 = vmatpush1.bf16.msra.mxu0 %v2518
      %2786 = vmatprep.subr.bf16.mxu0 0
      %2787 = vmatpush1.bf16.msra.mxu0 %v2519
      %2788 = vmatprep.subr.bf16.mxu0 0
      %2789 = vmatpush1.bf16.msra.mxu0 %v2520
      %2790 = vmatprep.subr.bf16.mxu0 0
      %2791 = vmatpush1.bf16.msra.mxu0 %v2521
      %2792 = vmatprep.subr.bf16.mxu0 0
      %2793 = vmatpush1.bf16.msra.mxu0 %v2522
      %2794 = vmatprep.subr.bf16.mxu0 0
      %2795 = vmatpush1.bf16.msra.mxu0 %v2523
      %2796 = vmatprep.mubr.bf16.mxu0 %v450
      %2797 = vmatmul.mubr.bf16.gmra.mrb[0].mxu0 %v449
      %v2798 = vpop.f32.mrb[0].mxu0
      %v2799 = vadd.f32 %v1994, %v2798
      %v2800 = vpop.f32.mrb[0].mxu0
      %v2801 = vpop.f32.mrb[0].mxu0
      %v2802 = vadd.f32 %v1994, %v2801
      %v2803 = vpop.f32.mrb[0].mxu0
      %2804 = vmatprep.mubr.bf16.mxu0 %v612
      %2805 = vmatmul.mubr.bf16.gmra.mrb[0].mxu0 %v611
      %v2806 = vpop.f32.mrb[0].mxu0
      %v2807 = vadd.f32 %v1994, %v2806
      %v2808 = vpop.f32.mrb[0].mxu0
      %v2809 = vpop.f32.mrb[0].mxu0
      %v2810 = vadd.f32 %v1994, %v2809
      %v2811 = vpop.f32.mrb[0].mxu0
      %2812 = vmatprep.mubr.bf16.mxu0 %v773
      %2813 = vmatmul.mubr.bf16.gmra.mrb[0].mxu0 %v772
      %v2814 = vpop.f32.mrb[0].mxu0
      %v2815 = vadd.f32 %v1994, %v2814
      %v2816 = vpop.f32.mrb[0].mxu0
      %v2817 = vpop.f32.mrb[0].mxu0
      %v2818 = vadd.f32 %v1994, %v2817
      %v2819 = vpop.f32.mrb[0].mxu0
      %2820 = vmatprep.mubr.bf16.mxu0 %v934
      %2821 = vmatmul.mubr.bf16.gmra.mrb[0].mxu0 %v933
      %v2822 = vpop.f32.mrb[0].mxu0
      %v2823 = vadd.f32 %v1994, %v2822
      %v2824 = vpop.f32.mrb[0].mxu0
      %v2825 = vpop.f32.mrb[0].mxu0
      %v2826 = vadd.f32 %v1994, %v2825
      %v2827 = vpop.f32.mrb[0].mxu0
      %2828 = vmatprep.mubr.bf16.mxu0 %v1095
      %2829 = vmatmul.mubr.bf16.gmra.mrb[0].mxu0 %v1094
      %v2830 = vpop.f32.mrb[0].mxu0
      %v2831 = vadd.f32 %v1994, %v2830
      %v2832 = vpop.f32.mrb[0].mxu0
      %v2833 = vpop.f32.mrb[0].mxu0
      %v2834 = vadd.f32 %v1994, %v2833
      %v2835 = vpop.f32.mrb[0].mxu0
      %2836 = vmatprep.mubr.bf16.mxu0 %v1256
      %2837 = vmatmul.mubr.bf16.gmra.mrb[0].mxu0 %v1255
      %v2838 = vpop.f32.mrb[0].mxu0
      %v2839 = vadd.f32 %v1994, %v2838
      %v2840 = vpop.f32.mrb[0].mxu0
      %v2841 = vpop.f32.mrb[0].mxu0
      %v2842 = vadd.f32 %v1994, %v2841
      %v2843 = vpop.f32.mrb[0].mxu0
      %2844 = vmatprep.mubr.bf16.mxu0 %v1417
      %2845 = vmatmul.mubr.bf16.gmra.mrb[0].mxu0 %v1416
      %v2846 = vpop.f32.mrb[0].mxu0
      %v2847 = vadd.f32 %v1994, %v2846
      %v2848 = vpop.f32.mrb[0].mxu0
      %v2849 = vpop.f32.mrb[0].mxu0
      %v2850 = vadd.f32 %v1994, %v2849
      %v2851 = vpop.f32.mrb[0].mxu0
      %2852 = vmatprep.mubr.bf16.mxu0 %v1578
      %2853 = vmatmul.mubr.bf16.gmra.mrb[0].mxu0 %v1577
      %v2854 = vpop.f32.mrb[0].mxu0
      %v2855 = vadd.f32 %v1994, %v2854
      %v2856 = vpop.f32.mrb[0].mxu0
      %v2857 = vpop.f32.mrb[0].mxu0
      %v2858 = vadd.f32 %v1994, %v2857
      %v2859 = vpop.f32.mrb[0].mxu0
      %2860 = vdwg.mxu0
      %2861 = vmatprep.subr.bf16.mxu0 0
      %2862 = vmatpush1.bf16.msra.mxu0 %v2524
      %2863 = vmatprep.subr.bf16.mxu0 0
      %2864 = vmatpush1.bf16.msra.mxu0 %v2525
      %2865 = vmatprep.subr.bf16.mxu0 0
      %2866 = vmatpush1.bf16.msra.mxu0 %v2526
      %2867 = vmatprep.subr.bf16.mxu0 0
      %2868 = vmatpush1.bf16.msra.mxu0 %v2527
      %2869 = vmatprep.subr.bf16.mxu0 0
      %2870 = vmatpush1.bf16.msra.mxu0 %v2528
      %2871 = vmatprep.subr.bf16.mxu0 0
      %2872 = vmatpush1.bf16.msra.mxu0 %v2529
      %2873 = vmatprep.subr.bf16.mxu0 0
      %2874 = vmatpush1.bf16.msra.mxu0 %v2530
      %2875 = vmatprep.subr.bf16.mxu0 0
      %2876 = vmatpush1.bf16.msra.mxu0 %v2531
      %2877 = vmatprep.subr.bf16.mxu0 0
      %2878 = vmatpush1.bf16.msra.mxu0 %v2532
      %2879 = vmatprep.subr.bf16.mxu0 0
      %2880 = vmatpush1.bf16.msra.mxu0 %v2533
      %2881 = vmatprep.subr.bf16.mxu0 0
      %2882 = vmatpush1.bf16.msra.mxu0 %v2534
      %2883 = vmatprep.subr.bf16.mxu0 0
      %2884 = vmatpush1.bf16.msra.mxu0 %v2535
      %2885 = vmatprep.subr.bf16.mxu0 0
      %2886 = vmatpush1.bf16.msra.mxu0 %v2536
      %2887 = vmatprep.subr.bf16.mxu0 0
      %2888 = vmatpush1.bf16.msra.mxu0 %v2537
      %2889 = vmatprep.subr.bf16.mxu0 0
      %2890 = vmatpush1.bf16.msra.mxu0 %v2538
      %2891 = vmatprep.subr.bf16.mxu0 0
      %2892 = vmatpush1.bf16.msra.mxu0 %v2539
      %2893 = vmatprep.mubr.bf16.mxu0 %v456
      %2894 = vmatmul.mubr.bf16.gmra.mrb[0].mxu0 %v455
      %v2895 = vpop.f32.mrb[0].mxu0
      %v2896 = vadd.f32 %v2799, %v2895
      %v2897 = vpop.f32.mrb[0].mxu0
      %v2898 = vpop.f32.mrb[0].mxu0
      %v2899 = vadd.f32 %v2802, %v2898
      %v2900 = vpop.f32.mrb[0].mxu0
      %2901 = vmatprep.mubr.bf16.mxu0 %v618
      %2902 = vmatmul.mubr.bf16.gmra.mrb[0].mxu0 %v617
      %v2903 = vpop.f32.mrb[0].mxu0
      %v2904 = vadd.f32 %v2807, %v2903
      %v2905 = vpop.f32.mrb[0].mxu0
      %v2906 = vpop.f32.mrb[0].mxu0
      %v2907 = vadd.f32 %v2810, %v2906
      %v2908 = vpop.f32.mrb[0].mxu0
      %2909 = vmatprep.mubr.bf16.mxu0 %v779
      %2910 = vmatmul.mubr.bf16.gmra.mrb[0].mxu0 %v778
      %v2911 = vpop.f32.mrb[0].mxu0
      %v2912 = vadd.f32 %v2815, %v2911
      %v2913 = vpop.f32.mrb[0].mxu0
      %v2914 = vpop.f32.mrb[0].mxu0
      %v2915 = vadd.f32 %v2818, %v2914
      %v2916 = vpop.f32.mrb[0].mxu0
      %2917 = vmatprep.mubr.bf16.mxu0 %v940
      %2918 = vmatmul.mubr.bf16.gmra.mrb[0].mxu0 %v939
      %v2919 = vpop.f32.mrb[0].mxu0
      %v2920 = vadd.f32 %v2823, %v2919
      %v2921 = vpop.f32.mrb[0].mxu0
      %v2922 = vpop.f32.mrb[0].mxu0
      %v2923 = vadd.f32 %v2826, %v2922
      %v2924 = vpop.f32.mrb[0].mxu0
      %2925 = vmatprep.mubr.bf16.mxu0 %v1101
      %2926 = vmatmul.mubr.bf16.gmra.mrb[0].mxu0 %v1100
      %v2927 = vpop.f32.mrb[0].mxu0
      %v2928 = vadd.f32 %v2831, %v2927
      %v2929 = vpop.f32.mrb[0].mxu0
      %v2930 = vpop.f32.mrb[0].mxu0
      %v2931 = vadd.f32 %v2834, %v2930
      %v2932 = vpop.f32.mrb[0].mxu0
      %2933 = vmatprep.mubr.bf16.mxu0 %v1262
      %2934 = vmatmul.mubr.bf16.gmra.mrb[0].mxu0 %v1261
      %v2935 = vpop.f32.mrb[0].mxu0
      %v2936 = vadd.f32 %v2839, %v2935
      %v2937 = vpop.f32.mrb[0].mxu0
      %v2938 = vpop.f32.mrb[0].mxu0
      %v2939 = vadd.f32 %v2842, %v2938
      %v2940 = vpop.f32.mrb[0].mxu0
      %2941 = vmatprep.mubr.bf16.mxu0 %v1423
      %2942 = vmatmul.mubr.bf16.gmra.mrb[0].mxu0 %v1422
      %v2943 = vpop.f32.mrb[0].mxu0
      %v2944 = vadd.f32 %v2847, %v2943
      %v2945 = vpop.f32.mrb[0].mxu0
      %v2946 = vpop.f32.mrb[0].mxu0
      %v2947 = vadd.f32 %v2850, %v2946
      %v2948 = vpop.f32.mrb[0].mxu0
      %2949 = vmatprep.mubr.bf16.mxu0 %v1584
      %2950 = vmatmul.mubr.bf16.gmra.mrb[0].mxu0 %v1583
      %v2951 = vpop.f32.mrb[0].mxu0
      %v2952 = vadd.f32 %v2855, %v2951
      %v2953 = vpop.f32.mrb[0].mxu0
      %v2954 = vpop.f32.mrb[0].mxu0
      %v2955 = vadd.f32 %v2858, %v2954
      %v2956 = vpop.f32.mrb[0].mxu0
      %2957 = vdwg.mxu0
      %2958 = vmatprep.subr.bf16.mxu0 0
      %2959 = vmatpush1.bf16.msra.mxu0 %v2540
      %2960 = vmatprep.subr.bf16.mxu0 0
      %2961 = vmatpush1.bf16.msra.mxu0 %v2541
      %2962 = vmatprep.subr.bf16.mxu0 0
      %2963 = vmatpush1.bf16.msra.mxu0 %v2542
      %2964 = vmatprep.subr.bf16.mxu0 0
      %2965 = vmatpush1.bf16.msra.mxu0 %v2543
      %2966 = vmatprep.subr.bf16.mxu0 0
      %2967 = vmatpush1.bf16.msra.mxu0 %v2544
      %2968 = vmatprep.subr.bf16.mxu0 0
      %2969 = vmatpush1.bf16.msra.mxu0 %v2545
      %2970 = vmatprep.subr.bf16.mxu0 0
      %2971 = vmatpush1.bf16.msra.mxu0 %v2546
      %2972 = vmatprep.subr.bf16.mxu0 0
      %2973 = vmatpush1.bf16.msra.mxu0 %v2547
      %2974 = vmatprep.subr.bf16.mxu0 0
      %2975 = vmatpush1.bf16.msra.mxu0 %v2548
      %2976 = vmatprep.subr.bf16.mxu0 0
      %2977 = vmatpush1.bf16.msra.mxu0 %v2549
      %2978 = vmatprep.subr.bf16.mxu0 0
      %2979 = vmatpush1.bf16.msra.mxu0 %v2550
      %2980 = vmatprep.subr.bf16.mxu0 0
      %2981 = vmatpush1.bf16.msra.mxu0 %v2551
      %2982 = vmatprep.subr.bf16.mxu0 0
      %2983 = vmatpush1.bf16.msra.mxu0 %v2552
      %2984 = vmatprep.subr.bf16.mxu0 0
      %2985 = vmatpush1.bf16.msra.mxu0 %v2553
      %2986 = vmatprep.subr.bf16.mxu0 0
      %2987 = vmatpush1.bf16.msra.mxu0 %v2554
      %2988 = vmatprep.subr.bf16.mxu0 0
      %2989 = vmatpush1.bf16.msra.mxu0 %v2555
      %2990 = vmatprep.mubr.bf16.mxu0 %v462
      %2991 = vmatmul.mubr.bf16.gmra.mrb[0].mxu0 %v461
      %v2992 = vpop.f32.mrb[0].mxu0
      %v2993 = vadd.f32 %v2896, %v2992
      %v2994 = vpop.f32.mrb[0].mxu0
      %v2995 = vpop.f32.mrb[0].mxu0
      %v2996 = vadd.f32 %v2899, %v2995
      %v2997 = vpop.f32.mrb[0].mxu0
      %2998 = vmatprep.mubr.bf16.mxu0 %v624
      %2999 = vmatmul.mubr.bf16.gmra.mrb[0].mxu0 %v623
      %v3000 = vpop.f32.mrb[0].mxu0
      %v3001 = vadd.f32 %v2904, %v3000
      %v3002 = vpop.f32.mrb[0].mxu0
      %v3003 = vpop.f32.mrb[0].mxu0
      %v3004 = vadd.f32 %v2907, %v3003
      %v3005 = vpop.f32.mrb[0].mxu0
      %3006 = vmatprep.mubr.bf16.mxu0 %v785
      %3007 = vmatmul.mubr.bf16.gmra.mrb[0].mxu0 %v784
      %v3008 = vpop.f32.mrb[0].mxu0
      %v3009 = vadd.f32 %v2912, %v3008
      %v3010 = vpop.f32.mrb[0].mxu0
      %v3011 = vpop.f32.mrb[0].mxu0
      %v3012 = vadd.f32 %v2915, %v3011
      %v3013 = vpop.f32.mrb[0].mxu0
      %3014 = vmatprep.mubr.bf16.mxu0 %v946
      %3015 = vmatmul.mubr.bf16.gmra.mrb[0].mxu0 %v945
      %v3016 = vpop.f32.mrb[0].mxu0
      %v3017 = vadd.f32 %v2920, %v3016
      %v3018 = vpop.f32.mrb[0].mxu0
      %v3019 = vpop.f32.mrb[0].mxu0
      %v3020 = vadd.f32 %v2923, %v3019
      %v3021 = vpop.f32.mrb[0].mxu0
      %3022 = vmatprep.mubr.bf16.mxu0 %v1107
      %3023 = vmatmul.mubr.bf16.gmra.mrb[0].mxu0 %v1106
      %v3024 = vpop.f32.mrb[0].mxu0
      %v3025 = vadd.f32 %v2928, %v3024
      %v3026 = vpop.f32.mrb[0].mxu0
      %v3027 = vpop.f32.mrb[0].mxu0
      %v3028 = vadd.f32 %v2931, %v3027
      %v3029 = vpop.f32.mrb[0].mxu0
      %3030 = vmatprep.mubr.bf16.mxu0 %v1268
      %3031 = vmatmul.mubr.bf16.gmra.mrb[0].mxu0 %v1267
      %v3032 = vpop.f32.mrb[0].mxu0
      %v3033 = vadd.f32 %v2936, %v3032
      %v3034 = vpop.f32.mrb[0].mxu0
      %v3035 = vpop.f32.mrb[0].mxu0
      %v3036 = vadd.f32 %v2939, %v3035
      %v3037 = vpop.f32.mrb[0].mxu0
      %3038 = vmatprep.mubr.bf16.mxu0 %v1429
      %3039 = vmatmul.mubr.bf16.gmra.mrb[0].mxu0 %v1428
      %v3040 = vpop.f32.mrb[0].mxu0
      %v3041 = vadd.f32 %v2944, %v3040
      %v3042 = vpop.f32.mrb[0].mxu0
      %v3043 = vpop.f32.mrb[0].mxu0
      %v3044 = vadd.f32 %v2947, %v3043
      %v3045 = vpop.f32.mrb[0].mxu0
      %3046 = vmatprep.mubr.bf16.mxu0 %v1590
      %3047 = vmatmul.mubr.bf16.gmra.mrb[0].mxu0 %v1589
      %v3048 = vpop.f32.mrb[0].mxu0
      %v3049 = vadd.f32 %v2952, %v3048
      %v3050 = vpop.f32.mrb[0].mxu0
      %v3051 = vpop.f32.mrb[0].mxu0
      %v3052 = vadd.f32 %v2955, %v3051
      %v3053 = vpop.f32.mrb[0].mxu0
      %3054 = vdwg.mxu0
      %3055 = vmatprep.subr.bf16.mxu0 0
      %3056 = vmatpush1.bf16.msra.mxu0 %v2556
      %3057 = vmatprep.subr.bf16.mxu0 0
      %3058 = vmatpush1.bf16.msra.mxu0 %v2557
      %3059 = vmatprep.subr.bf16.mxu0 0
      %3060 = vmatpush1.bf16.msra.mxu0 %v2558
      %3061 = vmatprep.subr.bf16.mxu0 0
      %3062 = vmatpush1.bf16.msra.mxu0 %v2559
      %3063 = vmatprep.subr.bf16.mxu0 0
      %3064 = vmatpush1.bf16.msra.mxu0 %v2560
      %3065 = vmatprep.subr.bf16.mxu0 0
      %3066 = vmatpush1.bf16.msra.mxu0 %v2561
      %3067 = vmatprep.subr.bf16.mxu0 0
      %3068 = vmatpush1.bf16.msra.mxu0 %v2562
      %3069 = vmatprep.subr.bf16.mxu0 0
      %3070 = vmatpush1.bf16.msra.mxu0 %v2563
      %3071 = vmatprep.subr.bf16.mxu0 0
      %3072 = vmatpush1.bf16.msra.mxu0 %v2564
      %3073 = vmatprep.subr.bf16.mxu0 0
      %3074 = vmatpush1.bf16.msra.mxu0 %v2565
      %3075 = vmatprep.subr.bf16.mxu0 0
      %3076 = vmatpush1.bf16.msra.mxu0 %v2566
      %3077 = vmatprep.subr.bf16.mxu0 0
      %3078 = vmatpush1.bf16.msra.mxu0 %v2567
      %3079 = vmatprep.subr.bf16.mxu0 0
      %3080 = vmatpush1.bf16.msra.mxu0 %v2568
      %3081 = vmatprep.subr.bf16.mxu0 0
      %3082 = vmatpush1.bf16.msra.mxu0 %v2569
      %3083 = vmatprep.subr.bf16.mxu0 0
      %3084 = vmatpush1.bf16.msra.mxu0 %v2570
      %3085 = vmatprep.subr.bf16.mxu0 0
      %3086 = vmatpush1.bf16.msra.mxu0 %v2571
      %3087 = vmatprep.mubr.bf16.mxu0 %v468
      %3088 = vmatmul.mubr.bf16.gmra.mrb[0].mxu0 %v467
      %v3089 = vpop.f32.mrb[0].mxu0
      %v3090 = vadd.f32 %v2993, %v3089
      %v3091 = vpop.f32.mrb[0].mxu0
      %v3092 = vpop.f32.mrb[0].mxu0
      %v3093 = vadd.f32 %v2996, %v3092
      %v3094 = vpop.f32.mrb[0].mxu0
      %3095 = vmatprep.mubr.bf16.mxu0 %v630
      %3096 = vmatmul.mubr.bf16.gmra.mrb[0].mxu0 %v629
      %v3097 = vpop.f32.mrb[0].mxu0
      %v3098 = vadd.f32 %v3001, %v3097
      %v3099 = vpop.f32.mrb[0].mxu0
      %v3100 = vpop.f32.mrb[0].mxu0
      %v3101 = vadd.f32 %v3004, %v3100
      %v3102 = vpop.f32.mrb[0].mxu0
      %3103 = vmatprep.mubr.bf16.mxu0 %v791
      %3104 = vmatmul.mubr.bf16.gmra.mrb[0].mxu0 %v790
      %v3105 = vpop.f32.mrb[0].mxu0
      %v3106 = vadd.f32 %v3009, %v3105
      %v3107 = vpop.f32.mrb[0].mxu0
      %v3108 = vpop.f32.mrb[0].mxu0
      %v3109 = vadd.f32 %v3012, %v3108
      %v3110 = vpop.f32.mrb[0].mxu0
      %3111 = vmatprep.mubr.bf16.mxu0 %v952
      %3112 = vmatmul.mubr.bf16.gmra.mrb[0].mxu0 %v951
      %v3113 = vpop.f32.mrb[0].mxu0
      %v3114 = vadd.f32 %v3017, %v3113
      %v3115 = vpop.f32.mrb[0].mxu0
      %v3116 = vpop.f32.mrb[0].mxu0
      %v3117 = vadd.f32 %v3020, %v3116
      %v3118 = vpop.f32.mrb[0].mxu0
      %3119 = vmatprep.mubr.bf16.mxu0 %v1113
      %3120 = vmatmul.mubr.bf16.gmra.mrb[0].mxu0 %v1112
      %v3121 = vpop.f32.mrb[0].mxu0
      %v3122 = vadd.f32 %v3025, %v3121
      %v3123 = vpop.f32.mrb[0].mxu0
      %v3124 = vpop.f32.mrb[0].mxu0
      %v3125 = vadd.f32 %v3028, %v3124
      %v3126 = vpop.f32.mrb[0].mxu0
      %3127 = vmatprep.mubr.bf16.mxu0 %v1274
      %3128 = vmatmul.mubr.bf16.gmra.mrb[0].mxu0 %v1273
      %v3129 = vpop.f32.mrb[0].mxu0
      %v3130 = vadd.f32 %v3033, %v3129
      %v3131 = vpop.f32.mrb[0].mxu0
      %v3132 = vpop.f32.mrb[0].mxu0
      %v3133 = vadd.f32 %v3036, %v3132
      %v3134 = vpop.f32.mrb[0].mxu0
      %3135 = vmatprep.mubr.bf16.mxu0 %v1435
      %3136 = vmatmul.mubr.bf16.gmra.mrb[0].mxu0 %v1434
      %v3137 = vpop.f32.mrb[0].mxu0
      %v3138 = vadd.f32 %v3041, %v3137
      %v3139 = vpop.f32.mrb[0].mxu0
      %v3140 = vpop.f32.mrb[0].mxu0
      %v3141 = vadd.f32 %v3044, %v3140
      %v3142 = vpop.f32.mrb[0].mxu0
      %3143 = vmatprep.mubr.bf16.mxu0 %v1596
      %3144 = vmatmul.mubr.bf16.gmra.mrb[0].mxu0 %v1595
      %v3145 = vpop.f32.mrb[0].mxu0
      %v3146 = vadd.f32 %v3049, %v3145
      %v3147 = vpop.f32.mrb[0].mxu0
      %v3148 = vpop.f32.mrb[0].mxu0
      %v3149 = vadd.f32 %v3052, %v3148
      %v3150 = vpop.f32.mrb[0].mxu0
      %3151 = vdwg.mxu0
      %3152 = vmatprep.subr.bf16.mxu0 0
      %3153 = vmatpush1.bf16.msra.mxu0 %v2572
      %3154 = vmatprep.subr.bf16.mxu0 0
      %3155 = vmatpush1.bf16.msra.mxu0 %v2573
      %3156 = vmatprep.subr.bf16.mxu0 0
      %3157 = vmatpush1.bf16.msra.mxu0 %v2574
      %3158 = vmatprep.subr.bf16.mxu0 0
      %3159 = vmatpush1.bf16.msra.mxu0 %v2575
      %3160 = vmatprep.subr.bf16.mxu0 0
      %3161 = vmatpush1.bf16.msra.mxu0 %v2576
      %3162 = vmatprep.subr.bf16.mxu0 0
      %3163 = vmatpush1.bf16.msra.mxu0 %v2577
      %3164 = vmatprep.subr.bf16.mxu0 0
      %3165 = vmatpush1.bf16.msra.mxu0 %v2578
      %3166 = vmatprep.subr.bf16.mxu0 0
      %3167 = vmatpush1.bf16.msra.mxu0 %v2579
      %3168 = vmatprep.subr.bf16.mxu0 0
      %3169 = vmatpush1.bf16.msra.mxu0 %v2580
      %3170 = vmatprep.subr.bf16.mxu0 0
      %3171 = vmatpush1.bf16.msra.mxu0 %v2581
      %3172 = vmatprep.subr.bf16.mxu0 0
      %3173 = vmatpush1.bf16.msra.mxu0 %v2582
      %3174 = vmatprep.subr.bf16.mxu0 0
      %3175 = vmatpush1.bf16.msra.mxu0 %v2583
      %3176 = vmatprep.subr.bf16.mxu0 0
      %3177 = vmatpush1.bf16.msra.mxu0 %v2584
      %3178 = vmatprep.subr.bf16.mxu0 0
      %3179 = vmatpush1.bf16.msra.mxu0 %v2585
      %3180 = vmatprep.subr.bf16.mxu0 0
      %3181 = vmatpush1.bf16.msra.mxu0 %v2586
      %3182 = vmatprep.subr.bf16.mxu0 0
      %3183 = vmatpush1.bf16.msra.mxu0 %v2587
      %3184 = vmatprep.mubr.bf16.mxu0 %v525
      %3185 = vmatmul.mubr.bf16.gmra.mrb[0].mxu0 %v513
      %v3186 = vpop.f32.mrb[0].mxu0
      %v3187 = vadd.f32 %v3090, %v3186
      %v3188 = vpop.f32.mrb[0].mxu0
      %v3189 = vpop.f32.mrb[0].mxu0
      %v3190 = vadd.f32 %v3093, %v3189
      %v3191 = vpop.f32.mrb[0].mxu0
      %3192 = vmatprep.mubr.bf16.mxu0 %v686
      %3193 = vmatmul.mubr.bf16.gmra.mrb[0].mxu0 %v674
      %v3194 = vpop.f32.mrb[0].mxu0
      %v3195 = vadd.f32 %v3098, %v3194
      %v3196 = vpop.f32.mrb[0].mxu0
      %v3197 = vpop.f32.mrb[0].mxu0
      %v3198 = vadd.f32 %v3101, %v3197
      %v3199 = vpop.f32.mrb[0].mxu0
      %3200 = vmatprep.mubr.bf16.mxu0 %v847
      %3201 = vmatmul.mubr.bf16.gmra.mrb[0].mxu0 %v835
      %v3202 = vpop.f32.mrb[0].mxu0
      %v3203 = vadd.f32 %v3106, %v3202
      %v3204 = vpop.f32.mrb[0].mxu0
      %v3205 = vpop.f32.mrb[0].mxu0
      %v3206 = vadd.f32 %v3109, %v3205
      %v3207 = vpop.f32.mrb[0].mxu0
      %3208 = vmatprep.mubr.bf16.mxu0 %v1008
      %3209 = vmatmul.mubr.bf16.gmra.mrb[0].mxu0 %v996
      %v3210 = vpop.f32.mrb[0].mxu0
      %v3211 = vadd.f32 %v3114, %v3210
      %v3212 = vpop.f32.mrb[0].mxu0
      %v3213 = vpop.f32.mrb[0].mxu0
      %v3214 = vadd.f32 %v3117, %v3213
      %v3215 = vpop.f32.mrb[0].mxu0
      %3216 = vmatprep.mubr.bf16.mxu0 %v1169
      %3217 = vmatmul.mubr.bf16.gmra.mrb[0].mxu0 %v1157
      %v3218 = vpop.f32.mrb[0].mxu0
      %v3219 = vadd.f32 %v3122, %v3218
      %v3220 = vpop.f32.mrb[0].mxu0
      %v3221 = vpop.f32.mrb[0].mxu0
      %v3222 = vadd.f32 %v3125, %v3221
      %v3223 = vpop.f32.mrb[0].mxu0
      %3224 = vmatprep.mubr.bf16.mxu0 %v1330
      %3225 = vmatmul.mubr.bf16.gmra.mrb[0].mxu0 %v1318
      %v3226 = vpop.f32.mrb[0].mxu0
      %v3227 = vadd.f32 %v3130, %v3226
      %v3228 = vpop.f32.mrb[0].mxu0
      %v3229 = vpop.f32.mrb[0].mxu0
      %v3230 = vadd.f32 %v3133, %v3229
      %v3231 = vpop.f32.mrb[0].mxu0
      %3232 = vmatprep.mubr.bf16.mxu0 %v1491
      %3233 = vmatmul.mubr.bf16.gmra.mrb[0].mxu0 %v1479
      %v3234 = vpop.f32.mrb[0].mxu0
      %v3235 = vadd.f32 %v3138, %v3234
      %v3236 = vpop.f32.mrb[0].mxu0
      %v3237 = vpop.f32.mrb[0].mxu0
      %v3238 = vadd.f32 %v3141, %v3237
      %v3239 = vpop.f32.mrb[0].mxu0
      %3240 = vmatprep.mubr.bf16.mxu0 %v1652
      %3241 = vmatmul.mubr.bf16.gmra.mrb[0].mxu0 %v1640
      %v3242 = vpop.f32.mrb[0].mxu0
      %v3243 = vadd.f32 %v3146, %v3242
      %v3244 = vpop.f32.mrb[0].mxu0
      %v3245 = vpop.f32.mrb[0].mxu0
      %v3246 = vadd.f32 %v3149, %v3245
      %v3247 = vpop.f32.mrb[0].mxu0
      %3248 = vdwg.mxu0
      %3249 = vmatprep.subr.bf16.mxu0 0
      %3250 = vmatpush1.bf16.msra.mxu0 %v2588
      %3251 = vmatprep.subr.bf16.mxu0 0
      %3252 = vmatpush1.bf16.msra.mxu0 %v2589
      %3253 = vmatprep.subr.bf16.mxu0 0
      %3254 = vmatpush1.bf16.msra.mxu0 %v2590
      %3255 = vmatprep.subr.bf16.mxu0 0
      %3256 = vmatpush1.bf16.msra.mxu0 %v2591
      %3257 = vmatprep.subr.bf16.mxu0 0
      %3258 = vmatpush1.bf16.msra.mxu0 %v2592
      %3259 = vmatprep.subr.bf16.mxu0 0
      %3260 = vmatpush1.bf16.msra.mxu0 %v2593
      %3261 = vmatprep.subr.bf16.mxu0 0
      %3262 = vmatpush1.bf16.msra.mxu0 %v2594
      %3263 = vmatprep.subr.bf16.mxu0 0
      %3264 = vmatpush1.bf16.msra.mxu0 %v2595
      %3265 = vmatprep.subr.bf16.mxu0 0
      %3266 = vmatpush1.bf16.msra.mxu0 %v2596
      %3267 = vmatprep.subr.bf16.mxu0 0
      %3268 = vmatpush1.bf16.msra.mxu0 %v2597
      %3269 = vmatprep.subr.bf16.mxu0 0
      %3270 = vmatpush1.bf16.msra.mxu0 %v2598
      %3271 = vmatprep.subr.bf16.mxu0 0
      %3272 = vmatpush1.bf16.msra.mxu0 %v2599
      %3273 = vmatprep.subr.bf16.mxu0 0
      %3274 = vmatpush1.bf16.msra.mxu0 %v2600
      %3275 = vmatprep.subr.bf16.mxu0 0
      %3276 = vmatpush1.bf16.msra.mxu0 %v2601
      %3277 = vmatprep.subr.bf16.mxu0 0
      %3278 = vmatpush1.bf16.msra.mxu0 %v2602
      %3279 = vmatprep.subr.bf16.mxu0 0
      %3280 = vmatpush1.bf16.msra.mxu0 %v2603
      %3281 = vmatprep.mubr.bf16.mxu0 %v551
      %3282 = vmatmul.mubr.bf16.gmra.mrb[0].mxu0 %v539
      %v3283 = vpop.f32.mrb[0].mxu0
      %v3284 = vadd.f32 %v3187, %v3283
      %v3285 = vpop.f32.mrb[0].mxu0
      %v3286 = vpop.f32.mrb[0].mxu0
      %v3287 = vadd.f32 %v3190, %v3286
      %v3288 = vpop.f32.mrb[0].mxu0
      %3289 = vmatprep.mubr.bf16.mxu0 %v712
      %3290 = vmatmul.mubr.bf16.gmra.mrb[0].mxu0 %v700
      %v3291 = vpop.f32.mrb[0].mxu0
      %v3292 = vadd.f32 %v3195, %v3291
      %v3293 = vpop.f32.mrb[0].mxu0
      %v3294 = vpop.f32.mrb[0].mxu0
      %v3295 = vadd.f32 %v3198, %v3294
      %v3296 = vpop.f32.mrb[0].mxu0
      %3297 = vmatprep.mubr.bf16.mxu0 %v873
      %3298 = vmatmul.mubr.bf16.gmra.mrb[0].mxu0 %v861
      %v3299 = vpop.f32.mrb[0].mxu0
      %v3300 = vadd.f32 %v3203, %v3299
      %v3301 = vpop.f32.mrb[0].mxu0
      %v3302 = vpop.f32.mrb[0].mxu0
      %v3303 = vadd.f32 %v3206, %v3302
      %v3304 = vpop.f32.mrb[0].mxu0
      %3305 = vmatprep.mubr.bf16.mxu0 %v1034
      %3306 = vmatmul.mubr.bf16.gmra.mrb[0].mxu0 %v1022
      %v3307 = vpop.f32.mrb[0].mxu0
      %v3308 = vadd.f32 %v3211, %v3307
      %v3309 = vpop.f32.mrb[0].mxu0
      %v3310 = vpop.f32.mrb[0].mxu0
      %v3311 = vadd.f32 %v3214, %v3310
      %v3312 = vpop.f32.mrb[0].mxu0
      %3313 = vmatprep.mubr.bf16.mxu0 %v1195
      %3314 = vmatmul.mubr.bf16.gmra.mrb[0].mxu0 %v1183
      %v3315 = vpop.f32.mrb[0].mxu0
      %v3316 = vadd.f32 %v3219, %v3315
      %v3317 = vpop.f32.mrb[0].mxu0
      %v3318 = vpop.f32.mrb[0].mxu0
      %v3319 = vadd.f32 %v3222, %v3318
      %v3320 = vpop.f32.mrb[0].mxu0
      %3321 = vmatprep.mubr.bf16.mxu0 %v1356
      %3322 = vmatmul.mubr.bf16.gmra.mrb[0].mxu0 %v1344
      %v3323 = vpop.f32.mrb[0].mxu0
      %v3324 = vadd.f32 %v3227, %v3323
      %v3325 = vpop.f32.mrb[0].mxu0
      %v3326 = vpop.f32.mrb[0].mxu0
      %v3327 = vadd.f32 %v3230, %v3326
      %v3328 = vpop.f32.mrb[0].mxu0
      %3329 = vmatprep.mubr.bf16.mxu0 %v1517
      %3330 = vmatmul.mubr.bf16.gmra.mrb[0].mxu0 %v1505
      %v3331 = vpop.f32.mrb[0].mxu0
      %v3332 = vadd.f32 %v3235, %v3331
      %v3333 = vpop.f32.mrb[0].mxu0
      %v3334 = vpop.f32.mrb[0].mxu0
      %v3335 = vadd.f32 %v3238, %v3334
      %v3336 = vpop.f32.mrb[0].mxu0
      %3337 = vmatprep.mubr.bf16.mxu0 %v1678
      %3338 = vmatmul.mubr.bf16.gmra.mrb[0].mxu0 %v1666
      %v3339 = vpop.f32.mrb[0].mxu0
      %v3340 = vadd.f32 %v3243, %v3339
      %v3341 = vpop.f32.mrb[0].mxu0
      %v3342 = vpop.f32.mrb[0].mxu0
      %v3343 = vadd.f32 %v3246, %v3342
      %v3344 = vpop.f32.mrb[0].mxu0
      %3345 = vdwg.mxu0
      %3346 = vmatprep.subr.bf16.mxu0 0
      %3347 = vmatpush1.bf16.msra.mxu0 %v2604
      %3348 = vmatprep.subr.bf16.mxu0 0
      %3349 = vmatpush1.bf16.msra.mxu0 %v2605
      %3350 = vmatprep.subr.bf16.mxu0 0
      %3351 = vmatpush1.bf16.msra.mxu0 %v2606
      %3352 = vmatprep.subr.bf16.mxu0 0
      %3353 = vmatpush1.bf16.msra.mxu0 %v2607
      %3354 = vmatprep.subr.bf16.mxu0 0
      %3355 = vmatpush1.bf16.msra.mxu0 %v2608
      %3356 = vmatprep.subr.bf16.mxu0 0
      %3357 = vmatpush1.bf16.msra.mxu0 %v2609
      %3358 = vmatprep.subr.bf16.mxu0 0
      %3359 = vmatpush1.bf16.msra.mxu0 %v2610
      %3360 = vmatprep.subr.bf16.mxu0 0
      %3361 = vmatpush1.bf16.msra.mxu0 %v2611
      %3362 = vmatprep.subr.bf16.mxu0 0
      %3363 = vmatpush1.bf16.msra.mxu0 %v2612
      %3364 = vmatprep.subr.bf16.mxu0 0
      %3365 = vmatpush1.bf16.msra.mxu0 %v2613
      %3366 = vmatprep.subr.bf16.mxu0 0
      %3367 = vmatpush1.bf16.msra.mxu0 %v2614
      %3368 = vmatprep.subr.bf16.mxu0 0
      %3369 = vmatpush1.bf16.msra.mxu0 %v2615
      %3370 = vmatprep.subr.bf16.mxu0 0
      %3371 = vmatpush1.bf16.msra.mxu0 %v2616
      %3372 = vmatprep.subr.bf16.mxu0 0
      %3373 = vmatpush1.bf16.msra.mxu0 %v2617
      %3374 = vmatprep.subr.bf16.mxu0 0
      %3375 = vmatpush1.bf16.msra.mxu0 %v2618
      %3376 = vmatprep.subr.bf16.mxu0 0
      %3377 = vmatpush1.bf16.msra.mxu0 %v2619
      %3378 = vmatprep.mubr.bf16.mxu0 %v577
      %3379 = vmatmul.mubr.bf16.gmra.mrb[0].mxu0 %v565
      %v3380 = vpop.f32.mrb[0].mxu0
      %v3381 = vadd.f32 %v3284, %v3380
      %v3382 = vpop.f32.mrb[0].mxu0
      %v3383 = vpop.f32.mrb[0].mxu0
      %v3384 = vadd.f32 %v3287, %v3383
      %v3385 = vpop.f32.mrb[0].mxu0
      %3386 = vmatprep.mubr.bf16.mxu0 %v738
      %3387 = vmatmul.mubr.bf16.gmra.mrb[0].mxu0 %v726
      %v3388 = vpop.f32.mrb[0].mxu0
      %v3389 = vadd.f32 %v3292, %v3388
      %v3390 = vpop.f32.mrb[0].mxu0
      %v3391 = vpop.f32.mrb[0].mxu0
      %v3392 = vadd.f32 %v3295, %v3391
      %v3393 = vpop.f32.mrb[0].mxu0
      %3394 = vmatprep.mubr.bf16.mxu0 %v899
      %3395 = vmatmul.mubr.bf16.gmra.mrb[0].mxu0 %v887
      %v3396 = vpop.f32.mrb[0].mxu0
      %v3397 = vadd.f32 %v3300, %v3396
      %v3398 = vpop.f32.mrb[0].mxu0
      %v3399 = vpop.f32.mrb[0].mxu0
      %v3400 = vadd.f32 %v3303, %v3399
      %v3401 = vpop.f32.mrb[0].mxu0
      %3402 = vmatprep.mubr.bf16.mxu0 %v1060
      %3403 = vmatmul.mubr.bf16.gmra.mrb[0].mxu0 %v1048
      %v3404 = vpop.f32.mrb[0].mxu0
      %v3405 = vadd.f32 %v3308, %v3404
      %v3406 = vpop.f32.mrb[0].mxu0
      %v3407 = vpop.f32.mrb[0].mxu0
      %v3408 = vadd.f32 %v3311, %v3407
      %v3409 = vpop.f32.mrb[0].mxu0
      %3410 = vmatprep.mubr.bf16.mxu0 %v1221
      %3411 = vmatmul.mubr.bf16.gmra.mrb[0].mxu0 %v1209
      %v3412 = vpop.f32.mrb[0].mxu0
      %v3413 = vadd.f32 %v3316, %v3412
      %v3414 = vpop.f32.mrb[0].mxu0
      %v3415 = vpop.f32.mrb[0].mxu0
      %v3416 = vadd.f32 %v3319, %v3415
      %v3417 = vpop.f32.mrb[0].mxu0
      %3418 = vmatprep.mubr.bf16.mxu0 %v1382
      %3419 = vmatmul.mubr.bf16.gmra.mrb[0].mxu0 %v1370
      %v3420 = vpop.f32.mrb[0].mxu0
      %v3421 = vadd.f32 %v3324, %v3420
      %v3422 = vpop.f32.mrb[0].mxu0
      %v3423 = vpop.f32.mrb[0].mxu0
      %v3424 = vadd.f32 %v3327, %v3423
      %v3425 = vpop.f32.mrb[0].mxu0
      %3426 = vmatprep.mubr.bf16.mxu0 %v1543
      %3427 = vmatmul.mubr.bf16.gmra.mrb[0].mxu0 %v1531
      %v3428 = vpop.f32.mrb[0].mxu0
      %v3429 = vadd.f32 %v3332, %v3428
      %v3430 = vpop.f32.mrb[0].mxu0
      %v3431 = vpop.f32.mrb[0].mxu0
      %v3432 = vadd.f32 %v3335, %v3431
      %v3433 = vpop.f32.mrb[0].mxu0
      %3434 = vmatprep.mubr.bf16.mxu0 %v1704
      %3435 = vmatmul.mubr.bf16.gmra.mrb[0].mxu0 %v1692
      %v3436 = vpop.f32.mrb[0].mxu0
      %v3437 = vadd.f32 %v3340, %v3436
      %v3438 = vpop.f32.mrb[0].mxu0
      %v3439 = vpop.f32.mrb[0].mxu0
      %v3440 = vadd.f32 %v3343, %v3439
      %v3441 = vpop.f32.mrb[0].mxu0
      %3442 = vdwg.mxu0
      %3443 = vmatprep.subr.bf16.mxu0 0
      %3444 = vmatpush1.bf16.msra.mxu0 %v2620
      %3445 = vmatprep.subr.bf16.mxu0 0
      %3446 = vmatpush1.bf16.msra.mxu0 %v2621
      %3447 = vmatprep.subr.bf16.mxu0 0
      %3448 = vmatpush1.bf16.msra.mxu0 %v2622
      %3449 = vmatprep.subr.bf16.mxu0 0
      %3450 = vmatpush1.bf16.msra.mxu0 %v2623
      %3451 = vmatprep.subr.bf16.mxu0 0
      %3452 = vmatpush1.bf16.msra.mxu0 %v2624
      %3453 = vmatprep.subr.bf16.mxu0 0
      %3454 = vmatpush1.bf16.msra.mxu0 %v2625
      %3455 = vmatprep.subr.bf16.mxu0 0
      %3456 = vmatpush1.bf16.msra.mxu0 %v2626
      %3457 = vmatprep.subr.bf16.mxu0 0
      %3458 = vmatpush1.bf16.msra.mxu0 %v2627
      %3459 = vmatprep.subr.bf16.mxu0 0
      %3460 = vmatpush1.bf16.msra.mxu0 %v2628
      %3461 = vmatprep.subr.bf16.mxu0 0
      %3462 = vmatpush1.bf16.msra.mxu0 %v2629
      %3463 = vmatprep.subr.bf16.mxu0 0
      %3464 = vmatpush1.bf16.msra.mxu0 %v2630
      %3465 = vmatprep.subr.bf16.mxu0 0
      %3466 = vmatpush1.bf16.msra.mxu0 %v2631
      %3467 = vmatprep.subr.bf16.mxu0 0
      %3468 = vmatpush1.bf16.msra.mxu0 %v2632
      %3469 = vmatprep.subr.bf16.mxu0 0
      %3470 = vmatpush1.bf16.msra.mxu0 %v2633
      %3471 = vmatprep.subr.bf16.mxu0 0
      %3472 = vmatpush1.bf16.msra.mxu0 %v2634
      %3473 = vmatprep.subr.bf16.mxu0 0
      %3474 = vmatpush1.bf16.msra.mxu0 %v2635
      %3475 = vmatprep.mubr.bf16.mxu0 %v603
      %3476 = vmatmul.mubr.bf16.gmra.mrb[0].mxu0 %v591
      %v3477 = vpop.f32.mrb[0].mxu0
      %v3478 = vadd.f32 %v3381, %v3477
      %v3479 = vpop.f32.mrb[0].mxu0
      %v3480 = vpop.f32.mrb[0].mxu0
      %v3481 = vadd.f32 %v3384, %v3480
      %v3482 = vpop.f32.mrb[0].mxu0
      %3483 = vmatprep.mubr.bf16.mxu0 %v764
      %3484 = vmatmul.mubr.bf16.gmra.mrb[0].mxu0 %v752
      %v3485 = vpop.f32.mrb[0].mxu0
      %v3486 = vadd.f32 %v3389, %v3485
      %v3487 = vpop.f32.mrb[0].mxu0
      %v3488 = vpop.f32.mrb[0].mxu0
      %v3489 = vadd.f32 %v3392, %v3488
      %v3490 = vpop.f32.mrb[0].mxu0
      %3491 = vmatprep.mubr.bf16.mxu0 %v925
      %3492 = vmatmul.mubr.bf16.gmra.mrb[0].mxu0 %v913
      %v3493 = vpop.f32.mrb[0].mxu0
      %v3494 = vadd.f32 %v3397, %v3493
      %v3495 = vpop.f32.mrb[0].mxu0
      %v3496 = vpop.f32.mrb[0].mxu0
      %v3497 = vadd.f32 %v3400, %v3496
      %v3498 = vpop.f32.mrb[0].mxu0
      %3499 = vmatprep.mubr.bf16.mxu0 %v1086
      %3500 = vmatmul.mubr.bf16.gmra.mrb[0].mxu0 %v1074
      %v3501 = vpop.f32.mrb[0].mxu0
      %v3502 = vadd.f32 %v3405, %v3501
      %v3503 = vpop.f32.mrb[0].mxu0
      %v3504 = vpop.f32.mrb[0].mxu0
      %v3505 = vadd.f32 %v3408, %v3504
      %v3506 = vpop.f32.mrb[0].mxu0
      %3507 = vmatprep.mubr.bf16.mxu0 %v1247
      %3508 = vmatmul.mubr.bf16.gmra.mrb[0].mxu0 %v1235
      %v3509 = vpop.f32.mrb[0].mxu0
      %v3510 = vadd.f32 %v3413, %v3509
      %v3511 = vpop.f32.mrb[0].mxu0
      %v3512 = vpop.f32.mrb[0].mxu0
      %v3513 = vadd.f32 %v3416, %v3512
      %v3514 = vpop.f32.mrb[0].mxu0
      %3515 = vmatprep.mubr.bf16.mxu0 %v1408
      %3516 = vmatmul.mubr.bf16.gmra.mrb[0].mxu0 %v1396
      %v3517 = vpop.f32.mrb[0].mxu0
      %v3518 = vadd.f32 %v3421, %v3517
      %v3519 = vpop.f32.mrb[0].mxu0
      %v3520 = vpop.f32.mrb[0].mxu0
      %v3521 = vadd.f32 %v3424, %v3520
      %v3522 = vpop.f32.mrb[0].mxu0
      %3523 = vmatprep.mubr.bf16.mxu0 %v1569
      %3524 = vmatmul.mubr.bf16.gmra.mrb[0].mxu0 %v1557
      %v3525 = vpop.f32.mrb[0].mxu0
      %v3526 = vadd.f32 %v3429, %v3525
      %v3527 = vpop.f32.mrb[0].mxu0
      %v3528 = vpop.f32.mrb[0].mxu0
      %v3529 = vadd.f32 %v3432, %v3528
      %v3530 = vpop.f32.mrb[0].mxu0
      %3531 = vmatprep.mubr.bf16.mxu0 %v1730
      %3532 = vmatmul.mubr.bf16.gmra.mrb[0].mxu0 %v1718
      %v3533 = vpop.f32.mrb[0].mxu0
      %v3534 = vadd.f32 %v3437, %v3533
      %v3535 = vpop.f32.mrb[0].mxu0
      %v3536 = vpop.f32.mrb[0].mxu0
      %v3537 = vadd.f32 %v3440, %v3536
      %v3538 = vpop.f32.mrb[0].mxu0
      %3539 = vdwg.mxu0
      %v3540 = vmax.f32 %v3478, 0.0
      %v3541 = vmax.f32 %v3481, 0.0
      %v3542 = vmax.f32 %v3486, 0.0
      %v3543 = vmax.f32 %v3489, 0.0
      %v3544 = vmax.f32 %v3494, 0.0
      %v3545 = vmax.f32 %v3497, 0.0
      %v3546 = vmax.f32 %v3502, 0.0
      %v3547 = vmax.f32 %v3505, 0.0
      %v3548 = vmax.f32 %v3510, 0.0
      %v3549 = vmax.f32 %v3513, 0.0
      %v3550 = vmax.f32 %v3518, 0.0
      %v3551 = vmax.f32 %v3521, 0.0
      %v3552 = vmax.f32 %v3526, 0.0
      %v3553 = vmax.f32 %v3529, 0.0
      %v3554 = vmax.f32 %v3534, 0.0
      %v3555 = vmax.f32 %v3537, 0.0
      %3556 = vst [vmem:[#allocation2] sm:$0xff] %v3540
      %3557 = vst [vmem:[#allocation2 + $0x8] sm:$0xff] %v3541
      %3558 = vst [vmem:[#allocation2 + $0x10] sm:$0xff] %v3542
      %3559 = vst [vmem:[#allocation2 + $0x18] sm:$0xff] %v3543
      %3560 = vst [vmem:[#allocation2 + $0x20] sm:$0xff] %v3544
      %3561 = vst [vmem:[#allocation2 + $0x28] sm:$0xff] %v3545
      %3562 = vst [vmem:[#allocation2 + $0x30] sm:$0xff] %v3546
      %3563 = vst [vmem:[#allocation2 + $0x38] sm:$0xff] %v3547
      %3564 = vst [vmem:[#allocation2 + $0x40] sm:$0xff] %v3548
      %3565 = vst [vmem:[#allocation2 + $0x48] sm:$0xff] %v3549
      %3566 = vst [vmem:[#allocation2 + $0x50] sm:$0xff] %v3550
      %3567 = vst [vmem:[#allocation2 + $0x58] sm:$0xff] %v3551
      %3568 = vst [vmem:[#allocation2 + $0x60] sm:$0xff] %v3552
      %3569 = vst [vmem:[#allocation2 + $0x68] sm:$0xff] %v3553
      %3570 = vst [vmem:[#allocation2 + $0x70] sm:$0xff] %v3554
      %3571 = vst [vmem:[#allocation2 + $0x78] sm:$0xff] %v3555
      %v3572 = vld [vmem:[#allocation2] ss:$2 sm:$0x3f]
      %s3573 = scalar_lea.vmem [#allocation2], 1
      %v3574 = vld [vmem:[%s3573] ss:$2 sm:$0x3f]
      %s3575 = scalar_lea.vmem [#allocation2], 2
      %v3576 = vld [vmem:[%s3575] ss:$2 sm:$0x3f]
      %s3577 = scalar_lea.vmem [#allocation2], 3
      %v3578 = vld [vmem:[%s3577] ss:$2 sm:$0x3f]
      %s3579 = scalar_lea.vmem [#allocation2], 16
      %v3580 = vld [vmem:[%s3579] ss:$2 sm:$0x3f]
      %s3581 = scalar_lea.vmem [#allocation2], 17
      %v3582 = vld [vmem:[%s3581] ss:$2 sm:$0x3f]
      %s3583 = scalar_lea.vmem [#allocation2], 18
      %v3584 = vld [vmem:[%s3583] ss:$2 sm:$0x3f]
      %s3585 = scalar_lea.vmem [#allocation2], 19
      %v3586 = vld [vmem:[%s3585] ss:$2 sm:$0x3f]
      %s3587 = scalar_lea.vmem [#allocation2], 32
      %v3588 = vld [vmem:[%s3587] ss:$2 sm:$0x3f]
      %s3589 = scalar_lea.vmem [#allocation2], 33
      %v3590 = vld [vmem:[%s3589] ss:$2 sm:$0x3f]
      %s3591 = scalar_lea.vmem [#allocation2], 34
      %v3592 = vld [vmem:[%s3591] ss:$2 sm:$0x3f]
      %s3593 = scalar_lea.vmem [#allocation2], 35
      %v3594 = vld [vmem:[%s3593] ss:$2 sm:$0x3f]
      %s3595 = scalar_lea.vmem [#allocation2], 48
      %v3596 = vld [vmem:[%s3595] ss:$2 sm:$0x3f]
      %s3597 = scalar_lea.vmem [#allocation2], 49
      %v3598 = vld [vmem:[%s3597] ss:$2 sm:$0x3f]
      %s3599 = scalar_lea.vmem [#allocation2], 50
      %v3600 = vld [vmem:[%s3599] ss:$2 sm:$0x3f]
      %s3601 = scalar_lea.vmem [#allocation2], 51
      %v3602 = vld [vmem:[%s3601] ss:$2 sm:$0x3f]
      %s3603 = scalar_lea.vmem [#allocation2], 64
      %v3604 = vld [vmem:[%s3603] ss:$2 sm:$0x3f]
      %s3605 = scalar_lea.vmem [#allocation2], 65
      %v3606 = vld [vmem:[%s3605] ss:$2 sm:$0x3f]
      %s3607 = scalar_lea.vmem [#allocation2], 66
      %v3608 = vld [vmem:[%s3607] ss:$2 sm:$0x3f]
      %s3609 = scalar_lea.vmem [#allocation2], 67
      %v3610 = vld [vmem:[%s3609] ss:$2 sm:$0x3f]
      %s3611 = scalar_lea.vmem [#allocation2], 80
      %v3612 = vld [vmem:[%s3611] ss:$2 sm:$0x3f]
      %s3613 = scalar_lea.vmem [#allocation2], 81
      %v3614 = vld [vmem:[%s3613] ss:$2 sm:$0x3f]
      %s3615 = scalar_lea.vmem [#allocation2], 82
      %v3616 = vld [vmem:[%s3615] ss:$2 sm:$0x3f]
      %s3617 = scalar_lea.vmem [#allocation2], 83
      %v3618 = vld [vmem:[%s3617] ss:$2 sm:$0x3f]
      %s3619 = scalar_lea.vmem [#allocation2], 96
      %v3620 = vld [vmem:[%s3619] ss:$2 sm:$0x3f]
      %s3621 = scalar_lea.vmem [#allocation2], 97
      %v3622 = vld [vmem:[%s3621] ss:$2 sm:$0x3f]
      %s3623 = scalar_lea.vmem [#allocation2], 98
      %v3624 = vld [vmem:[%s3623] ss:$2 sm:$0x3f]
      %s3625 = scalar_lea.vmem [#allocation2], 99
      %v3626 = vld [vmem:[%s3625] ss:$2 sm:$0x3f]
      %s3627 = scalar_lea.vmem [#allocation2], 112
      %v3628 = vld [vmem:[%s3627] ss:$2 sm:$0x3f]
      %s3629 = scalar_lea.vmem [#allocation2], 113
      %v3630 = vld [vmem:[%s3629] ss:$2 sm:$0x3f]
      %s3631 = scalar_lea.vmem [#allocation2], 114
      %v3632 = vld [vmem:[%s3631] ss:$2 sm:$0x3f]
      %s3633 = scalar_lea.vmem [#allocation2], 115
      %v3634 = vld [vmem:[%s3633] ss:$2 sm:$0x3f]
      %v3639 = vrot.slane %v3580, 2
      %v3640 = vrot.slane %v3582, 2
      %v3641 = vrot.slane %v3584, 2
      %v3642 = vrot.slane %v3586, 2
      %v3651 = vrot.slane %v3588, 4
      %v3652 = vrot.slane %v3590, 4
      %v3653 = vrot.slane %v3592, 4
      %v3654 = vrot.slane %v3594, 4
      %v3663 = vrot.slane %v3596, 6
      %v3664 = vrot.slane %v3598, 6
      %v3665 = vrot.slane %v3600, 6
      %v3666 = vrot.slane %v3602, 6
      %v3675 = vrot.slane %v3612, 2
      %v3676 = vrot.slane %v3614, 2
      %v3677 = vrot.slane %v3616, 2
      %v3678 = vrot.slane %v3618, 2
      %v3687 = vrot.slane %v3620, 4
      %v3688 = vrot.slane %v3622, 4
      %v3689 = vrot.slane %v3624, 4
      %v3690 = vrot.slane %v3626, 4
      %v3699 = vrot.slane %v3628, 6
      %v3700 = vrot.slane %v3630, 6
      %v3701 = vrot.slane %v3632, 6
      %v3702 = vrot.slane %v3634, 6
      %vm3707 = vcmask 1045504
      %v3708 = vsel %vm3707, %v3572, %v3639
      %v3709 = vsel %vm3707, %v3574, %v3640
      %v3710 = vsel %vm3707, %v3576, %v3641
      %v3711 = vsel %vm3707, %v3578, %v3642
      %vm3712 = vcmask 1043456
      %v3713 = vsel %vm3712, %v3639, %v3651
      %v3714 = vsel %vm3712, %v3640, %v3652
      %v3715 = vsel %vm3712, %v3641, %v3653
      %v3716 = vsel %vm3712, %v3642, %v3654
      %vm3717 = vcmask 1041408
      %v3718 = vsel %vm3717, %v3651, %v3663
      %v3719 = vsel %vm3717, %v3652, %v3664
      %v3720 = vsel %vm3717, %v3653, %v3665
      %v3721 = vsel %vm3717, %v3654, %v3666
      %v3722 = vsel %vm3707, %v3604, %v3675
      %v3723 = vsel %vm3707, %v3606, %v3676
      %v3724 = vsel %vm3707, %v3608, %v3677
      %v3725 = vsel %vm3707, %v3610, %v3678
      %v3726 = vsel %vm3712, %v3675, %v3687
      %v3727 = vsel %vm3712, %v3676, %v3688
      %v3728 = vsel %vm3712, %v3677, %v3689
      %v3729 = vsel %vm3712, %v3678, %v3690
      %v3730 = vsel %vm3717, %v3687, %v3699
      %v3731 = vsel %vm3717, %v3688, %v3700
      %v3732 = vsel %vm3717, %v3689, %v3701
      %v3733 = vsel %vm3717, %v3690, %v3702
      %v3734 = vpack.c.bf16 %v3713, %v3708
      %v3735 = vpack.c.bf16 %v3714, %v3709
      %v3736 = vpack.c.bf16 %v3715, %v3710
      %v3737 = vpack.c.bf16 %v3716, %v3711
      %v3738 = vpack.c.bf16 %v3722, %v3718
      %v3739 = vpack.c.bf16 %v3723, %v3719
      %v3740 = vpack.c.bf16 %v3724, %v3720
      %v3741 = vpack.c.bf16 %v3725, %v3721
      %v3742 = vpack.c.bf16 %v3730, %v3726
      %v3743 = vpack.c.bf16 %v3731, %v3727
      %v3744 = vpack.c.bf16 %v3732, %v3728
      %v3745 = vpack.c.bf16 %v3733, %v3729
      %v3746 = vld [vmem:[%s3] sm:$0xf]
      %v3747 = vld [vmem:[%s3 + $0x4] sm:$0xf]
      %v3748 = vld [vmem:[%s3 + $0x8] sm:$0xf]
      %v3749 = vld [vmem:[%s3 + $0xc] sm:$0xf]
      %v3750 = vld [vmem:[%s3 + $0x10] sm:$0xf]
      %v3751 = vld [vmem:[%s3 + $0x14] sm:$0xf]
      %v3752 = vld [vmem:[%s3 + $0x18] sm:$0xf]
      %v3753 = vld [vmem:[%s3 + $0x1c] sm:$0xf]
      %v3754 = vld [vmem:[%s3 + $0x20] sm:$0xf]
      %v3755 = vld [vmem:[%s3 + $0x24] sm:$0xf]
      %v3756 = vld [vmem:[%s3 + $0x28] sm:$0xf]
      %v3757 = vld [vmem:[%s3 + $0x2c] sm:$0xf]
      %v3758 = vld [vmem:[%s3 + $0x30] sm:$0xf]
      %v3759 = vld [vmem:[%s3 + $0x34] sm:$0xf]
      %v3760 = vld [vmem:[%s3 + $0x38] sm:$0xf]
      %v3761 = vld [vmem:[%s3 + $0x3c] sm:$0xf]
      %v3762 = vld [vmem:[%s3 + $0x40] sm:$0xf]
      %v3763 = vld [vmem:[%s3 + $0x44] sm:$0xf]
      %v3764 = vld [vmem:[%s3 + $0x48] sm:$0xf]
      %v3765 = vld [vmem:[%s3 + $0x4c] sm:$0xf]
      %v3766 = vld [vmem:[%s3 + $0x50] sm:$0xf]
      %v3767 = vld [vmem:[%s3 + $0x54] sm:$0xf]
      %v3768 = vld [vmem:[%s3 + $0x58] sm:$0xf]
      %v3769 = vld [vmem:[%s3 + $0x5c] sm:$0xf]
      %v3770 = vld [vmem:[%s3 + $0x60] sm:$0xf]
      %v3771 = vld [vmem:[%s3 + $0x64] sm:$0xf]
      %v3772 = vld [vmem:[%s3 + $0x68] sm:$0xf]
      %v3773 = vld [vmem:[%s3 + $0x6c] sm:$0xf]
      %v3774 = vld [vmem:[%s3 + $0x70] sm:$0xf]
      %v3775 = vld [vmem:[%s3 + $0x74] sm:$0xf]
      %v3776 = vld [vmem:[%s3 + $0x78] sm:$0xf]
      %v3777 = vld [vmem:[%s3 + $0x7c] sm:$0xf]
      %v3778 = vld [vmem:[%s3 + $0x80] sm:$0xf]
      %v3779 = vld [vmem:[%s3 + $0x84] sm:$0xf]
      %v3780 = vld [vmem:[%s3 + $0x88] sm:$0xf]
      %v3781 = vld [vmem:[%s3 + $0x8c] sm:$0xf]
      %v3782 = vld [vmem:[%s3 + $0x90] sm:$0xf]
      %v3783 = vld [vmem:[%s3 + $0x94] sm:$0xf]
      %v3784 = vld [vmem:[%s3 + $0x98] sm:$0xf]
      %v3785 = vld [vmem:[%s3 + $0x9c] sm:$0xf]
      %v3786 = vld [vmem:[%s3 + $0xa0] sm:$0xf]
      %v3787 = vld [vmem:[%s3 + $0xa4] sm:$0xf]
      %v3788 = vld [vmem:[%s3 + $0xa8] sm:$0xf]
      %v3789 = vld [vmem:[%s3 + $0xac] sm:$0xf]
      %v3790 = vld [vmem:[%s3 + $0xb0] sm:$0xf]
      %v3791 = vld [vmem:[%s3 + $0xb4] sm:$0xf]
      %v3792 = vld [vmem:[%s3 + $0xb8] sm:$0xf]
      %v3793 = vld [vmem:[%s3 + $0xbc] sm:$0xf]
      %v3794 = vld [vmem:[%s3 + $0xc0] sm:$0xf]
      %v3795 = vld [vmem:[%s3 + $0xc4] sm:$0xf]
      %v3796 = vld [vmem:[%s3 + $0xc8] sm:$0xf]
      %v3797 = vld [vmem:[%s3 + $0xcc] sm:$0xf]
      %v3798 = vld [vmem:[%s3 + $0xd0] sm:$0xf]
      %v3799 = vld [vmem:[%s3 + $0xd4] sm:$0xf]
      %v3800 = vld [vmem:[%s3 + $0xd8] sm:$0xf]
      %v3801 = vld [vmem:[%s3 + $0xdc] sm:$0xf]
      %v3802 = vld [vmem:[%s3 + $0xe0] sm:$0xf]
      %v3803 = vld [vmem:[%s3 + $0xe4] sm:$0xf]
      %v3804 = vld [vmem:[%s3 + $0xe8] sm:$0xf]
      %v3805 = vld [vmem:[%s3 + $0xec] sm:$0xf]
      %v3806 = vld [vmem:[%s3 + $0xf0] sm:$0xf]
      %v3807 = vld [vmem:[%s3 + $0xf4] sm:$0xf]
      %v3808 = vld [vmem:[%s3 + $0xf8] sm:$0xf]
      %v3809 = vld [vmem:[%s3 + $0xfc] sm:$0xf]
      %v3810 = vld [vmem:[%s4] sm:$0x1]
      %v3812 = vlaneseq
      %v3813 = vshrl.u32 %v3812, 7
      %v3814 = vsub.s32 0, %v3813
      %v3815 = vrot.slane %v3810, %v3814
      %v3881 = vunpack.c.l.b16 %v3746
      %v3882 = vunpack.c.l.b16 %v3747
      %v3883 = vunpack.c.l.b16 %v3748
      %v3884 = vunpack.c.l.b16 %v3749
      %v3885 = vunpack.c.l.b16 %v3750
      %v3886 = vunpack.c.l.b16 %v3751
      %v3887 = vunpack.c.l.b16 %v3752
      %v3888 = vunpack.c.l.b16 %v3753
      %v3889 = vunpack.c.l.b16 %v3754
      %v3890 = vunpack.c.l.b16 %v3755
      %v3891 = vunpack.c.l.b16 %v3756
      %v3892 = vunpack.c.l.b16 %v3757
      %v3893 = vunpack.c.l.b16 %v3758
      %v3894 = vunpack.c.l.b16 %v3759
      %v3895 = vunpack.c.l.b16 %v3760
      %v3896 = vunpack.c.l.b16 %v3761
      %v3897 = vunpack.c.l.b16 %v3762
      %v3898 = vunpack.c.l.b16 %v3763
      %v3899 = vunpack.c.l.b16 %v3764
      %v3900 = vunpack.c.l.b16 %v3765
      %v3901 = vunpack.c.l.b16 %v3766
      %v3902 = vunpack.c.l.b16 %v3767
      %v3903 = vunpack.c.l.b16 %v3768
      %v3904 = vunpack.c.l.b16 %v3769
      %v3905 = vunpack.c.l.b16 %v3770
      %v3906 = vunpack.c.l.b16 %v3771
      %v3907 = vunpack.c.l.b16 %v3772
      %v3908 = vunpack.c.l.b16 %v3773
      %v3909 = vunpack.c.l.b16 %v3774
      %v3910 = vunpack.c.l.b16 %v3775
      %v3911 = vunpack.c.l.b16 %v3776
      %v3912 = vunpack.c.l.b16 %v3777
      %v3913 = vunpack.c.l.b16 %v3778
      %v3914 = vunpack.c.l.b16 %v3779
      %v3915 = vunpack.c.l.b16 %v3780
      %v3916 = vunpack.c.l.b16 %v3781
      %v3917 = vunpack.c.l.b16 %v3782
      %v3918 = vunpack.c.l.b16 %v3783
      %v3919 = vunpack.c.l.b16 %v3784
      %v3920 = vunpack.c.l.b16 %v3785
      %v3921 = vunpack.c.l.b16 %v3786
      %v3922 = vunpack.c.l.b16 %v3787
      %v3923 = vunpack.c.l.b16 %v3788
      %v3924 = vunpack.c.l.b16 %v3789
      %v3925 = vunpack.c.l.b16 %v3790
      %v3926 = vunpack.c.l.b16 %v3791
      %v3927 = vunpack.c.l.b16 %v3792
      %v3928 = vunpack.c.l.b16 %v3793
      %v3929 = vunpack.c.l.b16 %v3794
      %v3930 = vunpack.c.l.b16 %v3795
      %v3931 = vunpack.c.l.b16 %v3796
      %v3932 = vunpack.c.l.b16 %v3797
      %v3933 = vunpack.c.l.b16 %v3798
      %v3934 = vunpack.c.l.b16 %v3799
      %v3935 = vunpack.c.l.b16 %v3800
      %v3936 = vunpack.c.l.b16 %v3801
      %v3937 = vunpack.c.l.b16 %v3802
      %v3938 = vunpack.c.l.b16 %v3803
      %v3939 = vunpack.c.l.b16 %v3804
      %v3940 = vunpack.c.l.b16 %v3805
      %v3941 = vunpack.c.l.b16 %v3806
      %v3942 = vunpack.c.l.b16 %v3807
      %v3943 = vunpack.c.l.b16 %v3808
      %v3944 = vunpack.c.l.b16 %v3809
      %v3945 = vpack.c.b16 %v3882, %v3881
      %v3946 = vpack.c.b16 %v3884, %v3883
      %v3947 = vpack.c.b16 %v3886, %v3885
      %v3948 = vpack.c.b16 %v3888, %v3887
      %v3949 = vpack.c.b16 %v3890, %v3889
      %v3950 = vpack.c.b16 %v3892, %v3891
      %v3951 = vpack.c.b16 %v3894, %v3893
      %v3952 = vpack.c.b16 %v3896, %v3895
      %v3953 = vpack.c.b16 %v3898, %v3897
      %v3954 = vpack.c.b16 %v3900, %v3899
      %v3955 = vpack.c.b16 %v3902, %v3901
      %v3956 = vpack.c.b16 %v3904, %v3903
      %v3957 = vpack.c.b16 %v3906, %v3905
      %v3958 = vpack.c.b16 %v3908, %v3907
      %v3959 = vpack.c.b16 %v3910, %v3909
      %v3960 = vpack.c.b16 %v3912, %v3911
      %v3961 = vpack.c.b16 %v3914, %v3913
      %v3962 = vpack.c.b16 %v3916, %v3915
      %v3963 = vpack.c.b16 %v3918, %v3917
      %v3964 = vpack.c.b16 %v3920, %v3919
      %v3965 = vpack.c.b16 %v3922, %v3921
      %v3966 = vpack.c.b16 %v3924, %v3923
      %v3967 = vpack.c.b16 %v3926, %v3925
      %v3968 = vpack.c.b16 %v3928, %v3927
      %v3969 = vpack.c.b16 %v3930, %v3929
      %v3970 = vpack.c.b16 %v3932, %v3931
      %v3971 = vpack.c.b16 %v3934, %v3933
      %v3972 = vpack.c.b16 %v3936, %v3935
      %v3973 = vpack.c.b16 %v3938, %v3937
      %v3974 = vpack.c.b16 %v3940, %v3939
      %v3975 = vpack.c.b16 %v3942, %v3941
      %v3976 = vpack.c.b16 %v3944, %v3943
      %4009 = vmatprep.subr.bf16.mxu0 0
      %4010 = vmatpush1.bf16.msra.mxu0 %v3945
      %4011 = vmatprep.subr.bf16.mxu0 0
      %4012 = vmatpush1.bf16.msra.mxu0 %v3946
      %4013 = vmatprep.subr.bf16.mxu0 0
      %4014 = vmatpush1.bf16.msra.mxu0 %v3947
      %4015 = vmatprep.subr.bf16.mxu0 0
      %4016 = vmatpush1.bf16.msra.mxu0 %v3948
      %4017 = vmatprep.subr.bf16.mxu0 0
      %4018 = vmatpush1.bf16.msra.mxu0 %v3949
      %4019 = vmatprep.subr.bf16.mxu0 0
      %4020 = vmatpush1.bf16.msra.mxu0 %v3950
      %4021 = vmatprep.subr.bf16.mxu0 0
      %4022 = vmatpush1.bf16.msra.mxu0 %v3951
      %4023 = vmatprep.subr.bf16.mxu0 0
      %4024 = vmatpush1.bf16.msra.mxu0 %v3952
      %4025 = vmatprep.subr.bf16.mxu0 0
      %4026 = vmatpush1.bf16.msra.mxu0 %v3953
      %4027 = vmatprep.subr.bf16.mxu0 0
      %4028 = vmatpush1.bf16.msra.mxu0 %v3954
      %4029 = vmatprep.subr.bf16.mxu0 0
      %4030 = vmatpush1.bf16.msra.mxu0 %v3955
      %4031 = vmatprep.subr.bf16.mxu0 0
      %4032 = vmatpush1.bf16.msra.mxu0 %v3956
      %4033 = vmatprep.subr.bf16.mxu0 0
      %4034 = vmatpush1.bf16.msra.mxu0 %v3957
      %4035 = vmatprep.subr.bf16.mxu0 0
      %4036 = vmatpush1.bf16.msra.mxu0 %v3958
      %4037 = vmatprep.subr.bf16.mxu0 0
      %4038 = vmatpush1.bf16.msra.mxu0 %v3959
      %4039 = vmatprep.subr.bf16.mxu0 0
      %4040 = vmatpush1.bf16.msra.mxu0 %v3960
      %4041 = vmatprep.mubr.bf16.mxu0 %v3735
      %4042 = vmatmul.mubr.bf16.gmra.mrb[0].mxu0 %v3734
      %v4043 = vpop.f32.mrb[0].mxu0
      %v4044 = vadd.f32 %v3815, %v4043
      %v4045 = vpop.f32.mrb[0].mxu0
      %v4046 = vpop.f32.mrb[0].mxu0
      %v4047 = vadd.f32 %v3815, %v4046
      %v4048 = vpop.f32.mrb[0].mxu0
      %4049 = vmatprep.mubr.bf16.mxu0 %v3739
      %4050 = vmatmul.mubr.bf16.gmra.mrb[0].mxu0 %v3738
      %v4051 = vpop.f32.mrb[0].mxu0
      %v4052 = vadd.f32 %v3815, %v4051
      %v4053 = vpop.f32.mrb[0].mxu0
      %v4054 = vpop.f32.mrb[0].mxu0
      %v4055 = vadd.f32 %v3815, %v4054
      %v4056 = vpop.f32.mrb[0].mxu0
      %4057 = vmatprep.mubr.bf16.mxu0 %v3743
      %4058 = vmatmul.mubr.bf16.gmra.mrb[0].mxu0 %v3742
      %v4059 = vpop.f32.mrb[0].mxu0
      %v4060 = vadd.f32 %v3815, %v4059
      %v4061 = vpop.f32.mrb[0].mxu0
      %v4062 = vpop.f32.mrb[0].mxu0
      %v4063 = vadd.f32 %v3815, %v4062
      %v4064 = vpop.f32.mrb[0].mxu0
      %4065 = vdwg.mxu0
      %4066 = vmatprep.subr.bf16.mxu0 0
      %4067 = vmatpush1.bf16.msra.mxu0 %v3961
      %4068 = vmatprep.subr.bf16.mxu0 0
      %4069 = vmatpush1.bf16.msra.mxu0 %v3962
      %4070 = vmatprep.subr.bf16.mxu0 0
      %4071 = vmatpush1.bf16.msra.mxu0 %v3963
      %4072 = vmatprep.subr.bf16.mxu0 0
      %4073 = vmatpush1.bf16.msra.mxu0 %v3964
      %4074 = vmatprep.subr.bf16.mxu0 0
      %4075 = vmatpush1.bf16.msra.mxu0 %v3965
      %4076 = vmatprep.subr.bf16.mxu0 0
      %4077 = vmatpush1.bf16.msra.mxu0 %v3966
      %4078 = vmatprep.subr.bf16.mxu0 0
      %4079 = vmatpush1.bf16.msra.mxu0 %v3967
      %4080 = vmatprep.subr.bf16.mxu0 0
      %4081 = vmatpush1.bf16.msra.mxu0 %v3968
      %4082 = vmatprep.subr.bf16.mxu0 0
      %4083 = vmatpush1.bf16.msra.mxu0 %v3969
      %4084 = vmatprep.subr.bf16.mxu0 0
      %4085 = vmatpush1.bf16.msra.mxu0 %v3970
      %4086 = vmatprep.subr.bf16.mxu0 0
      %4087 = vmatpush1.bf16.msra.mxu0 %v3971
      %4088 = vmatprep.subr.bf16.mxu0 0
      %4089 = vmatpush1.bf16.msra.mxu0 %v3972
      %4090 = vmatprep.subr.bf16.mxu0 0
      %4091 = vmatpush1.bf16.msra.mxu0 %v3973
      %4092 = vmatprep.subr.bf16.mxu0 0
      %4093 = vmatpush1.bf16.msra.mxu0 %v3974
      %4094 = vmatprep.subr.bf16.mxu0 0
      %4095 = vmatpush1.bf16.msra.mxu0 %v3975
      %4096 = vmatprep.subr.bf16.mxu0 0
      %4097 = vmatpush1.bf16.msra.mxu0 %v3976
      %4098 = vmatprep.mubr.bf16.mxu0 %v3737
      %4099 = vmatmul.mubr.bf16.gmra.mrb[0].mxu0 %v3736
      %v4100 = vpop.f32.mrb[0].mxu0
      %v4101 = vadd.f32 %v4044, %v4100
      %v4102 = vpop.f32.mrb[0].mxu0
      %v4103 = vpop.f32.mrb[0].mxu0
      %v4104 = vadd.f32 %v4047, %v4103
      %v4105 = vpop.f32.mrb[0].mxu0
      %4106 = vmatprep.mubr.bf16.mxu0 %v3741
      %4107 = vmatmul.mubr.bf16.gmra.mrb[0].mxu0 %v3740
      %v4108 = vpop.f32.mrb[0].mxu0
      %v4109 = vadd.f32 %v4052, %v4108
      %v4110 = vpop.f32.mrb[0].mxu0
      %v4111 = vpop.f32.mrb[0].mxu0
      %v4112 = vadd.f32 %v4055, %v4111
      %v4113 = vpop.f32.mrb[0].mxu0
      %4114 = vmatprep.mubr.bf16.mxu0 %v3745
      %4115 = vmatmul.mubr.bf16.gmra.mrb[0].mxu0 %v3744
      %v4116 = vpop.f32.mrb[0].mxu0
      %v4117 = vadd.f32 %v4060, %v4116
      %v4118 = vpop.f32.mrb[0].mxu0
      %v4119 = vpop.f32.mrb[0].mxu0
      %v4120 = vadd.f32 %v4063, %v4119
      %v4121 = vpop.f32.mrb[0].mxu0
      %4122 = vdwg.mxu0
      %v4123 = vmax.f32 %v4101, 0.0
      %v4124 = vmax.f32 %v4104, 0.0
      %v4125 = vmax.f32 %v4109, 0.0
      %v4126 = vmax.f32 %v4112, 0.0
      %v4127 = vmax.f32 %v4117, 0.0
      %v4128 = vmax.f32 %v4120, 0.0
      %v4130 = vrot.slane %v4123, 1
      %v4132 = vrot.slane %v4123, 2
      %vm4135 = vcmask 1046528
      %v4136 = vrot.slane %v4124, 1
      %v4137 = vsel %vm4135, %v4130, %v4136
      %v4138 = vrot.slane %v4124, 2
      %v4140 = vrot.slane %v4125, 1
      %v4141 = vsel %vm4135, %v4136, %v4140
      %v4142 = vrot.slane %v4125, 2
      %v4143 = vsel %vm3707, %v4138, %v4142
      %v4145 = vrot.slane %v4126, 1
      %v4147 = vrot.slane %v4126, 2
      %v4150 = vrot.slane %v4127, 1
      %v4151 = vsel %vm4135, %v4145, %v4150
      %v4152 = vrot.slane %v4127, 2
      %v4154 = vrot.slane %v4128, 1
      %v4155 = vsel %vm4135, %v4150, %v4154
      %v4156 = vrot.slane %v4128, 2
      %v4157 = vsel %vm3707, %v4152, %v4156
      %v4158 = vsel %vm3707, %v4132, %v4138
      %v4159 = vrot.slane %v4137, 2
      %v4160 = vrot.slane %v4136, 2
      %v4161 = vsel %vm3707, %v4159, %v4160
      %v4162 = vrot.slane %v4138, 2
      %v4163 = vsel %vm3707, %v4162, %v4162
      %v4167 = vrot.slane %v4124, 4
      %v4168 = vrot.slane %v4141, 4
      %v4169 = vrot.slane %v4143, 4
      %v4173 = vrot.slane %v4125, 6
      %v4174 = vrot.slane %v4140, 6
      %v4175 = vrot.slane %v4142, 6
      %v4179 = vsel %vm3707, %v4147, %v4152
      %v4180 = vrot.slane %v4151, 2
      %v4181 = vrot.slane %v4150, 2
      %v4182 = vsel %vm3707, %v4180, %v4181
      %v4183 = vrot.slane %v4152, 2
      %v4184 = vsel %vm3707, %v4183, %v4183
      %v4188 = vrot.slane %v4127, 4
      %v4189 = vrot.slane %v4155, 4
      %v4190 = vrot.slane %v4157, 4
      %v4194 = vrot.slane %v4128, 6
      %v4195 = vrot.slane %v4154, 6
      %v4196 = vrot.slane %v4156, 6
      %v4200 = vsel %vm3712, %v4123, %v4158
      %v4201 = vsel %vm3712, %v4130, %v4161
      %v4202 = vsel %vm3712, %v4132, %v4163
      %v4203 = vsel %vm3712, %v4167, %v4173
      %v4204 = vsel %vm3712, %v4168, %v4174
      %v4205 = vsel %vm3712, %v4169, %v4175
      %v4206 = vsel %vm3712, %v4126, %v4179
      %v4207 = vsel %vm3712, %v4145, %v4182
      %v4208 = vsel %vm3712, %v4147, %v4184
      %v4209 = vsel %vm3712, %v4188, %v4194
      %v4210 = vsel %vm3712, %v4189, %v4195
      %v4211 = vsel %vm3712, %v4190, %v4196
      %v4212 = vpack.c.bf16 %v4203, %v4200
      %v4213 = vpack.c.bf16 %v4204, %v4201
      %v4214 = vpack.c.bf16 %v4205, %v4202
      %v4215 = vpack.c.bf16 %v4209, %v4206
      %v4216 = vpack.c.bf16 %v4210, %v4207
      %v4217 = vpack.c.bf16 %v4211, %v4208
      %v4218 = vld [vmem:[%s5] sm:$0xf]
      %v4219 = vld [vmem:[%s5 + $0x4] sm:$0xf]
      %v4220 = vld [vmem:[%s5 + $0x8] sm:$0xf]
      %v4221 = vld [vmem:[%s5 + $0xc] sm:$0xf]
      %v4222 = vld [vmem:[%s5 + $0x10] sm:$0xf]
      %v4223 = vld [vmem:[%s5 + $0x14] sm:$0xf]
      %v4224 = vld [vmem:[%s5 + $0x18] sm:$0xf]
      %v4225 = vld [vmem:[%s5 + $0x1c] sm:$0xf]
      %v4226 = vld [vmem:[%s5 + $0x20] sm:$0xf]
      %v4227 = vld [vmem:[%s5 + $0x24] sm:$0xf]
      %v4228 = vld [vmem:[%s5 + $0x28] sm:$0xf]
      %v4229 = vld [vmem:[%s5 + $0x2c] sm:$0xf]
      %v4230 = vld [vmem:[%s5 + $0x30] sm:$0xf]
      %v4231 = vld [vmem:[%s5 + $0x34] sm:$0xf]
      %v4232 = vld [vmem:[%s5 + $0x38] sm:$0xf]
      %v4233 = vld [vmem:[%s5 + $0x3c] sm:$0xf]
      %v4234 = vld [vmem:[%s5 + $0x40] sm:$0xf]
      %v4235 = vld [vmem:[%s5 + $0x44] sm:$0xf]
      %v4236 = vld [vmem:[%s5 + $0x48] sm:$0xf]
      %v4237 = vld [vmem:[%s5 + $0x4c] sm:$0xf]
      %v4238 = vld [vmem:[%s5 + $0x50] sm:$0xf]
      %v4239 = vld [vmem:[%s5 + $0x54] sm:$0xf]
      %v4240 = vld [vmem:[%s5 + $0x58] sm:$0xf]
      %v4241 = vld [vmem:[%s5 + $0x5c] sm:$0xf]
      %v4242 = vld [vmem:[%s5 + $0x60] sm:$0xf]
      %v4243 = vld [vmem:[%s5 + $0x64] sm:$0xf]
      %v4244 = vld [vmem:[%s5 + $0x68] sm:$0xf]
      %v4245 = vld [vmem:[%s5 + $0x6c] sm:$0xf]
      %v4246 = vld [vmem:[%s5 + $0x70] sm:$0xf]
      %v4247 = vld [vmem:[%s5 + $0x74] sm:$0xf]
      %v4248 = vld [vmem:[%s5 + $0x78] sm:$0xf]
      %v4249 = vld [vmem:[%s5 + $0x7c] sm:$0xf]
      %v4250 = vld [vmem:[%s5 + $0x80] sm:$0xf]
      %v4251 = vld [vmem:[%s5 + $0x84] sm:$0xf]
      %v4252 = vld [vmem:[%s5 + $0x88] sm:$0xf]
      %v4253 = vld [vmem:[%s5 + $0x8c] sm:$0xf]
      %v4254 = vld [vmem:[%s5 + $0x90] sm:$0xf]
      %v4255 = vld [vmem:[%s5 + $0x94] sm:$0xf]
      %v4256 = vld [vmem:[%s5 + $0x98] sm:$0xf]
      %v4257 = vld [vmem:[%s5 + $0x9c] sm:$0xf]
      %v4258 = vld [vmem:[%s5 + $0xa0] sm:$0xf]
      %v4259 = vld [vmem:[%s5 + $0xa4] sm:$0xf]
      %v4260 = vld [vmem:[%s5 + $0xa8] sm:$0xf]
      %v4261 = vld [vmem:[%s5 + $0xac] sm:$0xf]
      %v4262 = vld [vmem:[%s5 + $0xb0] sm:$0xf]
      %v4263 = vld [vmem:[%s5 + $0xb4] sm:$0xf]
      %v4264 = vld [vmem:[%s5 + $0xb8] sm:$0xf]
      %v4265 = vld [vmem:[%s5 + $0xbc] sm:$0xf]
      %v4266 = vld [vmem:[%s6] sm:$0x1]
      %v4268 = vlaneseq
      %v4269 = vshrl.u32 %v4268, 7
      %v4270 = vsub.s32 0, %v4269
      %v4271 = vrot.slane %v4266, %v4270
      %v4321 = vunpack.c.l.b16 %v4218
      %v4322 = vunpack.c.l.b16 %v4219
      %v4323 = vunpack.c.l.b16 %v4220
      %v4324 = vunpack.c.l.b16 %v4221
      %v4325 = vunpack.c.l.b16 %v4222
      %v4326 = vunpack.c.l.b16 %v4223
      %v4327 = vunpack.c.l.b16 %v4224
      %v4328 = vunpack.c.l.b16 %v4225
      %v4329 = vunpack.c.l.b16 %v4226
      %v4330 = vunpack.c.l.b16 %v4227
      %v4331 = vunpack.c.l.b16 %v4228
      %v4332 = vunpack.c.l.b16 %v4229
      %v4333 = vunpack.c.l.b16 %v4230
      %v4334 = vunpack.c.l.b16 %v4231
      %v4335 = vunpack.c.l.b16 %v4232
      %v4336 = vunpack.c.l.b16 %v4233
      %v4337 = vunpack.c.l.b16 %v4234
      %v4338 = vunpack.c.l.b16 %v4235
      %v4339 = vunpack.c.l.b16 %v4236
      %v4340 = vunpack.c.l.b16 %v4237
      %v4341 = vunpack.c.l.b16 %v4238
      %v4342 = vunpack.c.l.b16 %v4239
      %v4343 = vunpack.c.l.b16 %v4240
      %v4344 = vunpack.c.l.b16 %v4241
      %v4345 = vunpack.c.l.b16 %v4242
      %v4346 = vunpack.c.l.b16 %v4243
      %v4347 = vunpack.c.l.b16 %v4244
      %v4348 = vunpack.c.l.b16 %v4245
      %v4349 = vunpack.c.l.b16 %v4246
      %v4350 = vunpack.c.l.b16 %v4247
      %v4351 = vunpack.c.l.b16 %v4248
      %v4352 = vunpack.c.l.b16 %v4249
      %v4353 = vunpack.c.l.b16 %v4250
      %v4354 = vunpack.c.l.b16 %v4251
      %v4355 = vunpack.c.l.b16 %v4252
      %v4356 = vunpack.c.l.b16 %v4253
      %v4357 = vunpack.c.l.b16 %v4254
      %v4358 = vunpack.c.l.b16 %v4255
      %v4359 = vunpack.c.l.b16 %v4256
      %v4360 = vunpack.c.l.b16 %v4257
      %v4361 = vunpack.c.l.b16 %v4258
      %v4362 = vunpack.c.l.b16 %v4259
      %v4363 = vunpack.c.l.b16 %v4260
      %v4364 = vunpack.c.l.b16 %v4261
      %v4365 = vunpack.c.l.b16 %v4262
      %v4366 = vunpack.c.l.b16 %v4263
      %v4367 = vunpack.c.l.b16 %v4264
      %v4368 = vunpack.c.l.b16 %v4265
      %v4369 = vpack.c.b16 %v4322, %v4321
      %v4370 = vpack.c.b16 %v4324, %v4323
      %v4371 = vpack.c.b16 %v4326, %v4325
      %v4372 = vpack.c.b16 %v4328, %v4327
      %v4373 = vpack.c.b16 %v4330, %v4329
      %v4374 = vpack.c.b16 %v4332, %v4331
      %v4375 = vpack.c.b16 %v4334, %v4333
      %v4376 = vpack.c.b16 %v4336, %v4335
      %v4377 = vpack.c.b16 %v4338, %v4337
      %v4378 = vpack.c.b16 %v4340, %v4339
      %v4379 = vpack.c.b16 %v4342, %v4341
      %v4380 = vpack.c.b16 %v4344, %v4343
      %v4381 = vpack.c.b16 %v4346, %v4345
      %v4382 = vpack.c.b16 %v4348, %v4347
      %v4383 = vpack.c.b16 %v4350, %v4349
      %v4384 = vpack.c.b16 %v4352, %v4351
      %v4385 = vpack.c.b16 %v4354, %v4353
      %v4386 = vpack.c.b16 %v4356, %v4355
      %v4387 = vpack.c.b16 %v4358, %v4357
      %v4388 = vpack.c.b16 %v4360, %v4359
      %v4389 = vpack.c.b16 %v4362, %v4361
      %v4390 = vpack.c.b16 %v4364, %v4363
      %v4391 = vpack.c.b16 %v4366, %v4365
      %v4392 = vpack.c.b16 %v4368, %v4367
      %4417 = vmatprep.subr.bf16.mxu0 0
      %4418 = vmatpush1.bf16.msra.mxu0 %v4369
      %4419 = vmatprep.subr.bf16.mxu0 0
      %4420 = vmatpush1.bf16.msra.mxu0 %v4370
      %4421 = vmatprep.subr.bf16.mxu0 0
      %4422 = vmatpush1.bf16.msra.mxu0 %v4371
      %4423 = vmatprep.subr.bf16.mxu0 0
      %4424 = vmatpush1.bf16.msra.mxu0 %v4372
      %4425 = vmatprep.subr.bf16.mxu0 0
      %4426 = vmatpush1.bf16.msra.mxu0 %v4373
      %4427 = vmatprep.subr.bf16.mxu0 0
      %4428 = vmatpush1.bf16.msra.mxu0 %v4374
      %4429 = vmatprep.subr.bf16.mxu0 0
      %4430 = vmatpush1.bf16.msra.mxu0 %v4375
      %4431 = vmatprep.subr.bf16.mxu0 0
      %4432 = vmatpush1.bf16.msra.mxu0 %v4376
      %4433 = vmatprep.subr.bf16.mxu0 0
      %4434 = vmatpush1.bf16.msra.mxu0 %v4377
      %4435 = vmatprep.subr.bf16.mxu0 0
      %4436 = vmatpush1.bf16.msra.mxu0 %v4378
      %4437 = vmatprep.subr.bf16.mxu0 0
      %4438 = vmatpush1.bf16.msra.mxu0 %v4379
      %4439 = vmatprep.subr.bf16.mxu0 0
      %4440 = vmatpush1.bf16.msra.mxu0 %v4380
      %4441 = vmatprep.subr.bf16.mxu0 0
      %4442 = vmatpush1.bf16.msra.mxu0 %v4381
      %4443 = vmatprep.subr.bf16.mxu0 0
      %4444 = vmatpush1.bf16.msra.mxu0 %v4382
      %4445 = vmatprep.subr.bf16.mxu0 0
      %4446 = vmatpush1.bf16.msra.mxu0 %v4383
      %4447 = vmatprep.subr.bf16.mxu0 0
      %4448 = vmatpush1.bf16.msra.mxu0 %v4384
      %4449 = vmatprep.mubr.bf16.mxu0 %v4213
      %4450 = vmatmul.mubr.bf16.gmra.mrb[0].mxu0 %v4212
      %v4451 = vpop.f32.mrb[0].mxu0
      %v4452 = vadd.f32 %v4271, %v4451
      %v4453 = vpop.f32.mrb[0].mxu0
      %v4454 = vpop.f32.mrb[0].mxu0
      %v4455 = vadd.f32 %v4271, %v4454
      %v4456 = vpop.f32.mrb[0].mxu0
      %4457 = vmatprep.mubr.bf16.mxu0 %v4216
      %4458 = vmatmul.mubr.bf16.gmra.mrb[0].mxu0 %v4215
      %v4459 = vpop.f32.mrb[0].mxu0
      %v4460 = vadd.f32 %v4271, %v4459
      %v4461 = vpop.f32.mrb[0].mxu0
      %v4462 = vpop.f32.mrb[0].mxu0
      %v4463 = vadd.f32 %v4271, %v4462
      %v4464 = vpop.f32.mrb[0].mxu0
      %4465 = vdwg.mxu0
      %4466 = vmatprep.subr.bf16.mxu0 0
      %4467 = vmatpush1.bf16.msra.mxu0 %v4385
      %4468 = vmatprep.subr.bf16.mxu0 0
      %4469 = vmatpush1.bf16.msra.mxu0 %v4386
      %4470 = vmatprep.subr.bf16.mxu0 0
      %4471 = vmatpush1.bf16.msra.mxu0 %v4387
      %4472 = vmatprep.subr.bf16.mxu0 0
      %4473 = vmatpush1.bf16.msra.mxu0 %v4388
      %4474 = vmatprep.subr.bf16.mxu0 0
      %4475 = vmatpush1.bf16.msra.mxu0 %v4389
      %4476 = vmatprep.subr.bf16.mxu0 0
      %4477 = vmatpush1.bf16.msra.mxu0 %v4390
      %4478 = vmatprep.subr.bf16.mxu0 0
      %4479 = vmatpush1.bf16.msra.mxu0 %v4391
      %4480 = vmatprep.subr.bf16.mxu0 0
      %4481 = vmatpush1.bf16.msra.mxu0 %v4392
      %4482 = vmatprep.subr.bf16.mxu0 0
      %4483 = vmatpush1.bf16.msra.mxu0 0
      %4484 = vmatprep.subr.bf16.mxu0 0
      %4485 = vmatpush1.bf16.msra.mxu0 0
      %4486 = vmatprep.subr.bf16.mxu0 0
      %4487 = vmatpush1.bf16.msra.mxu0 0
      %4488 = vmatprep.subr.bf16.mxu0 0
      %4489 = vmatpush1.bf16.msra.mxu0 0
      %4490 = vmatprep.subr.bf16.mxu0 0
      %4491 = vmatpush1.bf16.msra.mxu0 0
      %4492 = vmatprep.subr.bf16.mxu0 0
      %4493 = vmatpush1.bf16.msra.mxu0 0
      %4494 = vmatprep.subr.bf16.mxu0 0
      %4495 = vmatpush1.bf16.msra.mxu0 0
      %4496 = vmatprep.subr.bf16.mxu0 0
      %4497 = vmatpush1.bf16.msra.mxu0 0
      %4498 = vmatprep.mubr.bf16.mxu0 0
      %4499 = vmatmul.mubr.bf16.gmra.mrb[0].mxu0 %v4214
      %v4500 = vpop.f32.mrb[0].mxu0
      %v4501 = vadd.f32 %v4452, %v4500
      %v4502 = vpop.f32.mrb[0].mxu0
      %v4503 = vpop.f32.mrb[0].mxu0
      %v4504 = vadd.f32 %v4455, %v4503
      %v4505 = vpop.f32.mrb[0].mxu0
      %4506 = vmatprep.mubr.bf16.mxu0 0
      %4507 = vmatmul.mubr.bf16.gmra.mrb[0].mxu0 %v4217
      %v4508 = vpop.f32.mrb[0].mxu0
      %v4509 = vadd.f32 %v4460, %v4508
      %v4510 = vpop.f32.mrb[0].mxu0
      %v4511 = vpop.f32.mrb[0].mxu0
      %v4512 = vadd.f32 %v4463, %v4511
      %v4513 = vpop.f32.mrb[0].mxu0
      %4514 = vdwg.mxu0
      %v4515 = vmax.f32 %v4501, 0.0
      %v4516 = vmax.f32 %v4504, 0.0
      %v4517 = vmax.f32 %v4509, 0.0
      %v4518 = vmax.f32 %v4512, 0.0
      %v4520 = vrot.slane %v4515, 1
      %v4522 = vrot.slane %v4515, 2
      %v4525 = vrot.slane %v4516, 1
      %v4526 = vrot.slane %v4516, 2
      %v4528 = vrot.slane %v4517, 1
      %v4530 = vrot.slane %v4517, 2
      %v4533 = vrot.slane %v4518, 1
      %v4534 = vrot.slane %v4518, 2
      %v4535 = vrot.slane %v4520, 2
      %v4536 = vrot.slane %v4522, 2
      %v4539 = vrot.slane %v4516, 4
      %v4540 = vrot.slane %v4525, 4
      %v4541 = vrot.slane %v4526, 4
      %v4545 = vrot.slane %v4516, 6
      %v4546 = vrot.slane %v4525, 6
      %v4547 = vrot.slane %v4526, 6
      %v4551 = vrot.slane %v4528, 2
      %v4552 = vrot.slane %v4530, 2
      %v4555 = vrot.slane %v4518, 4
      %v4556 = vrot.slane %v4533, 4
      %v4557 = vrot.slane %v4534, 4
      %v4561 = vrot.slane %v4518, 6
      %v4562 = vrot.slane %v4533, 6
      %v4563 = vrot.slane %v4534, 6
      %v4567 = vsel %vm3717, %v4515, %v4522
      %v4568 = vsel %vm3717, %v4520, %v4535
      %v4569 = vsel %vm3717, %v4522, %v4536
      %v4570 = vsel %vm3712, %v4567, %v4539
      %v4571 = vsel %vm3712, %v4568, %v4540
      %v4572 = vsel %vm3712, %v4569, %v4541
      %v4573 = vsel %vm3707, %v4570, %v4545
      %v4574 = vsel %vm3707, %v4571, %v4546
      %v4575 = vsel %vm3707, %v4572, %v4547
      %v4576 = vsel %vm3717, %v4517, %v4530
      %v4577 = vsel %vm3717, %v4528, %v4551
      %v4578 = vsel %vm3717, %v4530, %v4552
      %v4579 = vsel %vm3712, %v4576, %v4555
      %v4580 = vsel %vm3712, %v4577, %v4556
      %v4581 = vsel %vm3712, %v4578, %v4557
      %v4582 = vsel %vm3707, %v4579, %v4561
      %v4583 = vsel %vm3707, %v4580, %v4562
      %v4584 = vsel %vm3707, %v4581, %v4563
      %v4585 = vpack.c.bf16 %v4582, %v4573
      %v4586 = vpack.c.bf16 %v4583, %v4574
      %v4587 = vpack.c.bf16 %v4584, %v4575
      %v4588 = vld [vmem:[%s7] sm:$0xf]
      %v4589 = vld [vmem:[%s7 + $0x4] sm:$0xf]
      %v4590 = vld [vmem:[%s7 + $0x8] sm:$0xf]
      %v4591 = vld [vmem:[%s7 + $0xc] sm:$0xf]
      %v4592 = vld [vmem:[%s7 + $0x10] sm:$0xf]
      %v4593 = vld [vmem:[%s7 + $0x14] sm:$0xf]
      %v4594 = vld [vmem:[%s7 + $0x18] sm:$0xf]
      %v4595 = vld [vmem:[%s7 + $0x1c] sm:$0xf]
      %v4596 = vld [vmem:[%s7 + $0x20] sm:$0xf]
      %v4597 = vld [vmem:[%s7 + $0x24] sm:$0xf]
      %v4598 = vld [vmem:[%s7 + $0x28] sm:$0xf]
      %v4599 = vld [vmem:[%s7 + $0x2c] sm:$0xf]
      %v4600 = vld [vmem:[%s7 + $0x30] sm:$0xf]
      %v4601 = vld [vmem:[%s7 + $0x34] sm:$0xf]
      %v4602 = vld [vmem:[%s7 + $0x38] sm:$0xf]
      %v4603 = vld [vmem:[%s7 + $0x3c] sm:$0xf]
      %v4604 = vld [vmem:[%s7 + $0x40] sm:$0xf]
      %v4605 = vld [vmem:[%s7 + $0x44] sm:$0xf]
      %v4606 = vld [vmem:[%s7 + $0x48] sm:$0xf]
      %v4607 = vld [vmem:[%s7 + $0x4c] sm:$0xf]
      %v4608 = vld [vmem:[%s7 + $0x50] sm:$0xf]
      %v4609 = vld [vmem:[%s7 + $0x54] sm:$0xf]
      %v4610 = vld [vmem:[%s7 + $0x58] sm:$0xf]
      %v4611 = vld [vmem:[%s7 + $0x5c] sm:$0xf]
      %v4612 = vld [vmem:[%s7 + $0x60] sm:$0xf]
      %v4613 = vld [vmem:[%s7 + $0x64] sm:$0xf]
      %v4614 = vld [vmem:[%s7 + $0x68] sm:$0xf]
      %v4615 = vld [vmem:[%s7 + $0x6c] sm:$0xf]
      %v4616 = vld [vmem:[%s7 + $0x70] sm:$0xf]
      %v4617 = vld [vmem:[%s7 + $0x74] sm:$0xf]
      %v4618 = vld [vmem:[%s7 + $0x78] sm:$0xf]
      %v4619 = vld [vmem:[%s7 + $0x7c] sm:$0xf]
      %v4620 = vld [vmem:[%s7 + $0x80] sm:$0xf]
      %v4621 = vld [vmem:[%s7 + $0x84] sm:$0xf]
      %v4622 = vld [vmem:[%s7 + $0x88] sm:$0xf]
      %v4623 = vld [vmem:[%s7 + $0x8c] sm:$0xf]
      %v4624 = vld [vmem:[%s7 + $0x90] sm:$0xf]
      %v4625 = vld [vmem:[%s7 + $0x94] sm:$0xf]
      %v4626 = vld [vmem:[%s7 + $0x98] sm:$0xf]
      %v4627 = vld [vmem:[%s7 + $0x9c] sm:$0xf]
      %v4628 = vld [vmem:[%s7 + $0xa0] sm:$0xf]
      %v4629 = vld [vmem:[%s7 + $0xa4] sm:$0xf]
      %v4630 = vld [vmem:[%s7 + $0xa8] sm:$0xf]
      %v4631 = vld [vmem:[%s7 + $0xac] sm:$0xf]
      %v4632 = vld [vmem:[%s7 + $0xb0] sm:$0xf]
      %v4633 = vld [vmem:[%s7 + $0xb4] sm:$0xf]
      %v4634 = vld [vmem:[%s7 + $0xb8] sm:$0xf]
      %v4635 = vld [vmem:[%s7 + $0xbc] sm:$0xf]
      %v4636 = vld [vmem:[%s8] sm:$0x1]
      %v4638 = vlaneseq
      %v4639 = vshrl.u32 %v4638, 7
      %v4640 = vsub.s32 0, %v4639
      %v4641 = vrot.slane %v4636, %v4640
      %v4691 = vunpack.c.l.b16 %v4588
      %v4692 = vunpack.c.l.b16 %v4589
      %v4693 = vunpack.c.l.b16 %v4590
      %v4694 = vunpack.c.l.b16 %v4591
      %v4695 = vunpack.c.l.b16 %v4592
      %v4696 = vunpack.c.l.b16 %v4593
      %v4697 = vunpack.c.l.b16 %v4594
      %v4698 = vunpack.c.l.b16 %v4595
      %v4699 = vunpack.c.l.b16 %v4596
      %v4700 = vunpack.c.l.b16 %v4597
      %v4701 = vunpack.c.l.b16 %v4598
      %v4702 = vunpack.c.l.b16 %v4599
      %v4703 = vunpack.c.l.b16 %v4600
      %v4704 = vunpack.c.l.b16 %v4601
      %v4705 = vunpack.c.l.b16 %v4602
      %v4706 = vunpack.c.l.b16 %v4603
      %v4707 = vunpack.c.l.b16 %v4604
      %v4708 = vunpack.c.l.b16 %v4605
      %v4709 = vunpack.c.l.b16 %v4606
      %v4710 = vunpack.c.l.b16 %v4607
      %v4711 = vunpack.c.l.b16 %v4608
      %v4712 = vunpack.c.l.b16 %v4609
      %v4713 = vunpack.c.l.b16 %v4610
      %v4714 = vunpack.c.l.b16 %v4611
      %v4715 = vunpack.c.l.b16 %v4612
      %v4716 = vunpack.c.l.b16 %v4613
      %v4717 = vunpack.c.l.b16 %v4614
      %v4718 = vunpack.c.l.b16 %v4615
      %v4719 = vunpack.c.l.b16 %v4616
      %v4720 = vunpack.c.l.b16 %v4617
      %v4721 = vunpack.c.l.b16 %v4618
      %v4722 = vunpack.c.l.b16 %v4619
      %v4723 = vunpack.c.l.b16 %v4620
      %v4724 = vunpack.c.l.b16 %v4621
      %v4725 = vunpack.c.l.b16 %v4622
      %v4726 = vunpack.c.l.b16 %v4623
      %v4727 = vunpack.c.l.b16 %v4624
      %v4728 = vunpack.c.l.b16 %v4625
      %v4729 = vunpack.c.l.b16 %v4626
      %v4730 = vunpack.c.l.b16 %v4627
      %v4731 = vunpack.c.l.b16 %v4628
      %v4732 = vunpack.c.l.b16 %v4629
      %v4733 = vunpack.c.l.b16 %v4630
      %v4734 = vunpack.c.l.b16 %v4631
      %v4735 = vunpack.c.l.b16 %v4632
      %v4736 = vunpack.c.l.b16 %v4633
      %v4737 = vunpack.c.l.b16 %v4634
      %v4738 = vunpack.c.l.b16 %v4635
      %v4739 = vpack.c.b16 %v4692, %v4691
      %v4740 = vpack.c.b16 %v4694, %v4693
      %v4741 = vpack.c.b16 %v4696, %v4695
      %v4742 = vpack.c.b16 %v4698, %v4697
      %v4743 = vpack.c.b16 %v4700, %v4699
      %v4744 = vpack.c.b16 %v4702, %v4701
      %v4745 = vpack.c.b16 %v4704, %v4703
      %v4746 = vpack.c.b16 %v4706, %v4705
      %v4747 = vpack.c.b16 %v4708, %v4707
      %v4748 = vpack.c.b16 %v4710, %v4709
      %v4749 = vpack.c.b16 %v4712, %v4711
      %v4750 = vpack.c.b16 %v4714, %v4713
      %v4751 = vpack.c.b16 %v4716, %v4715
      %v4752 = vpack.c.b16 %v4718, %v4717
      %v4753 = vpack.c.b16 %v4720, %v4719
      %v4754 = vpack.c.b16 %v4722, %v4721
      %v4755 = vpack.c.b16 %v4724, %v4723
      %v4756 = vpack.c.b16 %v4726, %v4725
      %v4757 = vpack.c.b16 %v4728, %v4727
      %v4758 = vpack.c.b16 %v4730, %v4729
      %v4759 = vpack.c.b16 %v4732, %v4731
      %v4760 = vpack.c.b16 %v4734, %v4733
      %v4761 = vpack.c.b16 %v4736, %v4735
      %v4762 = vpack.c.b16 %v4738, %v4737
      %4787 = vmatprep.subr.bf16.mxu0 0
      %4788 = vmatpush1.bf16.msra.mxu0 %v4739
      %4789 = vmatprep.subr.bf16.mxu0 0
      %4790 = vmatpush1.bf16.msra.mxu0 %v4740
      %4791 = vmatprep.subr.bf16.mxu0 0
      %4792 = vmatpush1.bf16.msra.mxu0 %v4741
      %4793 = vmatprep.subr.bf16.mxu0 0
      %4794 = vmatpush1.bf16.msra.mxu0 %v4742
      %4795 = vmatprep.subr.bf16.mxu0 0
      %4796 = vmatpush1.bf16.msra.mxu0 %v4743
      %4797 = vmatprep.subr.bf16.mxu0 0
      %4798 = vmatpush1.bf16.msra.mxu0 %v4744
      %4799 = vmatprep.subr.bf16.mxu0 0
      %4800 = vmatpush1.bf16.msra.mxu0 %v4745
      %4801 = vmatprep.subr.bf16.mxu0 0
      %4802 = vmatpush1.bf16.msra.mxu0 %v4746
      %4803 = vmatprep.subr.bf16.mxu0 0
      %4804 = vmatpush1.bf16.msra.mxu0 %v4747
      %4805 = vmatprep.subr.bf16.mxu0 0
      %4806 = vmatpush1.bf16.msra.mxu0 %v4748
      %4807 = vmatprep.subr.bf16.mxu0 0
      %4808 = vmatpush1.bf16.msra.mxu0 %v4749
      %4809 = vmatprep.subr.bf16.mxu0 0
      %4810 = vmatpush1.bf16.msra.mxu0 %v4750
      %4811 = vmatprep.subr.bf16.mxu0 0
      %4812 = vmatpush1.bf16.msra.mxu0 %v4751
      %4813 = vmatprep.subr.bf16.mxu0 0
      %4814 = vmatpush1.bf16.msra.mxu0 %v4752
      %4815 = vmatprep.subr.bf16.mxu0 0
      %4816 = vmatpush1.bf16.msra.mxu0 %v4753
      %4817 = vmatprep.subr.bf16.mxu0 0
      %4818 = vmatpush1.bf16.msra.mxu0 %v4754
      %4819 = vmatprep.mubr.bf16.mxu0 %v4586
      %4820 = vmatmul.mubr.bf16.gmra.mrb[0].mxu0 %v4585
      %v4821 = vpop.f32.mrb[0].mxu0
      %v4822 = vadd.f32 %v4641, %v4821
      %v4823 = vpop.f32.mrb[0].mxu0
      %v4824 = vpop.f32.mrb[0].mxu0
      %v4825 = vadd.f32 %v4641, %v4824
      %v4826 = vpop.f32.mrb[0].mxu0
      %4827 = vdwg.mxu0
      %4828 = vmatprep.subr.bf16.mxu0 0
      %4829 = vmatpush1.bf16.msra.mxu0 %v4755
      %4830 = vmatprep.subr.bf16.mxu0 0
      %4831 = vmatpush1.bf16.msra.mxu0 %v4756
      %4832 = vmatprep.subr.bf16.mxu0 0
      %4833 = vmatpush1.bf16.msra.mxu0 %v4757
      %4834 = vmatprep.subr.bf16.mxu0 0
      %4835 = vmatpush1.bf16.msra.mxu0 %v4758
      %4836 = vmatprep.subr.bf16.mxu0 0
      %4837 = vmatpush1.bf16.msra.mxu0 %v4759
      %4838 = vmatprep.subr.bf16.mxu0 0
      %4839 = vmatpush1.bf16.msra.mxu0 %v4760
      %4840 = vmatprep.subr.bf16.mxu0 0
      %4841 = vmatpush1.bf16.msra.mxu0 %v4761
      %4842 = vmatprep.subr.bf16.mxu0 0
      %4843 = vmatpush1.bf16.msra.mxu0 %v4762
      %4844 = vmatprep.subr.bf16.mxu0 0
      %4845 = vmatpush1.bf16.msra.mxu0 0
      %4846 = vmatprep.subr.bf16.mxu0 0
      %4847 = vmatpush1.bf16.msra.mxu0 0
      %4848 = vmatprep.subr.bf16.mxu0 0
      %4849 = vmatpush1.bf16.msra.mxu0 0
      %4850 = vmatprep.subr.bf16.mxu0 0
      %4851 = vmatpush1.bf16.msra.mxu0 0
      %4852 = vmatprep.subr.bf16.mxu0 0
      %4853 = vmatpush1.bf16.msra.mxu0 0
      %4854 = vmatprep.subr.bf16.mxu0 0
      %4855 = vmatpush1.bf16.msra.mxu0 0
      %4856 = vmatprep.subr.bf16.mxu0 0
      %4857 = vmatpush1.bf16.msra.mxu0 0
      %4858 = vmatprep.subr.bf16.mxu0 0
      %4859 = vmatpush1.bf16.msra.mxu0 0
      %4860 = vmatprep.mubr.bf16.mxu0 0
      %4861 = vmatmul.mubr.bf16.gmra.mrb[0].mxu0 %v4587
      %v4862 = vpop.f32.mrb[0].mxu0
      %v4863 = vadd.f32 %v4822, %v4862
      %v4864 = vpop.f32.mrb[0].mxu0
      %v4865 = vpop.f32.mrb[0].mxu0
      %v4866 = vadd.f32 %v4825, %v4865
      %v4867 = vpop.f32.mrb[0].mxu0
      %4868 = vdwg.mxu0
      %v4869 = vmax.f32 %v4863, 0.0
      %v4870 = vmax.f32 %v4866, 0.0
      %v4872 = vrot.slane %v4869, 1
      %v4875 = vrot.slane %v4870, 1
      %v4876 = vrot.slane %v4872, 1
      %v4878 = vrot.slane %v4869, 2
      %v4879 = vrot.slane %v4872, 2
      %v4882 = vrot.slane %v4869, 3
      %v4883 = vrot.slane %v4872, 3
      %v4886 = vrot.slane %v4870, 4
      %v4887 = vrot.slane %v4875, 4
      %v4890 = vrot.slane %v4870, 5
      %v4891 = vrot.slane %v4875, 5
      %v4894 = vrot.slane %v4870, 6
      %v4895 = vrot.slane %v4875, 6
      %v4898 = vrot.slane %v4870, 7
      %v4899 = vrot.slane %v4875, 7
      %vm4902 = vcmask 1040384
      %v4903 = vsel %vm4902, %v4869, %v4872
      %v4904 = vsel %vm4902, %v4872, %v4876
      %v4905 = vsel %vm3717, %v4903, %v4878
      %v4906 = vsel %vm3717, %v4904, %v4879
      %vm4907 = vcmask 1042432
      %v4908 = vsel %vm4907, %v4905, %v4882
      %v4909 = vsel %vm4907, %v4906, %v4883
      %v4910 = vsel %vm3712, %v4908, %v4886
      %v4911 = vsel %vm3712, %v4909, %v4887
      %vm4912 = vcmask 1044480
      %v4913 = vsel %vm4912, %v4910, %v4890
      %v4914 = vsel %vm4912, %v4911, %v4891
      %v4915 = vsel %vm3707, %v4913, %v4894
      %v4916 = vsel %vm3707, %v4914, %v4895
      %v4917 = vsel %vm4135, %v4915, %v4898
      %v4918 = vsel %vm4135, %v4916, %v4899
      %v4919 = vpack.c.bf16 %v4917, %v4917
      %v4920 = vpack.c.bf16 %v4918, %v4918
      %v4921 = vld [vmem:[%s9] sm:$0xf]
      %v4922 = vld [vmem:[%s9 + $0x4] sm:$0xf]
      %v4923 = vld [vmem:[%s9 + $0x8] sm:$0xf]
      %v4924 = vld [vmem:[%s9 + $0xc] sm:$0xf]
      %v4925 = vld [vmem:[%s9 + $0x10] sm:$0xf]
      %v4926 = vld [vmem:[%s9 + $0x14] sm:$0xf]
      %v4927 = vld [vmem:[%s9 + $0x18] sm:$0xf]
      %v4928 = vld [vmem:[%s9 + $0x1c] sm:$0xf]
      %v4929 = vld [vmem:[%s9 + $0x20] sm:$0xf]
      %v4930 = vld [vmem:[%s9 + $0x24] sm:$0xf]
      %v4931 = vld [vmem:[%s9 + $0x28] sm:$0xf]
      %v4932 = vld [vmem:[%s9 + $0x2c] sm:$0xf]
      %v4933 = vld [vmem:[%s9 + $0x30] sm:$0xf]
      %v4934 = vld [vmem:[%s9 + $0x34] sm:$0xf]
      %v4935 = vld [vmem:[%s9 + $0x38] sm:$0xf]
      %v4936 = vld [vmem:[%s9 + $0x3c] sm:$0xf]
      %v4937 = vld [vmem:[%s9 + $0x40] sm:$0xf]
      %v4938 = vld [vmem:[%s9 + $0x44] sm:$0xf]
      %v4939 = vld [vmem:[%s9 + $0x48] sm:$0xf]
      %v4940 = vld [vmem:[%s9 + $0x4c] sm:$0xf]
      %v4941 = vld [vmem:[%s9 + $0x50] sm:$0xf]
      %v4942 = vld [vmem:[%s9 + $0x54] sm:$0xf]
      %v4943 = vld [vmem:[%s9 + $0x58] sm:$0xf]
      %v4944 = vld [vmem:[%s9 + $0x5c] sm:$0xf]
      %v4945 = vld [vmem:[%s9 + $0x60] sm:$0xf]
      %v4946 = vld [vmem:[%s9 + $0x64] sm:$0xf]
      %v4947 = vld [vmem:[%s9 + $0x68] sm:$0xf]
      %v4948 = vld [vmem:[%s9 + $0x6c] sm:$0xf]
      %v4949 = vld [vmem:[%s9 + $0x70] sm:$0xf]
      %v4950 = vld [vmem:[%s9 + $0x74] sm:$0xf]
      %v4951 = vld [vmem:[%s9 + $0x78] sm:$0xf]
      %v4952 = vld [vmem:[%s9 + $0x7c] sm:$0xf]
      %v4953 = vld [vmem:[%s10] sm:$0x1]
      %v4955 = vlaneseq
      %v4956 = vshrl.u32 %v4955, 7
      %v4957 = vsub.s32 0, %v4956
      %v4958 = vrot.slane %v4953, %v4957
      %v4992 = vunpack.c.l.b16 %v4921
      %v4993 = vunpack.c.l.b16 %v4922
      %v4994 = vunpack.c.l.b16 %v4923
      %v4995 = vunpack.c.l.b16 %v4924
      %v4996 = vunpack.c.l.b16 %v4925
      %v4997 = vunpack.c.l.b16 %v4926
      %v4998 = vunpack.c.l.b16 %v4927
      %v4999 = vunpack.c.l.b16 %v4928
      %v5000 = vunpack.c.l.b16 %v4929
      %v5001 = vunpack.c.l.b16 %v4930
      %v5002 = vunpack.c.l.b16 %v4931
      %v5003 = vunpack.c.l.b16 %v4932
      %v5004 = vunpack.c.l.b16 %v4933
      %v5005 = vunpack.c.l.b16 %v4934
      %v5006 = vunpack.c.l.b16 %v4935
      %v5007 = vunpack.c.l.b16 %v4936
      %v5008 = vunpack.c.l.b16 %v4937
      %v5009 = vunpack.c.l.b16 %v4938
      %v5010 = vunpack.c.l.b16 %v4939
      %v5011 = vunpack.c.l.b16 %v4940
      %v5012 = vunpack.c.l.b16 %v4941
      %v5013 = vunpack.c.l.b16 %v4942
      %v5014 = vunpack.c.l.b16 %v4943
      %v5015 = vunpack.c.l.b16 %v4944
      %v5016 = vunpack.c.l.b16 %v4945
      %v5017 = vunpack.c.l.b16 %v4946
      %v5018 = vunpack.c.l.b16 %v4947
      %v5019 = vunpack.c.l.b16 %v4948
      %v5020 = vunpack.c.l.b16 %v4949
      %v5021 = vunpack.c.l.b16 %v4950
      %v5022 = vunpack.c.l.b16 %v4951
      %v5023 = vunpack.c.l.b16 %v4952
      %v5024 = vpack.c.b16 %v4993, %v4992
      %v5025 = vpack.c.b16 %v4995, %v4994
      %v5026 = vpack.c.b16 %v4997, %v4996
      %v5027 = vpack.c.b16 %v4999, %v4998
      %v5028 = vpack.c.b16 %v5001, %v5000
      %v5029 = vpack.c.b16 %v5003, %v5002
      %v5030 = vpack.c.b16 %v5005, %v5004
      %v5031 = vpack.c.b16 %v5007, %v5006
      %v5032 = vpack.c.b16 %v5009, %v5008
      %v5033 = vpack.c.b16 %v5011, %v5010
      %v5034 = vpack.c.b16 %v5013, %v5012
      %v5035 = vpack.c.b16 %v5015, %v5014
      %v5036 = vpack.c.b16 %v5017, %v5016
      %v5037 = vpack.c.b16 %v5019, %v5018
      %v5038 = vpack.c.b16 %v5021, %v5020
      %v5039 = vpack.c.b16 %v5023, %v5022
      %5056 = vmatprep.subr.bf16.mxu0 0
      %5057 = vmatpush1.bf16.msra.mxu0 %v5024
      %5058 = vmatprep.subr.bf16.mxu0 0
      %5059 = vmatpush1.bf16.msra.mxu0 %v5025
      %5060 = vmatprep.subr.bf16.mxu0 0
      %5061 = vmatpush1.bf16.msra.mxu0 %v5026
      %5062 = vmatprep.subr.bf16.mxu0 0
      %5063 = vmatpush1.bf16.msra.mxu0 %v5027
      %5064 = vmatprep.subr.bf16.mxu0 0
      %5065 = vmatpush1.bf16.msra.mxu0 %v5028
      %5066 = vmatprep.subr.bf16.mxu0 0
      %5067 = vmatpush1.bf16.msra.mxu0 %v5029
      %5068 = vmatprep.subr.bf16.mxu0 0
      %5069 = vmatpush1.bf16.msra.mxu0 %v5030
      %5070 = vmatprep.subr.bf16.mxu0 0
      %5071 = vmatpush1.bf16.msra.mxu0 %v5031
      %5072 = vmatprep.subr.bf16.mxu0 0
      %5073 = vmatpush1.bf16.msra.mxu0 %v5032
      %5074 = vmatprep.subr.bf16.mxu0 0
      %5075 = vmatpush1.bf16.msra.mxu0 %v5033
      %5076 = vmatprep.subr.bf16.mxu0 0
      %5077 = vmatpush1.bf16.msra.mxu0 %v5034
      %5078 = vmatprep.subr.bf16.mxu0 0
      %5079 = vmatpush1.bf16.msra.mxu0 %v5035
      %5080 = vmatprep.subr.bf16.mxu0 0
      %5081 = vmatpush1.bf16.msra.mxu0 %v5036
      %5082 = vmatprep.subr.bf16.mxu0 0
      %5083 = vmatpush1.bf16.msra.mxu0 %v5037
      %5084 = vmatprep.subr.bf16.mxu0 0
      %5085 = vmatpush1.bf16.msra.mxu0 %v5038
      %5086 = vmatprep.subr.bf16.mxu0 0
      %5087 = vmatpush1.bf16.msra.mxu0 %v5039
      %5088 = vmatprep.mubr.bf16.mxu0 %v4920
      %5089 = vmatmul.mubr.bf16.gmra.mrb[0].mxu0 %v4919
      %v5090 = vpop.f32.mrb[0].mxu0
      %v5091 = vadd.f32 %v4958, %v5090
      %v5092 = vpop.f32.mrb[0].mxu0
      %v5093 = vpop.f32.mrb[0].mxu0
      %v5094 = vpop.f32.mrb[0].mxu0
      %5095 = vdwg.mxu0
      %v5096 = vmax.f32 %v5091, 0.0
      %v5097 = vpack.c.bf16 %v5096, %v5096
      %v5098 = vld [vmem:[%s11] sm:$0xf]
      %v5099 = vld [vmem:[%s11 + $0x4] sm:$0xf]
      %v5100 = vld [vmem:[%s11 + $0x8] sm:$0xf]
      %v5101 = vld [vmem:[%s11 + $0xc] sm:$0xf]
      %v5102 = vld [vmem:[%s11 + $0x10] sm:$0xf]
      %v5103 = vld [vmem:[%s11 + $0x14] sm:$0xf]
      %v5104 = vld [vmem:[%s11 + $0x18] sm:$0xf]
      %v5105 = vld [vmem:[%s11 + $0x1c] sm:$0xf]
      %v5106 = vld [vmem:[%s11 + $0x20] sm:$0xf]
      %v5107 = vld [vmem:[%s11 + $0x24] sm:$0xf]
      %v5108 = vld [vmem:[%s11 + $0x28] sm:$0xf]
      %v5109 = vld [vmem:[%s11 + $0x2c] sm:$0xf]
      %v5110 = vld [vmem:[%s11 + $0x30] sm:$0xf]
      %v5111 = vld [vmem:[%s11 + $0x34] sm:$0xf]
      %v5112 = vld [vmem:[%s11 + $0x38] sm:$0xf]
      %v5113 = vld [vmem:[%s11 + $0x3c] sm:$0xf]
      %v5114 = vld [vmem:[%s12] sm:$0x1]
      %v5116 = vlaneseq
      %v5117 = vshrl.u32 %v5116, 7
      %v5118 = vsub.s32 0, %v5117
      %v5119 = vrot.slane %v5114, %v5118
      %v5137 = vunpack.c.l.b16 %v5098
      %v5138 = vunpack.c.l.b16 %v5099
      %v5139 = vunpack.c.l.b16 %v5100
      %v5140 = vunpack.c.l.b16 %v5101
      %v5141 = vunpack.c.l.b16 %v5102
      %v5142 = vunpack.c.l.b16 %v5103
      %v5143 = vunpack.c.l.b16 %v5104
      %v5144 = vunpack.c.l.b16 %v5105
      %v5145 = vunpack.c.l.b16 %v5106
      %v5146 = vunpack.c.l.b16 %v5107
      %v5147 = vunpack.c.l.b16 %v5108
      %v5148 = vunpack.c.l.b16 %v5109
      %v5149 = vunpack.c.l.b16 %v5110
      %v5150 = vunpack.c.l.b16 %v5111
      %v5151 = vunpack.c.l.b16 %v5112
      %v5152 = vunpack.c.l.b16 %v5113
      %v5153 = vpack.c.b16 %v5138, %v5137
      %v5154 = vpack.c.b16 %v5140, %v5139
      %v5155 = vpack.c.b16 %v5142, %v5141
      %v5156 = vpack.c.b16 %v5144, %v5143
      %v5157 = vpack.c.b16 %v5146, %v5145
      %v5158 = vpack.c.b16 %v5148, %v5147
      %v5159 = vpack.c.b16 %v5150, %v5149
      %v5160 = vpack.c.b16 %v5152, %v5151
      %5169 = vmatprep.subr.bf16.mxu0 0
      %5170 = vmatpush1.bf16.msra.mxu0 %v5153
      %5171 = vmatprep.subr.bf16.mxu0 0
      %5172 = vmatpush1.bf16.msra.mxu0 %v5154
      %5173 = vmatprep.subr.bf16.mxu0 0
      %5174 = vmatpush1.bf16.msra.mxu0 %v5155
      %5175 = vmatprep.subr.bf16.mxu0 0
      %5176 = vmatpush1.bf16.msra.mxu0 %v5156
      %5177 = vmatprep.subr.bf16.mxu0 0
      %5178 = vmatpush1.bf16.msra.mxu0 %v5157
      %5179 = vmatprep.subr.bf16.mxu0 0
      %5180 = vmatpush1.bf16.msra.mxu0 %v5158
      %5181 = vmatprep.subr.bf16.mxu0 0
      %5182 = vmatpush1.bf16.msra.mxu0 %v5159
      %5183 = vmatprep.subr.bf16.mxu0 0
      %5184 = vmatpush1.bf16.msra.mxu0 %v5160
      %5185 = vmatprep.subr.bf16.mxu0 0
      %5186 = vmatpush1.bf16.msra.mxu0 0
      %5187 = vmatprep.subr.bf16.mxu0 0
      %5188 = vmatpush1.bf16.msra.mxu0 0
      %5189 = vmatprep.subr.bf16.mxu0 0
      %5190 = vmatpush1.bf16.msra.mxu0 0
      %5191 = vmatprep.subr.bf16.mxu0 0
      %5192 = vmatpush1.bf16.msra.mxu0 0
      %5193 = vmatprep.subr.bf16.mxu0 0
      %5194 = vmatpush1.bf16.msra.mxu0 0
      %5195 = vmatprep.subr.bf16.mxu0 0
      %5196 = vmatpush1.bf16.msra.mxu0 0
      %5197 = vmatprep.subr.bf16.mxu0 0
      %5198 = vmatpush1.bf16.msra.mxu0 0
      %5199 = vmatprep.subr.bf16.mxu0 0
      %5200 = vmatpush1.bf16.msra.mxu0 0
      %5201 = vmatprep.mubr.bf16.mxu0 0
      %5202 = vmatmul.mubr.bf16.gmra.mrb[0].mxu0 %v5097
      %v5203 = vpop.f32.mrb[0].mxu0
      %v5204 = vadd.f32 %v5119, %v5203
      %v5205 = vpop.f32.mrb[0].mxu0
      %v5206 = vpop.f32.mrb[0].mxu0
      %v5207 = vpop.f32.mrb[0].mxu0
      %5208 = vdwg.mxu0
      %5209 = vst [vmem:[%s443] sm:$0xff] %v5204
      %p5210 = scmp.lt.s32.totalorder %s24, 1
      %s5211 = scalar_select %p5210, %s24, 1
      %s5212 = smul.addr %s5211, 8
      %s5213 = scalar_lea.vmem %s13, %s5212
      // Predicated region
      $region73: #{fwd.1} parent=71 // pred_check
        %p5214 = pneg %p320
      $region74: #{fwd.1} parent=71 // pred_check_branch
        %5216 = sbr.rel (%p5214) target = $region76
      $region75: #{fwd.1} parent=71 // pred_region
        _
      $region76: #{fwd.1} parent=71 // pred_fallthru
        _
    $region72: #{fwd.1} parent=5 // pred_fallthru
      _
    %p5217 = scmp.le.s32.totalorder 2, %s19
    // Predicated region
    $region77: #{fwd.1} parent=5 // pred_check
      %p5218 = pneg %p5217
    $region78: #{fwd.1} parent=5 // pred_check_branch
      %5220 = sbr.rel (%p5218) target = $region80
    $region79: #{fwd.1} parent=5 // pred_region
      %s5221 = ssub.s32 %s19, 2
      // Predicated region
      $region81: #{fwd.1} parent=79 // pred_check
        %p5222 = pneg %p326
      $region82: #{fwd.1} parent=79 // pred_check_branch
        %5224 = sbr.rel (%p5222) target = $region84
      $region83: #{fwd.1} parent=79 // pred_region
        %p5225 = scmp.lt.s32.totalorder %s25, 1
        %s5226 = scalar_select %p5225, %s25, 1
        %s5227 = smul.addr %s5226, 8
        %s5228 = scalar_lea.vmem %s13, %s5227
      $region84: #{fwd.1} parent=79 // pred_fallthru
        _
    $region80: #{fwd.1} parent=5 // pred_fallthru
      _
  $region6: #{fwd.1} parent=0 // loop_footer
    %s23 = sadd.s32 1, %s19
  $region7: #{fwd.1} parent=0 // loop_footer_branch
    %18 = sbr.rel target = $region3
  $region8: #{fwd.1} parent=0 // loop_exit
    _

</llo_original>
